<compile_context>
chip_gen: v6e
topology: v6e:2x2x1
jax: 0.10.0
libtpu: 0.0.40
codegen_flags: <defaults>
</compile_context>

<pallas_src>
import functools
import math

import numpy as np
import jax
import jax.numpy as jnp
from jax.experimental import pallas as pl


# ------------------------------- fused kernel --------------------------------

def transformer_decoder_kernel(
        act_q_ref, act_kv_ref, attn_w_ref, mlp_w1_ref, mlp_w2_ref,
        b_vec_ref, mlp_b_ref, hmask_ref, amask_ref, out_ref,
        *, num_heads, num_layers, B, Lt, Ls, eps):
    f32, bf16 = jnp.float32, jnp.bfloat16
    E = act_q_ref.shape[-1]
    nh = num_heads
    Rq = B * Lt                  # folded query rows (batch-major)
    Rm = B * Ls                  # folded memory rows
    NKs = nh * Rq                # self-attn score columns (head-major)
    NKc = nh * Rm                # cross-attn score columns

    # ---- activations (already folded to (B*L, E) rows by the wrapper) ----
    x    = act_q_ref[0]          # residual stream              (Rq, E) f32
    app  = act_q_ref[1]          # appearance (self-attn values)
    qpe  = act_q_ref[2]          # query positional embedding
    mem  = act_kv_ref[0]         # memory (cross-attn values)   (Rm, E)
    memk = act_kv_ref[1]         # memory + pos_emb (cross-attn keys)
    sk   = app + qpe             # self-attn keys (layer invariant)

    # ---- static masks (compile-time constants built in numpy) ----
    hm_s = hmask_ref[0][:NKs, :]         # (NKs, E) bf16 per-head 0/1 selector
    hm_c = hmask_ref[1][:NKc, :]         # (NKc, E)
    am_s = amask_ref[0][:, :NKs]         # (Rq, NKs) f32 additive batch mask
    am_c = amask_ref[1][:, :NKc]         # (Rq, NKc)

    inv_E = 1.0 / E

    def layer_norm(v, g, b):
        # merged reductions: sum and sum-of-squares from the same tile
        s1 = jnp.sum(v, axis=-1, keepdims=True)
        s2 = jnp.sum(v * v, axis=-1, keepdims=True)
        mu = s1 * inv_E
        var = s2 * inv_E - mu * mu
        return (v - mu) * jax.lax.rsqrt(var + eps) * g + b

    def mha(q_in, k_in, v_in, w, b, hm, am):
        # w: (4, E, E) bf16 pre-transposed [Wq^T*scale, Wk^T, Wv^T, Wo^T]
        # b: (4, E) f32 (q bias pre-scaled); hm: per-head selector; am: additive mask.
        q = jnp.dot(q_in.astype(bf16), w[0], preferred_element_type=f32) + b[0:1]
        k = jnp.dot(k_in.astype(bf16), w[1], preferred_element_type=f32) + b[1:2]
        v = jnp.dot(v_in.astype(bf16), w[2], preferred_element_type=f32) + b[2:3]
        # head-block-diagonal K/V: nh stacked copies masked per head so one
        # wide matmul serves every head at once (no per-head loop).
        k_bd = jnp.tile(k.astype(bf16), (nh, 1)) * hm            # (nh*Rk, E)
        v_bd = jnp.tile(v.astype(bf16), (nh, 1)) * hm            # (nh*Rk, E)
        s = jax.lax.dot_general(q.astype(bf16), k_bd,
                                (((1,), (1,)), ((), ())),
                                preferred_element_type=f32) + am  # (Rq, nh*Rk)
        # shared per-row shift is valid per head (softmax shift invariance)
        s = s - jnp.max(s, axis=-1, keepdims=True)
        p = jnp.exp(s).astype(bf16)
        ctx = jnp.dot(p, v_bd, preferred_element_type=f32)        # heads concat'd
        den = jnp.dot(p, hm, preferred_element_type=f32)          # per-head sums
        ctx = ctx * pl.reciprocal(den, approx=True)
        return jnp.dot(ctx.astype(bf16), w[3], preferred_element_type=f32) + b[3:4]

    outs = []
    for li in range(num_layers):
        bv = b_vec_ref[li]              # (16, E) f32: attn biases + LN params
        mb = mlp_b_ref[li]              # (2, H)  f32: [b1; b2 padded]

        # self attention (pre-norm, attn1=True; dropout == identity at p=0)
        xn = layer_norm(x, bv[8:9], bv[9:10])
        x = x + mha(xn + qpe, sk, app, attn_w_ref[2 * li + 0], bv[0:4], hm_s, am_s)

        # encoder-decoder attention
        xn = layer_norm(x, bv[10:11], bv[11:12])
        x = x + mha(xn + qpe, memk, mem, attn_w_ref[2 * li + 1], bv[4:8], hm_c, am_c)

        # MLP (ReLU; dropout == identity)
        xn = layer_norm(x, bv[12:13], bv[13:14])
        h1 = jnp.dot(xn.astype(bf16), mlp_w1_ref[li],
                     preferred_element_type=f32) + mb[0:1, :]
        h1 = jnp.maximum(h1, 0.0)
        x = x + jnp.dot(h1.astype(bf16), mlp_w2_ref[li],
                        preferred_element_type=f32) + mb[1:2, :E]

        # shared final LayerNorm of this layer's output
        y = layer_norm(x, bv[14:15], bv[15:16])                   # (Rq, E)
        outs.extend(y[bi * Lt:(bi + 1) * Lt, :] for bi in range(B))

    # one lane-dense (Lt, num_layers*B*E) = (8, 128) unmasked store
    out_ref[...] = jnp.concatenate(outs, axis=-1).astype(out_ref.dtype)


# --------------------------------- wrapper ------------------------------------

@functools.partial(jax.jit, static_argnames=("num_heads", "eps"))
def transformer_decoder_forward(tgt, appearance, memory, pos_emb, query_pos_emb,
                                packed, *, num_heads, eps):
    Lt, B, E = tgt.shape
    Ls = memory.shape[0]
    L = packed["b_vec"].shape[0]

    # batch-major fold (B*len, E) done in the wrapper (tiny fused XLA op)
    def fold(a):
        return a.transpose(1, 0, 2).reshape(-1, E)

    act_q = jnp.stack([fold(tgt), fold(appearance), fold(query_pos_emb)])
    act_kv = jnp.stack([fold(memory), fold(memory + pos_emb)])

    kernel = functools.partial(
        transformer_decoder_kernel, num_heads=num_heads, num_layers=L,
        B=B, Lt=Lt, Ls=Ls, eps=eps)

    out = pl.pallas_call(
        kernel,
        out_shape=jax.ShapeDtypeStruct((Lt, L * B * E), jnp.float32),
    )(act_q, act_kv, packed["attn_w"], packed["mlp_w1"], packed["mlp_w2"],
      packed["b_vec"], packed["mlp_b"], packed["hmask"], packed["amask"])

    # 4 KB metadata-only rearrangement back to (num_layers, Lt, B, E)
    return out.reshape(Lt, L, B, E).transpose(1, 0, 2, 3)


# ------------------------- parameters & packing --------------------------------

def init_params(key, num_layers, E, num_heads, mlp_factor):
    """Logical (torch-layout, f32) parameters used by the pure-JAX reference."""
    H = mlp_factor * E

    def nrm(k, shape, s=0.05):
        return jax.random.normal(k, shape, jnp.float32) * s

    layers = []
    for _ in range(num_layers):
        key, *ks = jax.random.split(key, 13)
        layers.append(dict(
            sa_in_w=nrm(ks[0], (3 * E, E)), sa_in_b=nrm(ks[1], (3 * E,)),
            sa_out_w=nrm(ks[2], (E, E)), sa_out_b=nrm(ks[3], (E,)),
            ca_in_w=nrm(ks[4], (3 * E, E)), ca_in_b=nrm(ks[5], (3 * E,)),
            ca_out_w=nrm(ks[6], (E, E)), ca_out_b=nrm(ks[7], (E,)),
            n1_g=jnp.ones((E,), jnp.float32), n1_b=jnp.zeros((E,), jnp.float32),
            n2_g=jnp.ones((E,), jnp.float32), n2_b=jnp.zeros((E,), jnp.float32),
            n3_g=jnp.ones((E,), jnp.float32), n3_b=jnp.zeros((E,), jnp.float32),
            w1=nrm(ks[8], (H, E)), b1=nrm(ks[9], (H,)),
            w2=nrm(ks[10], (E, H)), b2=nrm(ks[11], (E,)),
        ))
    return dict(layers=layers,
                fin_g=jnp.ones((E,), jnp.float32),
                fin_b=jnp.zeros((E,), jnp.float32))


def pack_params(params, num_heads):
    """Kernel slabs: pre-transposed, scale-folded, stacked, bf16 matmul weights."""
    E = params["layers"][0]["sa_out_w"].shape[0]
    H = params["layers"][0]["w1"].shape[0]
    L = len(params["layers"])
    hd = E // num_heads
    scale = 1.0 / math.sqrt(hd)

    attn_w = np.zeros((2 * L, 4, E, E), np.float32)   # [2*l + {self=0,cross=1}]
    b_vec = np.zeros((L, 16, E), np.float32)
    mlp_w1 = np.zeros((L, E, H), np.float32)
    mlp_w2 = np.zeros((L, H, E), np.float32)
    mlp_b = np.zeros((L, 2, H), np.float32)

    for li, lp in enumerate(params["layers"]):
        for ai, pre in enumerate(("sa", "ca")):
            in_w = np.asarray(lp[f"{pre}_in_w"]); in_b = np.asarray(lp[f"{pre}_in_b"])
            out_w = np.asarray(lp[f"{pre}_out_w"]); out_b = np.asarray(lp[f"{pre}_out_b"])
            attn_w[2 * li + ai, 0] = in_w[0:E].T * scale       # scale folded into Wq
            attn_w[2 * li + ai, 1] = in_w[E:2 * E].T
            attn_w[2 * li + ai, 2] = in_w[2 * E:].T
            attn_w[2 * li + ai, 3] = out_w.T
            b_vec[li, 4 * ai + 0] = in_b[0:E] * scale          # and into bq
            b_vec[li, 4 * ai + 1] = in_b[E:2 * E]
            b_vec[li, 4 * ai + 2] = in_b[2 * E:]
            b_vec[li, 4 * ai + 3] = out_b
        b_vec[li, 8] = np.asarray(lp["n1_g"]); b_vec[li, 9] = np.asarray(lp["n1_b"])
        b_vec[li, 10] = np.asarray(lp["n2_g"]); b_vec[li, 11] = np.asarray(lp["n2_b"])
        b_vec[li, 12] = np.asarray(lp["n3_g"]); b_vec[li, 13] = np.asarray(lp["n3_b"])
        b_vec[li, 14] = np.asarray(params["fin_g"]); b_vec[li, 15] = np.asarray(params["fin_b"])
        mlp_w1[li] = np.asarray(lp["w1"]).T
        mlp_w2[li] = np.asarray(lp["w2"]).T
        mlp_b[li, 0] = np.asarray(lp["b1"])
        mlp_b[li, 1, :E] = np.asarray(lp["b2"])

    return dict(
        attn_w=jnp.asarray(attn_w, jnp.bfloat16),
        mlp_w1=jnp.asarray(mlp_w1, jnp.bfloat16),
        mlp_w2=jnp.asarray(mlp_w2, jnp.bfloat16),
        b_vec=jnp.asarray(b_vec, jnp.float32),
        mlp_b=jnp.asarray(mlp_b, jnp.float32),
    )


def build_masks(B, Lt, Ls, E, num_heads):
    """Compile-time constants: per-head 0/1 selectors and additive batch masks."""
    hd = E // num_heads
    Rq = B * Lt
    Rks, Rkc = B * Lt, B * Ls
    NKs, NKc = num_heads * Rks, num_heads * Rkc
    NK = max(NKs, NKc)

    hm = np.zeros((2, NK, E), np.float32)
    for h in range(num_heads):
        hm[0, h * Rks:(h + 1) * Rks, h * hd:(h + 1) * hd] = 1.0
        hm[1, h * Rkc:(h + 1) * Rkc, h * hd:(h + 1) * hd] = 1.0

    am = np.zeros((2, Rq, NK), np.float32)
    q_batch = np.arange(Rq) // Lt               # batch-major fold: row = b*Lt + t

    def batch_mask(Lk, Rk):
        k_batch = np.arange(Rk) // Lk
        same = q_batch[:, None] == k_batch[None, :]
        return np.where(same, 0.0, -1e30).astype(np.float32)

    am[0, :, :NKs] = np.tile(batch_mask(Lt, Rks), (1, num_heads))
    am[1, :, :NKc] = np.tile(batch_mask(Ls, Rkc), (1, num_heads))

    return jnp.asarray(hm, jnp.bfloat16), jnp.asarray(am, jnp.float32)


# ------------------------------ pure-JAX reference -----------------------------

def reference_forward(tgt, app, mem, pos, qpe, params, num_heads, eps):
    E = tgt.shape[-1]
    hd = E // num_heads

    def ln(v, g, b):
        mu = v.mean(-1, keepdims=True)
        var = ((v - mu) ** 2).mean(-1, keepdims=True)
        return (v - mu) * jax.lax.rsqrt(var + eps) * g + b

    def mha(q_in, k_in, v_in, in_w, in_b, out_w, out_b):
        q = q_in @ in_w[0:E].T + in_b[0:E]
        k = k_in @ in_w[E:2 * E].T + in_b[E:2 * E]
        v = v_in @ in_w[2 * E:].T + in_b[2 * E:]
        Lq, Bc, _ = q.shape
        Lk = k.shape[0]
        qh = q.reshape(Lq, Bc, num_heads, hd).transpose(1, 2, 0, 3)
        kh = k.reshape(Lk, Bc, num_heads, hd).transpose(1, 2, 0, 3)
        vh = v.reshape(Lk, Bc, num_heads, hd).transpose(1, 2, 0, 3)
        s = jnp.einsum("bhqd,bhkd->bhqk", qh, kh) / math.sqrt(hd)
        pr = jax.nn.softmax(s, axis=-1)
        ctx = jnp.einsum("bhqk,bhkd->bhqd", pr, vh)
        ctx = ctx.transpose(2, 0, 1, 3).reshape(Lq, Bc, E)
        return ctx @ out_w.T + out_b

    x = tgt
    outs = []
    for lp in params["layers"]:
        xn = ln(x, lp["n1_g"], lp["n1_b"])
        x = x + mha(xn + qpe, app + qpe, app,
                    lp["sa_in_w"], lp["sa_in_b"], lp["sa_out_w"], lp["sa_out_b"])
        xn = ln(x, lp["n2_g"], lp["n2_b"])
        x = x + mha(xn + qpe, mem + pos, mem,
                    lp["ca_in_w"], lp["ca_in_b"], lp["ca_out_w"], lp["ca_out_b"])
        xn = ln(x, lp["n3_g"], lp["n3_b"])
        h = jax.nn.relu(xn @ lp["w1"].T + lp["b1"])
        x = x + h @ lp["w2"].T + lp["b2"]
        outs.append(ln(x, params["fin_g"], params["fin_b"]))
    return jnp.stack(outs)                       # (num_layers, Lt, B, E)


# ----------------------------------- main --------------------------------------

if __name__ == "__main__":
    num_layers, emb_dim, num_heads, mlp_factor = 2, 32, 4, 4
    layer_norm_eps = 1e-5
    Lt, Ls, B = 8, 16, 2   # tgt/appearance length, memory length, batch

    key = jax.random.PRNGKey(0)
    key, *ks = jax.random.split(key, 7)
    tgt = jax.random.normal(ks[0], (Lt, B, emb_dim), jnp.float32)
    appearance = jax.random.normal(ks[1], (Lt, B, emb_dim), jnp.float32)
    memory = jax.random.normal(ks[2], (Ls, B, emb_dim), jnp.float32)
    pos_emb = jax.random.normal(ks[3], (Ls, B, emb_dim), jnp.float32)
    query_pos_emb = jax.random.normal(ks[4], (Lt, B, emb_dim), jnp.float32)

    params = init_params(ks[5], num_layers, emb_dim, num_heads, mlp_factor)
    packed = pack_params(params, num_heads)
    hmask, amask = build_masks(B, Lt, Ls, emb_dim, num_heads)
    packed["hmask"] = hmask
    packed["amask"] = amask

    out = transformer_decoder_forward(
        tgt, appearance, memory, pos_emb, query_pos_emb, packed,
        num_heads=num_heads, eps=layer_norm_eps)
    out = jax.block_until_ready(out)

    assert out.shape == (num_layers, Lt, B, emb_dim), out.shape
    assert bool(jnp.all(jnp.isfinite(out)))

    ref = reference_forward(tgt, appearance, memory, pos_emb, query_pos_emb,
                            params, num_heads, layer_norm_eps)
    max_err = float(jnp.max(jnp.abs(out - ref)))
    assert max_err < 5e-2, f"max abs error vs reference: {max_err}"

    print("KERNEL_OK")
</pallas_src>

<mosaic_0001>
module attributes {stable_mosaic.version = 11 : i64} {
  func.func @transformer_decoder_kernel(%arg0: memref<3x16x32xf32, #tpu.memory_space<vmem>>, %arg1: memref<2x32x32xf32, #tpu.memory_space<vmem>>, %arg2: memref<4x4x32x32xbf16, #tpu.memory_space<vmem>>, %arg3: memref<2x32x128xbf16, #tpu.memory_space<vmem>>, %arg4: memref<2x128x32xbf16, #tpu.memory_space<vmem>>, %arg5: memref<2x16x32xf32, #tpu.memory_space<vmem>>, %arg6: memref<2x2x128xf32, #tpu.memory_space<vmem>>, %arg7: memref<2x128x32xbf16, #tpu.memory_space<vmem>>, %arg8: memref<2x16x128xf32, #tpu.memory_space<vmem>>, %arg9: memref<8x128xf32, #tpu.memory_space<vmem>>) attributes {dimension_semantics = [], scalar_prefetch = 0 : i64, scratch_operands = 0 : i64, tpu.core_type = #tpu.core_type<tc>} {
    %c0 = arith.constant 0 : index
    %c0_0 = arith.constant 0 : index
    %c0_1 = arith.constant 0 : index
    %0 = vector.load %arg0[%c0, %c0_0, %c0_1] : memref<3x16x32xf32, #tpu.memory_space<vmem>>, vector<1x16x32xf32>
    %1 = vector.shape_cast %0 : vector<1x16x32xf32> to vector<16x32xf32>
    %c1 = arith.constant 1 : index
    %c0_2 = arith.constant 0 : index
    %c0_3 = arith.constant 0 : index
    %2 = vector.load %arg0[%c1, %c0_2, %c0_3] : memref<3x16x32xf32, #tpu.memory_space<vmem>>, vector<1x16x32xf32>
    %3 = vector.shape_cast %2 : vector<1x16x32xf32> to vector<16x32xf32>
    %c2 = arith.constant 2 : index
    %c0_4 = arith.constant 0 : index
    %c0_5 = arith.constant 0 : index
    %4 = vector.load %arg0[%c2, %c0_4, %c0_5] : memref<3x16x32xf32, #tpu.memory_space<vmem>>, vector<1x16x32xf32>
    %5 = vector.shape_cast %4 : vector<1x16x32xf32> to vector<16x32xf32>
    %c0_6 = arith.constant 0 : index
    %c0_7 = arith.constant 0 : index
    %c0_8 = arith.constant 0 : index
    %6 = vector.load %arg1[%c0_6, %c0_7, %c0_8] : memref<2x32x32xf32, #tpu.memory_space<vmem>>, vector<1x32x32xf32>
    %7 = vector.shape_cast %6 : vector<1x32x32xf32> to vector<32x32xf32>
    %c1_9 = arith.constant 1 : index
    %c0_10 = arith.constant 0 : index
    %c0_11 = arith.constant 0 : index
    %8 = vector.load %arg1[%c1_9, %c0_10, %c0_11] : memref<2x32x32xf32, #tpu.memory_space<vmem>>, vector<1x32x32xf32>
    %9 = vector.shape_cast %8 : vector<1x32x32xf32> to vector<32x32xf32>
    %10 = arith.addf %3, %5 : vector<16x32xf32>
    %c0_12 = arith.constant 0 : index
    %c0_13 = arith.constant 0 : index
    %c0_14 = arith.constant 0 : index
    %11 = vector.load %arg7[%c0_12, %c0_13, %c0_14] : memref<2x128x32xbf16, #tpu.memory_space<vmem>>, vector<1x128x32xbf16>
    %12 = vector.shape_cast %11 : vector<1x128x32xbf16> to vector<128x32xbf16>
    %13 = vector.extract_strided_slice %12 {offsets = [0, 0], sizes = [64, 32], strides = [1, 1]} : vector<128x32xbf16> to vector<64x32xbf16>
    %c1_15 = arith.constant 1 : index
    %c0_16 = arith.constant 0 : index
    %c0_17 = arith.constant 0 : index
    %14 = vector.load %arg7[%c1_15, %c0_16, %c0_17] : memref<2x128x32xbf16, #tpu.memory_space<vmem>>, vector<1x128x32xbf16>
    %15 = vector.shape_cast %14 : vector<1x128x32xbf16> to vector<128x32xbf16>
    %c0_18 = arith.constant 0 : index
    %c0_19 = arith.constant 0 : index
    %c0_20 = arith.constant 0 : index
    %16 = vector.load %arg8[%c0_18, %c0_19, %c0_20] : memref<2x16x128xf32, #tpu.memory_space<vmem>>, vector<1x16x128xf32>
    %17 = vector.shape_cast %16 : vector<1x16x128xf32> to vector<16x128xf32>
    %18 = vector.extract_strided_slice %17 {offsets = [0, 0], sizes = [16, 64], strides = [1, 1]} : vector<16x128xf32> to vector<16x64xf32>
    %c1_21 = arith.constant 1 : index
    %c0_22 = arith.constant 0 : index
    %c0_23 = arith.constant 0 : index
    %19 = vector.load %arg8[%c1_21, %c0_22, %c0_23] : memref<2x16x128xf32, #tpu.memory_space<vmem>>, vector<1x16x128xf32>
    %20 = vector.shape_cast %19 : vector<1x16x128xf32> to vector<16x128xf32>
    %c0_24 = arith.constant 0 : index
    %c0_25 = arith.constant 0 : index
    %c0_26 = arith.constant 0 : index
    %21 = vector.load %arg5[%c0_24, %c0_25, %c0_26] : memref<2x16x32xf32, #tpu.memory_space<vmem>>, vector<1x16x32xf32>
    %22 = vector.shape_cast %21 : vector<1x16x32xf32> to vector<16x32xf32>
    %c0_27 = arith.constant 0 : index
    %c0_28 = arith.constant 0 : index
    %c0_29 = arith.constant 0 : index
    %23 = vector.load %arg6[%c0_27, %c0_28, %c0_29] : memref<2x2x128xf32, #tpu.memory_space<vmem>>, vector<1x2x128xf32>
    %24 = vector.shape_cast %23 : vector<1x2x128xf32> to vector<2x128xf32>
    %25 = vector.extract_strided_slice %22 {offsets = [8, 0], sizes = [1, 32], strides = [1, 1]} : vector<16x32xf32> to vector<1x32xf32>
    %26 = vector.extract_strided_slice %22 {offsets = [9, 0], sizes = [1, 32], strides = [1, 1]} : vector<16x32xf32> to vector<1x32xf32>
    %cst = arith.constant dense<0.000000e+00> : vector<16xf32>
    %27 = vector.multi_reduction <add>, %1, %cst [1] : vector<16x32xf32> to vector<16xf32>
    %28 = vector.shape_cast %27 : vector<16xf32> to vector<16x1xf32>
    %29 = arith.mulf %1, %1 : vector<16x32xf32>
    %cst_30 = arith.constant dense<0.000000e+00> : vector<16xf32>
    %30 = vector.multi_reduction <add>, %29, %cst_30 [1] : vector<16x32xf32> to vector<16xf32>
    %31 = vector.shape_cast %30 : vector<16xf32> to vector<16x1xf32>
    %cst_31 = arith.constant 3.125000e-02 : f32
    %32 = vector.broadcast %cst_31 : f32 to vector<16x1xf32>
    %33 = arith.mulf %28, %32 : vector<16x1xf32>
    %cst_32 = arith.constant 3.125000e-02 : f32
    %34 = vector.broadcast %cst_32 : f32 to vector<16x1xf32>
    %35 = arith.mulf %31, %34 : vector<16x1xf32>
    %36 = arith.mulf %33, %33 : vector<16x1xf32>
    %37 = arith.subf %35, %36 : vector<16x1xf32>
    %38 = vector.broadcast %33 : vector<16x1xf32> to vector<16x32xf32>
    %39 = arith.subf %1, %38 : vector<16x32xf32>
    %cst_33 = arith.constant 9.99999974E-6 : f32
    %40 = vector.broadcast %cst_33 : f32 to vector<16x1xf32>
    %41 = arith.addf %37, %40 : vector<16x1xf32>
    %42 = math.rsqrt %41 : vector<16x1xf32>
    %43 = vector.broadcast %42 : vector<16x1xf32> to vector<16x32xf32>
    %44 = arith.mulf %39, %43 : vector<16x32xf32>
    %45 = vector.broadcast %25 : vector<1x32xf32> to vector<16x32xf32>
    %46 = arith.mulf %44, %45 : vector<16x32xf32>
    %47 = vector.broadcast %26 : vector<1x32xf32> to vector<16x32xf32>
    %48 = arith.addf %46, %47 : vector<16x32xf32>
    %49 = arith.addf %48, %5 : vector<16x32xf32>
    %c0_34 = arith.constant 0 : index
    %c0_35 = arith.constant 0 : index
    %c0_36 = arith.constant 0 : index
    %c0_37 = arith.constant 0 : index
    %50 = vector.load %arg2[%c0_34, %c0_35, %c0_36, %c0_37] : memref<4x4x32x32xbf16, #tpu.memory_space<vmem>>, vector<1x4x32x32xbf16>
    %51 = vector.shape_cast %50 : vector<1x4x32x32xbf16> to vector<4x32x32xbf16>
    %52 = vector.extract_strided_slice %22 {offsets = [0, 0], sizes = [4, 32], strides = [1, 1]} : vector<16x32xf32> to vector<4x32xf32>
    %53 = arith.truncf %49 : vector<16x32xf32> to vector<16x32xbf16>
    %54 = vector.extract_strided_slice %51 {offsets = [0, 0, 0], sizes = [1, 32, 32], strides = [1, 1, 1]} : vector<4x32x32xbf16> to vector<1x32x32xbf16>
    %55 = vector.shape_cast %54 : vector<1x32x32xbf16> to vector<32x32xbf16>
    %cst_38 = arith.constant dense<0.000000e+00> : vector<16x32xf32>
    %56 = tpu.matmul %53, %55, %cst_38 {dimension_numbers = #tpu.dot_dimension_numbers<[1], [0], [0], [1], [0, 0, 1, 1], [], []>} : vector<16x32xbf16>, vector<32x32xbf16>, vector<16x32xf32> -> vector<16x32xf32>
    %57 = vector.extract_strided_slice %52 {offsets = [0, 0], sizes = [1, 32], strides = [1, 1]} : vector<4x32xf32> to vector<1x32xf32>
    %58 = vector.broadcast %57 : vector<1x32xf32> to vector<16x32xf32>
    %59 = arith.addf %56, %58 : vector<16x32xf32>
    %60 = arith.truncf %10 : vector<16x32xf32> to vector<16x32xbf16>
    %61 = vector.extract_strided_slice %51 {offsets = [1, 0, 0], sizes = [1, 32, 32], strides = [1, 1, 1]} : vector<4x32x32xbf16> to vector<1x32x32xbf16>
    %62 = vector.shape_cast %61 : vector<1x32x32xbf16> to vector<32x32xbf16>
    %cst_39 = arith.constant dense<0.000000e+00> : vector<16x32xf32>
    %63 = tpu.matmul %60, %62, %cst_39 {dimension_numbers = #tpu.dot_dimension_numbers<[1], [0], [0], [1], [0, 0, 1, 1], [], []>} : vector<16x32xbf16>, vector<32x32xbf16>, vector<16x32xf32> -> vector<16x32xf32>
    %64 = vector.extract_strided_slice %52 {offsets = [1, 0], sizes = [1, 32], strides = [1, 1]} : vector<4x32xf32> to vector<1x32xf32>
    %65 = vector.broadcast %64 : vector<1x32xf32> to vector<16x32xf32>
    %66 = arith.addf %63, %65 : vector<16x32xf32>
    %67 = arith.truncf %3 : vector<16x32xf32> to vector<16x32xbf16>
    %68 = vector.extract_strided_slice %51 {offsets = [2, 0, 0], sizes = [1, 32, 32], strides = [1, 1, 1]} : vector<4x32x32xbf16> to vector<1x32x32xbf16>
    %69 = vector.shape_cast %68 : vector<1x32x32xbf16> to vector<32x32xbf16>
    %cst_40 = arith.constant dense<0.000000e+00> : vector<16x32xf32>
    %70 = tpu.matmul %67, %69, %cst_40 {dimension_numbers = #tpu.dot_dimension_numbers<[1], [0], [0], [1], [0, 0, 1, 1], [], []>} : vector<16x32xbf16>, vector<32x32xbf16>, vector<16x32xf32> -> vector<16x32xf32>
    %71 = vector.extract_strided_slice %52 {offsets = [2, 0], sizes = [1, 32], strides = [1, 1]} : vector<4x32xf32> to vector<1x32xf32>
    %72 = vector.broadcast %71 : vector<1x32xf32> to vector<16x32xf32>
    %73 = arith.addf %70, %72 : vector<16x32xf32>
    %74 = arith.truncf %66 : vector<16x32xf32> to vector<16x32xbf16>
    %75 = tpu.concatenate %74, %74, %74, %74 in 0 : vector<16x32xbf16>, vector<16x32xbf16>, vector<16x32xbf16>, vector<16x32xbf16> -> vector<64x32xbf16>
    %76 = arith.mulf %75, %13 : vector<64x32xbf16>
    %77 = arith.truncf %73 : vector<16x32xf32> to vector<16x32xbf16>
    %78 = tpu.concatenate %77, %77, %77, %77 in 0 : vector<16x32xbf16>, vector<16x32xbf16>, vector<16x32xbf16>, vector<16x32xbf16> -> vector<64x32xbf16>
    %79 = arith.mulf %78, %13 : vector<64x32xbf16>
    %80 = arith.truncf %59 : vector<16x32xf32> to vector<16x32xbf16>
    %cst_41 = arith.constant dense<0.000000e+00> : vector<16x64xf32>
    %81 = tpu.matmul %80, %76, %cst_41 {dimension_numbers = #tpu.dot_dimension_numbers<[1], [1], [0], [0], [0, 0, 1, 0], [], []>} : vector<16x32xbf16>, vector<64x32xbf16>, vector<16x64xf32> -> vector<16x64xf32>
    %82 = arith.addf %81, %18 : vector<16x64xf32>
    %cst_42 = arith.constant dense<0xFF800000> : vector<16xf32>
    %83 = vector.multi_reduction <maximumf>, %82, %cst_42 [1] : vector<16x64xf32> to vector<16xf32>
    %84 = vector.shape_cast %83 : vector<16xf32> to vector<16x1xf32>
    %85 = vector.broadcast %84 : vector<16x1xf32> to vector<16x64xf32>
    %86 = arith.subf %82, %85 : vector<16x64xf32>
    %87 = math.exp %86 : vector<16x64xf32>
    %88 = arith.truncf %87 : vector<16x64xf32> to vector<16x64xbf16>
    %cst_43 = arith.constant dense<0.000000e+00> : vector<16x32xf32>
    %89 = tpu.matmul %88, %79, %cst_43 {dimension_numbers = #tpu.dot_dimension_numbers<[1], [0], [0], [1], [0, 0, 1, 1], [], []>} : vector<16x64xbf16>, vector<64x32xbf16>, vector<16x32xf32> -> vector<16x32xf32>
    %cst_44 = arith.constant dense<0.000000e+00> : vector<16x32xf32>
    %90 = tpu.matmul %88, %13, %cst_44 {dimension_numbers = #tpu.dot_dimension_numbers<[1], [0], [0], [1], [0, 0, 1, 1], [], []>} : vector<16x64xbf16>, vector<64x32xbf16>, vector<16x32xf32> -> vector<16x32xf32>
    %91 = tpu.reciprocal %90 {approx = true} : vector<16x32xf32> -> vector<16x32xf32>
    %92 = arith.mulf %89, %91 : vector<16x32xf32>
    %93 = arith.truncf %92 : vector<16x32xf32> to vector<16x32xbf16>
    %94 = vector.extract_strided_slice %51 {offsets = [3, 0, 0], sizes = [1, 32, 32], strides = [1, 1, 1]} : vector<4x32x32xbf16> to vector<1x32x32xbf16>
    %95 = vector.shape_cast %94 : vector<1x32x32xbf16> to vector<32x32xbf16>
    %cst_45 = arith.constant dense<0.000000e+00> : vector<16x32xf32>
    %96 = tpu.matmul %93, %95, %cst_45 {dimension_numbers = #tpu.dot_dimension_numbers<[1], [0], [0], [1], [0, 0, 1, 1], [], []>} : vector<16x32xbf16>, vector<32x32xbf16>, vector<16x32xf32> -> vector<16x32xf32>
    %97 = vector.extract_strided_slice %52 {offsets = [3, 0], sizes = [1, 32], strides = [1, 1]} : vector<4x32xf32> to vector<1x32xf32>
    %98 = vector.broadcast %97 : vector<1x32xf32> to vector<16x32xf32>
    %99 = arith.addf %96, %98 : vector<16x32xf32>
    %100 = arith.addf %1, %99 : vector<16x32xf32>
    %101 = vector.extract_strided_slice %22 {offsets = [10, 0], sizes = [1, 32], strides = [1, 1]} : vector<16x32xf32> to vector<1x32xf32>
    %102 = vector.extract_strided_slice %22 {offsets = [11, 0], sizes = [1, 32], strides = [1, 1]} : vector<16x32xf32> to vector<1x32xf32>
    %cst_46 = arith.constant dense<0.000000e+00> : vector<16xf32>
    %103 = vector.multi_reduction <add>, %100, %cst_46 [1] : vector<16x32xf32> to vector<16xf32>
    %104 = vector.shape_cast %103 : vector<16xf32> to vector<16x1xf32>
    %105 = arith.mulf %100, %100 : vector<16x32xf32>
    %cst_47 = arith.constant dense<0.000000e+00> : vector<16xf32>
    %106 = vector.multi_reduction <add>, %105, %cst_47 [1] : vector<16x32xf32> to vector<16xf32>
    %107 = vector.shape_cast %106 : vector<16xf32> to vector<16x1xf32>
    %cst_48 = arith.constant 3.125000e-02 : f32
    %108 = vector.broadcast %cst_48 : f32 to vector<16x1xf32>
    %109 = arith.mulf %104, %108 : vector<16x1xf32>
    %cst_49 = arith.constant 3.125000e-02 : f32
    %110 = vector.broadcast %cst_49 : f32 to vector<16x1xf32>
    %111 = arith.mulf %107, %110 : vector<16x1xf32>
    %112 = arith.mulf %109, %109 : vector<16x1xf32>
    %113 = arith.subf %111, %112 : vector<16x1xf32>
    %114 = vector.broadcast %109 : vector<16x1xf32> to vector<16x32xf32>
    %115 = arith.subf %100, %114 : vector<16x32xf32>
    %cst_50 = arith.constant 9.99999974E-6 : f32
    %116 = vector.broadcast %cst_50 : f32 to vector<16x1xf32>
    %117 = arith.addf %113, %116 : vector<16x1xf32>
    %118 = math.rsqrt %117 : vector<16x1xf32>
    %119 = vector.broadcast %118 : vector<16x1xf32> to vector<16x32xf32>
    %120 = arith.mulf %115, %119 : vector<16x32xf32>
    %121 = vector.broadcast %101 : vector<1x32xf32> to vector<16x32xf32>
    %122 = arith.mulf %120, %121 : vector<16x32xf32>
    %123 = vector.broadcast %102 : vector<1x32xf32> to vector<16x32xf32>
    %124 = arith.addf %122, %123 : vector<16x32xf32>
    %125 = arith.addf %124, %5 : vector<16x32xf32>
    %c1_51 = arith.constant 1 : index
    %c0_52 = arith.constant 0 : index
    %c0_53 = arith.constant 0 : index
    %c0_54 = arith.constant 0 : index
    %126 = vector.load %arg2[%c1_51, %c0_52, %c0_53, %c0_54] : memref<4x4x32x32xbf16, #tpu.memory_space<vmem>>, vector<1x4x32x32xbf16>
    %127 = vector.shape_cast %126 : vector<1x4x32x32xbf16> to vector<4x32x32xbf16>
    %128 = vector.extract_strided_slice %22 {offsets = [4, 0], sizes = [4, 32], strides = [1, 1]} : vector<16x32xf32> to vector<4x32xf32>
    %129 = arith.truncf %125 : vector<16x32xf32> to vector<16x32xbf16>
    %130 = vector.extract_strided_slice %127 {offsets = [0, 0, 0], sizes = [1, 32, 32], strides = [1, 1, 1]} : vector<4x32x32xbf16> to vector<1x32x32xbf16>
    %131 = vector.shape_cast %130 : vector<1x32x32xbf16> to vector<32x32xbf16>
    %cst_55 = arith.constant dense<0.000000e+00> : vector<16x32xf32>
    %132 = tpu.matmul %129, %131, %cst_55 {dimension_numbers = #tpu.dot_dimension_numbers<[1], [0], [0], [1], [0, 0, 1, 1], [], []>} : vector<16x32xbf16>, vector<32x32xbf16>, vector<16x32xf32> -> vector<16x32xf32>
    %133 = vector.extract_strided_slice %128 {offsets = [0, 0], sizes = [1, 32], strides = [1, 1]} : vector<4x32xf32> to vector<1x32xf32>
    %134 = vector.broadcast %133 : vector<1x32xf32> to vector<16x32xf32>
    %135 = arith.addf %132, %134 : vector<16x32xf32>
    %136 = arith.truncf %9 : vector<32x32xf32> to vector<32x32xbf16>
    %137 = vector.extract_strided_slice %127 {offsets = [1, 0, 0], sizes = [1, 32, 32], strides = [1, 1, 1]} : vector<4x32x32xbf16> to vector<1x32x32xbf16>
    %138 = vector.shape_cast %137 : vector<1x32x32xbf16> to vector<32x32xbf16>
    %cst_56 = arith.constant dense<0.000000e+00> : vector<32x32xf32>
    %139 = tpu.matmul %136, %138, %cst_56 {dimension_numbers = #tpu.dot_dimension_numbers<[1], [0], [0], [1], [0, 0, 1, 1], [], []>} : vector<32x32xbf16>, vector<32x32xbf16>, vector<32x32xf32> -> vector<32x32xf32>
    %140 = vector.extract_strided_slice %128 {offsets = [1, 0], sizes = [1, 32], strides = [1, 1]} : vector<4x32xf32> to vector<1x32xf32>
    %141 = vector.broadcast %140 : vector<1x32xf32> to vector<32x32xf32>
    %142 = arith.addf %139, %141 : vector<32x32xf32>
    %143 = arith.truncf %7 : vector<32x32xf32> to vector<32x32xbf16>
    %144 = vector.extract_strided_slice %127 {offsets = [2, 0, 0], sizes = [1, 32, 32], strides = [1, 1, 1]} : vector<4x32x32xbf16> to vector<1x32x32xbf16>
    %145 = vector.shape_cast %144 : vector<1x32x32xbf16> to vector<32x32xbf16>
    %cst_57 = arith.constant dense<0.000000e+00> : vector<32x32xf32>
    %146 = tpu.matmul %143, %145, %cst_57 {dimension_numbers = #tpu.dot_dimension_numbers<[1], [0], [0], [1], [0, 0, 1, 1], [], []>} : vector<32x32xbf16>, vector<32x32xbf16>, vector<32x32xf32> -> vector<32x32xf32>
    %147 = vector.extract_strided_slice %128 {offsets = [2, 0], sizes = [1, 32], strides = [1, 1]} : vector<4x32xf32> to vector<1x32xf32>
    %148 = vector.broadcast %147 : vector<1x32xf32> to vector<32x32xf32>
    %149 = arith.addf %146, %148 : vector<32x32xf32>
    %150 = arith.truncf %142 : vector<32x32xf32> to vector<32x32xbf16>
    %151 = tpu.concatenate %150, %150, %150, %150 in 0 : vector<32x32xbf16>, vector<32x32xbf16>, vector<32x32xbf16>, vector<32x32xbf16> -> vector<128x32xbf16>
    %152 = arith.mulf %151, %15 : vector<128x32xbf16>
    %153 = arith.truncf %149 : vector<32x32xf32> to vector<32x32xbf16>
    %154 = tpu.concatenate %153, %153, %153, %153 in 0 : vector<32x32xbf16>, vector<32x32xbf16>, vector<32x32xbf16>, vector<32x32xbf16> -> vector<128x32xbf16>
    %155 = arith.mulf %154, %15 : vector<128x32xbf16>
    %156 = arith.truncf %135 : vector<16x32xf32> to vector<16x32xbf16>
    %cst_58 = arith.constant dense<0.000000e+00> : vector<16x128xf32>
    %157 = tpu.matmul %156, %152, %cst_58 {dimension_numbers = #tpu.dot_dimension_numbers<[1], [1], [0], [0], [0, 0, 1, 0], [], []>} : vector<16x32xbf16>, vector<128x32xbf16>, vector<16x128xf32> -> vector<16x128xf32>
    %158 = arith.addf %157, %20 : vector<16x128xf32>
    %cst_59 = arith.constant dense<0xFF800000> : vector<16xf32>
    %159 = vector.multi_reduction <maximumf>, %158, %cst_59 [1] : vector<16x128xf32> to vector<16xf32>
    %160 = vector.shape_cast %159 : vector<16xf32> to vector<16x1xf32>
    %161 = vector.broadcast %160 : vector<16x1xf32> to vector<16x128xf32>
    %162 = arith.subf %158, %161 : vector<16x128xf32>
    %163 = math.exp %162 : vector<16x128xf32>
    %164 = arith.truncf %163 : vector<16x128xf32> to vector<16x128xbf16>
    %cst_60 = arith.constant dense<0.000000e+00> : vector<16x32xf32>
    %165 = tpu.matmul %164, %155, %cst_60 {dimension_numbers = #tpu.dot_dimension_numbers<[1], [0], [0], [1], [0, 0, 1, 1], [], []>} : vector<16x128xbf16>, vector<128x32xbf16>, vector<16x32xf32> -> vector<16x32xf32>
    %cst_61 = arith.constant dense<0.000000e+00> : vector<16x32xf32>
    %166 = tpu.matmul %164, %15, %cst_61 {dimension_numbers = #tpu.dot_dimension_numbers<[1], [0], [0], [1], [0, 0, 1, 1], [], []>} : vector<16x128xbf16>, vector<128x32xbf16>, vector<16x32xf32> -> vector<16x32xf32>
    %167 = tpu.reciprocal %166 {approx = true} : vector<16x32xf32> -> vector<16x32xf32>
    %168 = arith.mulf %165, %167 : vector<16x32xf32>
    %169 = arith.truncf %168 : vector<16x32xf32> to vector<16x32xbf16>
    %170 = vector.extract_strided_slice %127 {offsets = [3, 0, 0], sizes = [1, 32, 32], strides = [1, 1, 1]} : vector<4x32x32xbf16> to vector<1x32x32xbf16>
    %171 = vector.shape_cast %170 : vector<1x32x32xbf16> to vector<32x32xbf16>
    %cst_62 = arith.constant dense<0.000000e+00> : vector<16x32xf32>
    %172 = tpu.matmul %169, %171, %cst_62 {dimension_numbers = #tpu.dot_dimension_numbers<[1], [0], [0], [1], [0, 0, 1, 1], [], []>} : vector<16x32xbf16>, vector<32x32xbf16>, vector<16x32xf32> -> vector<16x32xf32>
    %173 = vector.extract_strided_slice %128 {offsets = [3, 0], sizes = [1, 32], strides = [1, 1]} : vector<4x32xf32> to vector<1x32xf32>
    %174 = vector.broadcast %173 : vector<1x32xf32> to vector<16x32xf32>
    %175 = arith.addf %172, %174 : vector<16x32xf32>
    %176 = arith.addf %100, %175 : vector<16x32xf32>
    %177 = vector.extract_strided_slice %22 {offsets = [12, 0], sizes = [1, 32], strides = [1, 1]} : vector<16x32xf32> to vector<1x32xf32>
    %178 = vector.extract_strided_slice %22 {offsets = [13, 0], sizes = [1, 32], strides = [1, 1]} : vector<16x32xf32> to vector<1x32xf32>
    %cst_63 = arith.constant dense<0.000000e+00> : vector<16xf32>
    %179 = vector.multi_reduction <add>, %176, %cst_63 [1] : vector<16x32xf32> to vector<16xf32>
    %180 = vector.shape_cast %179 : vector<16xf32> to vector<16x1xf32>
    %181 = arith.mulf %176, %176 : vector<16x32xf32>
    %cst_64 = arith.constant dense<0.000000e+00> : vector<16xf32>
    %182 = vector.multi_reduction <add>, %181, %cst_64 [1] : vector<16x32xf32> to vector<16xf32>
    %183 = vector.shape_cast %182 : vector<16xf32> to vector<16x1xf32>
    %cst_65 = arith.constant 3.125000e-02 : f32
    %184 = vector.broadcast %cst_65 : f32 to vector<16x1xf32>
    %185 = arith.mulf %180, %184 : vector<16x1xf32>
    %cst_66 = arith.constant 3.125000e-02 : f32
    %186 = vector.broadcast %cst_66 : f32 to vector<16x1xf32>
    %187 = arith.mulf %183, %186 : vector<16x1xf32>
    %188 = arith.mulf %185, %185 : vector<16x1xf32>
    %189 = arith.subf %187, %188 : vector<16x1xf32>
    %190 = vector.broadcast %185 : vector<16x1xf32> to vector<16x32xf32>
    %191 = arith.subf %176, %190 : vector<16x32xf32>
    %cst_67 = arith.constant 9.99999974E-6 : f32
    %192 = vector.broadcast %cst_67 : f32 to vector<16x1xf32>
    %193 = arith.addf %189, %192 : vector<16x1xf32>
    %194 = math.rsqrt %193 : vector<16x1xf32>
    %195 = vector.broadcast %194 : vector<16x1xf32> to vector<16x32xf32>
    %196 = arith.mulf %191, %195 : vector<16x32xf32>
    %197 = vector.broadcast %177 : vector<1x32xf32> to vector<16x32xf32>
    %198 = arith.mulf %196, %197 : vector<16x32xf32>
    %199 = vector.broadcast %178 : vector<1x32xf32> to vector<16x32xf32>
    %200 = arith.addf %198, %199 : vector<16x32xf32>
    %201 = arith.truncf %200 : vector<16x32xf32> to vector<16x32xbf16>
    %c0_68 = arith.constant 0 : index
    %c0_69 = arith.constant 0 : index
    %c0_70 = arith.constant 0 : index
    %202 = vector.load %arg3[%c0_68, %c0_69, %c0_70] : memref<2x32x128xbf16, #tpu.memory_space<vmem>>, vector<1x32x128xbf16>
    %203 = vector.shape_cast %202 : vector<1x32x128xbf16> to vector<32x128xbf16>
    %cst_71 = arith.constant dense<0.000000e+00> : vector<16x128xf32>
    %204 = tpu.matmul %201, %203, %cst_71 {dimension_numbers = #tpu.dot_dimension_numbers<[1], [0], [0], [1], [0, 0, 1, 1], [], []>} : vector<16x32xbf16>, vector<32x128xbf16>, vector<16x128xf32> -> vector<16x128xf32>
    %205 = vector.extract_strided_slice %24 {offsets = [0, 0], sizes = [1, 128], strides = [1, 1]} : vector<2x128xf32> to vector<1x128xf32>
    %206 = vector.broadcast %205 : vector<1x128xf32> to vector<16x128xf32>
    %207 = arith.addf %204, %206 : vector<16x128xf32>
    %cst_72 = arith.constant 0.000000e+00 : f32
    %208 = vector.broadcast %cst_72 : f32 to vector<16x128xf32>
    %209 = arith.maximumf %207, %208 : vector<16x128xf32>
    %210 = arith.truncf %209 : vector<16x128xf32> to vector<16x128xbf16>
    %c0_73 = arith.constant 0 : index
    %c0_74 = arith.constant 0 : index
    %c0_75 = arith.constant 0 : index
    %211 = vector.load %arg4[%c0_73, %c0_74, %c0_75] : memref<2x128x32xbf16, #tpu.memory_space<vmem>>, vector<1x128x32xbf16>
    %212 = vector.shape_cast %211 : vector<1x128x32xbf16> to vector<128x32xbf16>
    %cst_76 = arith.constant dense<0.000000e+00> : vector<16x32xf32>
    %213 = tpu.matmul %210, %212, %cst_76 {dimension_numbers = #tpu.dot_dimension_numbers<[1], [0], [0], [1], [0, 0, 1, 1], [], []>} : vector<16x128xbf16>, vector<128x32xbf16>, vector<16x32xf32> -> vector<16x32xf32>
    %214 = arith.addf %176, %213 : vector<16x32xf32>
    %215 = vector.extract_strided_slice %24 {offsets = [1, 0], sizes = [1, 32], strides = [1, 1]} : vector<2x128xf32> to vector<1x32xf32>
    %216 = vector.broadcast %215 : vector<1x32xf32> to vector<16x32xf32>
    %217 = arith.addf %214, %216 : vector<16x32xf32>
    %218 = vector.extract_strided_slice %22 {offsets = [14, 0], sizes = [1, 32], strides = [1, 1]} : vector<16x32xf32> to vector<1x32xf32>
    %219 = vector.extract_strided_slice %22 {offsets = [15, 0], sizes = [1, 32], strides = [1, 1]} : vector<16x32xf32> to vector<1x32xf32>
    %cst_77 = arith.constant dense<0.000000e+00> : vector<16xf32>
    %220 = vector.multi_reduction <add>, %217, %cst_77 [1] : vector<16x32xf32> to vector<16xf32>
    %221 = vector.shape_cast %220 : vector<16xf32> to vector<16x1xf32>
    %222 = arith.mulf %217, %217 : vector<16x32xf32>
    %cst_78 = arith.constant dense<0.000000e+00> : vector<16xf32>
    %223 = vector.multi_reduction <add>, %222, %cst_78 [1] : vector<16x32xf32> to vector<16xf32>
    %224 = vector.shape_cast %223 : vector<16xf32> to vector<16x1xf32>
    %cst_79 = arith.constant 3.125000e-02 : f32
    %225 = vector.broadcast %cst_79 : f32 to vector<16x1xf32>
    %226 = arith.mulf %221, %225 : vector<16x1xf32>
    %cst_80 = arith.constant 3.125000e-02 : f32
    %227 = vector.broadcast %cst_80 : f32 to vector<16x1xf32>
    %228 = arith.mulf %224, %227 : vector<16x1xf32>
    %229 = arith.mulf %226, %226 : vector<16x1xf32>
    %230 = arith.subf %228, %229 : vector<16x1xf32>
    %231 = vector.broadcast %226 : vector<16x1xf32> to vector<16x32xf32>
    %232 = arith.subf %217, %231 : vector<16x32xf32>
    %cst_81 = arith.constant 9.99999974E-6 : f32
    %233 = vector.broadcast %cst_81 : f32 to vector<16x1xf32>
    %234 = arith.addf %230, %233 : vector<16x1xf32>
    %235 = math.rsqrt %234 : vector<16x1xf32>
    %236 = vector.broadcast %235 : vector<16x1xf32> to vector<16x32xf32>
    %237 = arith.mulf %232, %236 : vector<16x32xf32>
    %238 = vector.broadcast %218 : vector<1x32xf32> to vector<16x32xf32>
    %239 = arith.mulf %237, %238 : vector<16x32xf32>
    %240 = vector.broadcast %219 : vector<1x32xf32> to vector<16x32xf32>
    %241 = arith.addf %239, %240 : vector<16x32xf32>
    %242 = vector.extract_strided_slice %241 {offsets = [0, 0], sizes = [8, 32], strides = [1, 1]} : vector<16x32xf32> to vector<8x32xf32>
    %243 = vector.extract_strided_slice %241 {offsets = [8, 0], sizes = [8, 32], strides = [1, 1]} : vector<16x32xf32> to vector<8x32xf32>
    %c1_82 = arith.constant 1 : index
    %c0_83 = arith.constant 0 : index
    %c0_84 = arith.constant 0 : index
    %244 = vector.load %arg5[%c1_82, %c0_83, %c0_84] : memref<2x16x32xf32, #tpu.memory_space<vmem>>, vector<1x16x32xf32>
    %245 = vector.shape_cast %244 : vector<1x16x32xf32> to vector<16x32xf32>
    %c1_85 = arith.constant 1 : index
    %c0_86 = arith.constant 0 : index
    %c0_87 = arith.constant 0 : index
    %246 = vector.load %arg6[%c1_85, %c0_86, %c0_87] : memref<2x2x128xf32, #tpu.memory_space<vmem>>, vector<1x2x128xf32>
    %247 = vector.shape_cast %246 : vector<1x2x128xf32> to vector<2x128xf32>
    %248 = vector.extract_strided_slice %245 {offsets = [8, 0], sizes = [1, 32], strides = [1, 1]} : vector<16x32xf32> to vector<1x32xf32>
    %249 = vector.extract_strided_slice %245 {offsets = [9, 0], sizes = [1, 32], strides = [1, 1]} : vector<16x32xf32> to vector<1x32xf32>
    %cst_88 = arith.constant dense<0.000000e+00> : vector<16xf32>
    %250 = vector.multi_reduction <add>, %217, %cst_88 [1] : vector<16x32xf32> to vector<16xf32>
    %251 = vector.shape_cast %250 : vector<16xf32> to vector<16x1xf32>
    %252 = arith.mulf %217, %217 : vector<16x32xf32>
    %cst_89 = arith.constant dense<0.000000e+00> : vector<16xf32>
    %253 = vector.multi_reduction <add>, %252, %cst_89 [1] : vector<16x32xf32> to vector<16xf32>
    %254 = vector.shape_cast %253 : vector<16xf32> to vector<16x1xf32>
    %cst_90 = arith.constant 3.125000e-02 : f32
    %255 = vector.broadcast %cst_90 : f32 to vector<16x1xf32>
    %256 = arith.mulf %251, %255 : vector<16x1xf32>
    %cst_91 = arith.constant 3.125000e-02 : f32
    %257 = vector.broadcast %cst_91 : f32 to vector<16x1xf32>
    %258 = arith.mulf %254, %257 : vector<16x1xf32>
    %259 = arith.mulf %256, %256 : vector<16x1xf32>
    %260 = arith.subf %258, %259 : vector<16x1xf32>
    %261 = vector.broadcast %256 : vector<16x1xf32> to vector<16x32xf32>
    %262 = arith.subf %217, %261 : vector<16x32xf32>
    %cst_92 = arith.constant 9.99999974E-6 : f32
    %263 = vector.broadcast %cst_92 : f32 to vector<16x1xf32>
    %264 = arith.addf %260, %263 : vector<16x1xf32>
    %265 = math.rsqrt %264 : vector<16x1xf32>
    %266 = vector.broadcast %265 : vector<16x1xf32> to vector<16x32xf32>
    %267 = arith.mulf %262, %266 : vector<16x32xf32>
    %268 = vector.broadcast %248 : vector<1x32xf32> to vector<16x32xf32>
    %269 = arith.mulf %267, %268 : vector<16x32xf32>
    %270 = vector.broadcast %249 : vector<1x32xf32> to vector<16x32xf32>
    %271 = arith.addf %269, %270 : vector<16x32xf32>
    %272 = arith.addf %271, %5 : vector<16x32xf32>
    %c2_93 = arith.constant 2 : index
    %c0_94 = arith.constant 0 : index
    %c0_95 = arith.constant 0 : index
    %c0_96 = arith.constant 0 : index
    %273 = vector.load %arg2[%c2_93, %c0_94, %c0_95, %c0_96] : memref<4x4x32x32xbf16, #tpu.memory_space<vmem>>, vector<1x4x32x32xbf16>
    %274 = vector.shape_cast %273 : vector<1x4x32x32xbf16> to vector<4x32x32xbf16>
    %275 = vector.extract_strided_slice %245 {offsets = [0, 0], sizes = [4, 32], strides = [1, 1]} : vector<16x32xf32> to vector<4x32xf32>
    %276 = arith.truncf %272 : vector<16x32xf32> to vector<16x32xbf16>
    %277 = vector.extract_strided_slice %274 {offsets = [0, 0, 0], sizes = [1, 32, 32], strides = [1, 1, 1]} : vector<4x32x32xbf16> to vector<1x32x32xbf16>
    %278 = vector.shape_cast %277 : vector<1x32x32xbf16> to vector<32x32xbf16>
    %cst_97 = arith.constant dense<0.000000e+00> : vector<16x32xf32>
    %279 = tpu.matmul %276, %278, %cst_97 {dimension_numbers = #tpu.dot_dimension_numbers<[1], [0], [0], [1], [0, 0, 1, 1], [], []>} : vector<16x32xbf16>, vector<32x32xbf16>, vector<16x32xf32> -> vector<16x32xf32>
    %280 = vector.extract_strided_slice %275 {offsets = [0, 0], sizes = [1, 32], strides = [1, 1]} : vector<4x32xf32> to vector<1x32xf32>
    %281 = vector.broadcast %280 : vector<1x32xf32> to vector<16x32xf32>
    %282 = arith.addf %279, %281 : vector<16x32xf32>
    %283 = arith.truncf %10 : vector<16x32xf32> to vector<16x32xbf16>
    %284 = vector.extract_strided_slice %274 {offsets = [1, 0, 0], sizes = [1, 32, 32], strides = [1, 1, 1]} : vector<4x32x32xbf16> to vector<1x32x32xbf16>
    %285 = vector.shape_cast %284 : vector<1x32x32xbf16> to vector<32x32xbf16>
    %cst_98 = arith.constant dense<0.000000e+00> : vector<16x32xf32>
    %286 = tpu.matmul %283, %285, %cst_98 {dimension_numbers = #tpu.dot_dimension_numbers<[1], [0], [0], [1], [0, 0, 1, 1], [], []>} : vector<16x32xbf16>, vector<32x32xbf16>, vector<16x32xf32> -> vector<16x32xf32>
    %287 = vector.extract_strided_slice %275 {offsets = [1, 0], sizes = [1, 32], strides = [1, 1]} : vector<4x32xf32> to vector<1x32xf32>
    %288 = vector.broadcast %287 : vector<1x32xf32> to vector<16x32xf32>
    %289 = arith.addf %286, %288 : vector<16x32xf32>
    %290 = arith.truncf %3 : vector<16x32xf32> to vector<16x32xbf16>
    %291 = vector.extract_strided_slice %274 {offsets = [2, 0, 0], sizes = [1, 32, 32], strides = [1, 1, 1]} : vector<4x32x32xbf16> to vector<1x32x32xbf16>
    %292 = vector.shape_cast %291 : vector<1x32x32xbf16> to vector<32x32xbf16>
    %cst_99 = arith.constant dense<0.000000e+00> : vector<16x32xf32>
    %293 = tpu.matmul %290, %292, %cst_99 {dimension_numbers = #tpu.dot_dimension_numbers<[1], [0], [0], [1], [0, 0, 1, 1], [], []>} : vector<16x32xbf16>, vector<32x32xbf16>, vector<16x32xf32> -> vector<16x32xf32>
    %294 = vector.extract_strided_slice %275 {offsets = [2, 0], sizes = [1, 32], strides = [1, 1]} : vector<4x32xf32> to vector<1x32xf32>
    %295 = vector.broadcast %294 : vector<1x32xf32> to vector<16x32xf32>
    %296 = arith.addf %293, %295 : vector<16x32xf32>
    %297 = arith.truncf %289 : vector<16x32xf32> to vector<16x32xbf16>
    %298 = tpu.concatenate %297, %297, %297, %297 in 0 : vector<16x32xbf16>, vector<16x32xbf16>, vector<16x32xbf16>, vector<16x32xbf16> -> vector<64x32xbf16>
    %299 = arith.mulf %298, %13 : vector<64x32xbf16>
    %300 = arith.truncf %296 : vector<16x32xf32> to vector<16x32xbf16>
    %301 = tpu.concatenate %300, %300, %300, %300 in 0 : vector<16x32xbf16>, vector<16x32xbf16>, vector<16x32xbf16>, vector<16x32xbf16> -> vector<64x32xbf16>
    %302 = arith.mulf %301, %13 : vector<64x32xbf16>
    %303 = arith.truncf %282 : vector<16x32xf32> to vector<16x32xbf16>
    %cst_100 = arith.constant dense<0.000000e+00> : vector<16x64xf32>
    %304 = tpu.matmul %303, %299, %cst_100 {dimension_numbers = #tpu.dot_dimension_numbers<[1], [1], [0], [0], [0, 0, 1, 0], [], []>} : vector<16x32xbf16>, vector<64x32xbf16>, vector<16x64xf32> -> vector<16x64xf32>
    %305 = arith.addf %304, %18 : vector<16x64xf32>
    %cst_101 = arith.constant dense<0xFF800000> : vector<16xf32>
    %306 = vector.multi_reduction <maximumf>, %305, %cst_101 [1] : vector<16x64xf32> to vector<16xf32>
    %307 = vector.shape_cast %306 : vector<16xf32> to vector<16x1xf32>
    %308 = vector.broadcast %307 : vector<16x1xf32> to vector<16x64xf32>
    %309 = arith.subf %305, %308 : vector<16x64xf32>
    %310 = math.exp %309 : vector<16x64xf32>
    %311 = arith.truncf %310 : vector<16x64xf32> to vector<16x64xbf16>
    %cst_102 = arith.constant dense<0.000000e+00> : vector<16x32xf32>
    %312 = tpu.matmul %311, %302, %cst_102 {dimension_numbers = #tpu.dot_dimension_numbers<[1], [0], [0], [1], [0, 0, 1, 1], [], []>} : vector<16x64xbf16>, vector<64x32xbf16>, vector<16x32xf32> -> vector<16x32xf32>
    %cst_103 = arith.constant dense<0.000000e+00> : vector<16x32xf32>
    %313 = tpu.matmul %311, %13, %cst_103 {dimension_numbers = #tpu.dot_dimension_numbers<[1], [0], [0], [1], [0, 0, 1, 1], [], []>} : vector<16x64xbf16>, vector<64x32xbf16>, vector<16x32xf32> -> vector<16x32xf32>
    %314 = tpu.reciprocal %313 {approx = true} : vector<16x32xf32> -> vector<16x32xf32>
    %315 = arith.mulf %312, %314 : vector<16x32xf32>
    %316 = arith.truncf %315 : vector<16x32xf32> to vector<16x32xbf16>
    %317 = vector.extract_strided_slice %274 {offsets = [3, 0, 0], sizes = [1, 32, 32], strides = [1, 1, 1]} : vector<4x32x32xbf16> to vector<1x32x32xbf16>
    %318 = vector.shape_cast %317 : vector<1x32x32xbf16> to vector<32x32xbf16>
    %cst_104 = arith.constant dense<0.000000e+00> : vector<16x32xf32>
    %319 = tpu.matmul %316, %318, %cst_104 {dimension_numbers = #tpu.dot_dimension_numbers<[1], [0], [0], [1], [0, 0, 1, 1], [], []>} : vector<16x32xbf16>, vector<32x32xbf16>, vector<16x32xf32> -> vector<16x32xf32>
    %320 = vector.extract_strided_slice %275 {offsets = [3, 0], sizes = [1, 32], strides = [1, 1]} : vector<4x32xf32> to vector<1x32xf32>
    %321 = vector.broadcast %320 : vector<1x32xf32> to vector<16x32xf32>
    %322 = arith.addf %319, %321 : vector<16x32xf32>
    %323 = arith.addf %217, %322 : vector<16x32xf32>
    %324 = vector.extract_strided_slice %245 {offsets = [10, 0], sizes = [1, 32], strides = [1, 1]} : vector<16x32xf32> to vector<1x32xf32>
    %325 = vector.extract_strided_slice %245 {offsets = [11, 0], sizes = [1, 32], strides = [1, 1]} : vector<16x32xf32> to vector<1x32xf32>
    %cst_105 = arith.constant dense<0.000000e+00> : vector<16xf32>
    %326 = vector.multi_reduction <add>, %323, %cst_105 [1] : vector<16x32xf32> to vector<16xf32>
    %327 = vector.shape_cast %326 : vector<16xf32> to vector<16x1xf32>
    %328 = arith.mulf %323, %323 : vector<16x32xf32>
    %cst_106 = arith.constant dense<0.000000e+00> : vector<16xf32>
    %329 = vector.multi_reduction <add>, %328, %cst_106 [1] : vector<16x32xf32> to vector<16xf32>
    %330 = vector.shape_cast %329 : vector<16xf32> to vector<16x1xf32>
    %cst_107 = arith.constant 3.125000e-02 : f32
    %331 = vector.broadcast %cst_107 : f32 to vector<16x1xf32>
    %332 = arith.mulf %327, %331 : vector<16x1xf32>
    %cst_108 = arith.constant 3.125000e-02 : f32
    %333 = vector.broadcast %cst_108 : f32 to vector<16x1xf32>
    %334 = arith.mulf %330, %333 : vector<16x1xf32>
    %335 = arith.mulf %332, %332 : vector<16x1xf32>
    %336 = arith.subf %334, %335 : vector<16x1xf32>
    %337 = vector.broadcast %332 : vector<16x1xf32> to vector<16x32xf32>
    %338 = arith.subf %323, %337 : vector<16x32xf32>
    %cst_109 = arith.constant 9.99999974E-6 : f32
    %339 = vector.broadcast %cst_109 : f32 to vector<16x1xf32>
    %340 = arith.addf %336, %339 : vector<16x1xf32>
    %341 = math.rsqrt %340 : vector<16x1xf32>
    %342 = vector.broadcast %341 : vector<16x1xf32> to vector<16x32xf32>
    %343 = arith.mulf %338, %342 : vector<16x32xf32>
    %344 = vector.broadcast %324 : vector<1x32xf32> to vector<16x32xf32>
    %345 = arith.mulf %343, %344 : vector<16x32xf32>
    %346 = vector.broadcast %325 : vector<1x32xf32> to vector<16x32xf32>
    %347 = arith.addf %345, %346 : vector<16x32xf32>
    %348 = arith.addf %347, %5 : vector<16x32xf32>
    %c3 = arith.constant 3 : index
    %c0_110 = arith.constant 0 : index
    %c0_111 = arith.constant 0 : index
    %c0_112 = arith.constant 0 : index
    %349 = vector.load %arg2[%c3, %c0_110, %c0_111, %c0_112] : memref<4x4x32x32xbf16, #tpu.memory_space<vmem>>, vector<1x4x32x32xbf16>
    %350 = vector.shape_cast %349 : vector<1x4x32x32xbf16> to vector<4x32x32xbf16>
    %351 = vector.extract_strided_slice %245 {offsets = [4, 0], sizes = [4, 32], strides = [1, 1]} : vector<16x32xf32> to vector<4x32xf32>
    %352 = arith.truncf %348 : vector<16x32xf32> to vector<16x32xbf16>
    %353 = vector.extract_strided_slice %350 {offsets = [0, 0, 0], sizes = [1, 32, 32], strides = [1, 1, 1]} : vector<4x32x32xbf16> to vector<1x32x32xbf16>
    %354 = vector.shape_cast %353 : vector<1x32x32xbf16> to vector<32x32xbf16>
    %cst_113 = arith.constant dense<0.000000e+00> : vector<16x32xf32>
    %355 = tpu.matmul %352, %354, %cst_113 {dimension_numbers = #tpu.dot_dimension_numbers<[1], [0], [0], [1], [0, 0, 1, 1], [], []>} : vector<16x32xbf16>, vector<32x32xbf16>, vector<16x32xf32> -> vector<16x32xf32>
    %356 = vector.extract_strided_slice %351 {offsets = [0, 0], sizes = [1, 32], strides = [1, 1]} : vector<4x32xf32> to vector<1x32xf32>
    %357 = vector.broadcast %356 : vector<1x32xf32> to vector<16x32xf32>
    %358 = arith.addf %355, %357 : vector<16x32xf32>
    %359 = arith.truncf %9 : vector<32x32xf32> to vector<32x32xbf16>
    %360 = vector.extract_strided_slice %350 {offsets = [1, 0, 0], sizes = [1, 32, 32], strides = [1, 1, 1]} : vector<4x32x32xbf16> to vector<1x32x32xbf16>
    %361 = vector.shape_cast %360 : vector<1x32x32xbf16> to vector<32x32xbf16>
    %cst_114 = arith.constant dense<0.000000e+00> : vector<32x32xf32>
    %362 = tpu.matmul %359, %361, %cst_114 {dimension_numbers = #tpu.dot_dimension_numbers<[1], [0], [0], [1], [0, 0, 1, 1], [], []>} : vector<32x32xbf16>, vector<32x32xbf16>, vector<32x32xf32> -> vector<32x32xf32>
    %363 = vector.extract_strided_slice %351 {offsets = [1, 0], sizes = [1, 32], strides = [1, 1]} : vector<4x32xf32> to vector<1x32xf32>
    %364 = vector.broadcast %363 : vector<1x32xf32> to vector<32x32xf32>
    %365 = arith.addf %362, %364 : vector<32x32xf32>
    %366 = arith.truncf %7 : vector<32x32xf32> to vector<32x32xbf16>
    %367 = vector.extract_strided_slice %350 {offsets = [2, 0, 0], sizes = [1, 32, 32], strides = [1, 1, 1]} : vector<4x32x32xbf16> to vector<1x32x32xbf16>
    %368 = vector.shape_cast %367 : vector<1x32x32xbf16> to vector<32x32xbf16>
    %cst_115 = arith.constant dense<0.000000e+00> : vector<32x32xf32>
    %369 = tpu.matmul %366, %368, %cst_115 {dimension_numbers = #tpu.dot_dimension_numbers<[1], [0], [0], [1], [0, 0, 1, 1], [], []>} : vector<32x32xbf16>, vector<32x32xbf16>, vector<32x32xf32> -> vector<32x32xf32>
    %370 = vector.extract_strided_slice %351 {offsets = [2, 0], sizes = [1, 32], strides = [1, 1]} : vector<4x32xf32> to vector<1x32xf32>
    %371 = vector.broadcast %370 : vector<1x32xf32> to vector<32x32xf32>
    %372 = arith.addf %369, %371 : vector<32x32xf32>
    %373 = arith.truncf %365 : vector<32x32xf32> to vector<32x32xbf16>
    %374 = tpu.concatenate %373, %373, %373, %373 in 0 : vector<32x32xbf16>, vector<32x32xbf16>, vector<32x32xbf16>, vector<32x32xbf16> -> vector<128x32xbf16>
    %375 = arith.mulf %374, %15 : vector<128x32xbf16>
    %376 = arith.truncf %372 : vector<32x32xf32> to vector<32x32xbf16>
    %377 = tpu.concatenate %376, %376, %376, %376 in 0 : vector<32x32xbf16>, vector<32x32xbf16>, vector<32x32xbf16>, vector<32x32xbf16> -> vector<128x32xbf16>
    %378 = arith.mulf %377, %15 : vector<128x32xbf16>
    %379 = arith.truncf %358 : vector<16x32xf32> to vector<16x32xbf16>
    %cst_116 = arith.constant dense<0.000000e+00> : vector<16x128xf32>
    %380 = tpu.matmul %379, %375, %cst_116 {dimension_numbers = #tpu.dot_dimension_numbers<[1], [1], [0], [0], [0, 0, 1, 0], [], []>} : vector<16x32xbf16>, vector<128x32xbf16>, vector<16x128xf32> -> vector<16x128xf32>
    %381 = arith.addf %380, %20 : vector<16x128xf32>
    %cst_117 = arith.constant dense<0xFF800000> : vector<16xf32>
    %382 = vector.multi_reduction <maximumf>, %381, %cst_117 [1] : vector<16x128xf32> to vector<16xf32>
    %383 = vector.shape_cast %382 : vector<16xf32> to vector<16x1xf32>
    %384 = vector.broadcast %383 : vector<16x1xf32> to vector<16x128xf32>
    %385 = arith.subf %381, %384 : vector<16x128xf32>
    %386 = math.exp %385 : vector<16x128xf32>
    %387 = arith.truncf %386 : vector<16x128xf32> to vector<16x128xbf16>
    %cst_118 = arith.constant dense<0.000000e+00> : vector<16x32xf32>
    %388 = tpu.matmul %387, %378, %cst_118 {dimension_numbers = #tpu.dot_dimension_numbers<[1], [0], [0], [1], [0, 0, 1, 1], [], []>} : vector<16x128xbf16>, vector<128x32xbf16>, vector<16x32xf32> -> vector<16x32xf32>
    %cst_119 = arith.constant dense<0.000000e+00> : vector<16x32xf32>
    %389 = tpu.matmul %387, %15, %cst_119 {dimension_numbers = #tpu.dot_dimension_numbers<[1], [0], [0], [1], [0, 0, 1, 1], [], []>} : vector<16x128xbf16>, vector<128x32xbf16>, vector<16x32xf32> -> vector<16x32xf32>
    %390 = tpu.reciprocal %389 {approx = true} : vector<16x32xf32> -> vector<16x32xf32>
    %391 = arith.mulf %388, %390 : vector<16x32xf32>
    %392 = arith.truncf %391 : vector<16x32xf32> to vector<16x32xbf16>
    %393 = vector.extract_strided_slice %350 {offsets = [3, 0, 0], sizes = [1, 32, 32], strides = [1, 1, 1]} : vector<4x32x32xbf16> to vector<1x32x32xbf16>
    %394 = vector.shape_cast %393 : vector<1x32x32xbf16> to vector<32x32xbf16>
    %cst_120 = arith.constant dense<0.000000e+00> : vector<16x32xf32>
    %395 = tpu.matmul %392, %394, %cst_120 {dimension_numbers = #tpu.dot_dimension_numbers<[1], [0], [0], [1], [0, 0, 1, 1], [], []>} : vector<16x32xbf16>, vector<32x32xbf16>, vector<16x32xf32> -> vector<16x32xf32>
    %396 = vector.extract_strided_slice %351 {offsets = [3, 0], sizes = [1, 32], strides = [1, 1]} : vector<4x32xf32> to vector<1x32xf32>
    %397 = vector.broadcast %396 : vector<1x32xf32> to vector<16x32xf32>
    %398 = arith.addf %395, %397 : vector<16x32xf32>
    %399 = arith.addf %323, %398 : vector<16x32xf32>
    %400 = vector.extract_strided_slice %245 {offsets = [12, 0], sizes = [1, 32], strides = [1, 1]} : vector<16x32xf32> to vector<1x32xf32>
    %401 = vector.extract_strided_slice %245 {offsets = [13, 0], sizes = [1, 32], strides = [1, 1]} : vector<16x32xf32> to vector<1x32xf32>
    %cst_121 = arith.constant dense<0.000000e+00> : vector<16xf32>
    %402 = vector.multi_reduction <add>, %399, %cst_121 [1] : vector<16x32xf32> to vector<16xf32>
    %403 = vector.shape_cast %402 : vector<16xf32> to vector<16x1xf32>
    %404 = arith.mulf %399, %399 : vector<16x32xf32>
    %cst_122 = arith.constant dense<0.000000e+00> : vector<16xf32>
    %405 = vector.multi_reduction <add>, %404, %cst_122 [1] : vector<16x32xf32> to vector<16xf32>
    %406 = vector.shape_cast %405 : vector<16xf32> to vector<16x1xf32>
    %cst_123 = arith.constant 3.125000e-02 : f32
    %407 = vector.broadcast %cst_123 : f32 to vector<16x1xf32>
    %408 = arith.mulf %403, %407 : vector<16x1xf32>
    %cst_124 = arith.constant 3.125000e-02 : f32
    %409 = vector.broadcast %cst_124 : f32 to vector<16x1xf32>
    %410 = arith.mulf %406, %409 : vector<16x1xf32>
    %411 = arith.mulf %408, %408 : vector<16x1xf32>
    %412 = arith.subf %410, %411 : vector<16x1xf32>
    %413 = vector.broadcast %408 : vector<16x1xf32> to vector<16x32xf32>
    %414 = arith.subf %399, %413 : vector<16x32xf32>
    %cst_125 = arith.constant 9.99999974E-6 : f32
    %415 = vector.broadcast %cst_125 : f32 to vector<16x1xf32>
    %416 = arith.addf %412, %415 : vector<16x1xf32>
    %417 = math.rsqrt %416 : vector<16x1xf32>
    %418 = vector.broadcast %417 : vector<16x1xf32> to vector<16x32xf32>
    %419 = arith.mulf %414, %418 : vector<16x32xf32>
    %420 = vector.broadcast %400 : vector<1x32xf32> to vector<16x32xf32>
    %421 = arith.mulf %419, %420 : vector<16x32xf32>
    %422 = vector.broadcast %401 : vector<1x32xf32> to vector<16x32xf32>
    %423 = arith.addf %421, %422 : vector<16x32xf32>
    %424 = arith.truncf %423 : vector<16x32xf32> to vector<16x32xbf16>
    %c1_126 = arith.constant 1 : index
    %c0_127 = arith.constant 0 : index
    %c0_128 = arith.constant 0 : index
    %425 = vector.load %arg3[%c1_126, %c0_127, %c0_128] : memref<2x32x128xbf16, #tpu.memory_space<vmem>>, vector<1x32x128xbf16>
    %426 = vector.shape_cast %425 : vector<1x32x128xbf16> to vector<32x128xbf16>
    %cst_129 = arith.constant dense<0.000000e+00> : vector<16x128xf32>
    %427 = tpu.matmul %424, %426, %cst_129 {dimension_numbers = #tpu.dot_dimension_numbers<[1], [0], [0], [1], [0, 0, 1, 1], [], []>} : vector<16x32xbf16>, vector<32x128xbf16>, vector<16x128xf32> -> vector<16x128xf32>
    %428 = vector.extract_strided_slice %247 {offsets = [0, 0], sizes = [1, 128], strides = [1, 1]} : vector<2x128xf32> to vector<1x128xf32>
    %429 = vector.broadcast %428 : vector<1x128xf32> to vector<16x128xf32>
    %430 = arith.addf %427, %429 : vector<16x128xf32>
    %cst_130 = arith.constant 0.000000e+00 : f32
    %431 = vector.broadcast %cst_130 : f32 to vector<16x128xf32>
    %432 = arith.maximumf %430, %431 : vector<16x128xf32>
    %433 = arith.truncf %432 : vector<16x128xf32> to vector<16x128xbf16>
    %c1_131 = arith.constant 1 : index
    %c0_132 = arith.constant 0 : index
    %c0_133 = arith.constant 0 : index
    %434 = vector.load %arg4[%c1_131, %c0_132, %c0_133] : memref<2x128x32xbf16, #tpu.memory_space<vmem>>, vector<1x128x32xbf16>
    %435 = vector.shape_cast %434 : vector<1x128x32xbf16> to vector<128x32xbf16>
    %cst_134 = arith.constant dense<0.000000e+00> : vector<16x32xf32>
    %436 = tpu.matmul %433, %435, %cst_134 {dimension_numbers = #tpu.dot_dimension_numbers<[1], [0], [0], [1], [0, 0, 1, 1], [], []>} : vector<16x128xbf16>, vector<128x32xbf16>, vector<16x32xf32> -> vector<16x32xf32>
    %437 = arith.addf %399, %436 : vector<16x32xf32>
    %438 = vector.extract_strided_slice %247 {offsets = [1, 0], sizes = [1, 32], strides = [1, 1]} : vector<2x128xf32> to vector<1x32xf32>
    %439 = vector.broadcast %438 : vector<1x32xf32> to vector<16x32xf32>
    %440 = arith.addf %437, %439 : vector<16x32xf32>
    %441 = vector.extract_strided_slice %245 {offsets = [14, 0], sizes = [1, 32], strides = [1, 1]} : vector<16x32xf32> to vector<1x32xf32>
    %442 = vector.extract_strided_slice %245 {offsets = [15, 0], sizes = [1, 32], strides = [1, 1]} : vector<16x32xf32> to vector<1x32xf32>
    %cst_135 = arith.constant dense<0.000000e+00> : vector<16xf32>
    %443 = vector.multi_reduction <add>, %440, %cst_135 [1] : vector<16x32xf32> to vector<16xf32>
    %444 = vector.shape_cast %443 : vector<16xf32> to vector<16x1xf32>
    %445 = arith.mulf %440, %440 : vector<16x32xf32>
    %cst_136 = arith.constant dense<0.000000e+00> : vector<16xf32>
    %446 = vector.multi_reduction <add>, %445, %cst_136 [1] : vector<16x32xf32> to vector<16xf32>
    %447 = vector.shape_cast %446 : vector<16xf32> to vector<16x1xf32>
    %cst_137 = arith.constant 3.125000e-02 : f32
    %448 = vector.broadcast %cst_137 : f32 to vector<16x1xf32>
    %449 = arith.mulf %444, %448 : vector<16x1xf32>
    %cst_138 = arith.constant 3.125000e-02 : f32
    %450 = vector.broadcast %cst_138 : f32 to vector<16x1xf32>
    %451 = arith.mulf %447, %450 : vector<16x1xf32>
    %452 = arith.mulf %449, %449 : vector<16x1xf32>
    %453 = arith.subf %451, %452 : vector<16x1xf32>
    %454 = vector.broadcast %449 : vector<16x1xf32> to vector<16x32xf32>
    %455 = arith.subf %440, %454 : vector<16x32xf32>
    %cst_139 = arith.constant 9.99999974E-6 : f32
    %456 = vector.broadcast %cst_139 : f32 to vector<16x1xf32>
    %457 = arith.addf %453, %456 : vector<16x1xf32>
    %458 = math.rsqrt %457 : vector<16x1xf32>
    %459 = vector.broadcast %458 : vector<16x1xf32> to vector<16x32xf32>
    %460 = arith.mulf %455, %459 : vector<16x32xf32>
    %461 = vector.broadcast %441 : vector<1x32xf32> to vector<16x32xf32>
    %462 = arith.mulf %460, %461 : vector<16x32xf32>
    %463 = vector.broadcast %442 : vector<1x32xf32> to vector<16x32xf32>
    %464 = arith.addf %462, %463 : vector<16x32xf32>
    %465 = vector.extract_strided_slice %464 {offsets = [0, 0], sizes = [8, 32], strides = [1, 1]} : vector<16x32xf32> to vector<8x32xf32>
    %466 = vector.extract_strided_slice %464 {offsets = [8, 0], sizes = [8, 32], strides = [1, 1]} : vector<16x32xf32> to vector<8x32xf32>
    %467 = tpu.concatenate %242, %243, %465, %466 in 1 : vector<8x32xf32>, vector<8x32xf32>, vector<8x32xf32>, vector<8x32xf32> -> vector<8x128xf32>
    %c0_140 = arith.constant 0 : index
    %c0_141 = arith.constant 0 : index
    %468 = vector.load %arg9[%c0_140, %c0_141] : memref<8x128xf32, #tpu.memory_space<vmem>>, vector<8x128xf32>
    tpu.vector_store %arg9[%c0_140, %c0_141], %467 {strides = array<i32>} : memref<8x128xf32, #tpu.memory_space<vmem>>, vector<8x128xf32>,
    return
  }
}

</mosaic_0001>

<llo_original>
// kernel: transformer_decoder_forward.1
$region0: #{transformer_decoder_forward.1}
  #allocation0 [shape = 'u32[]', space=smem, size = 0x4, offset = 0x4, fixed_abs, tag = 'smem constant byte address 0x4 - core index']
  #allocation1 [shape = 'u32[144,128]{1,0:T(1,128)}', space=vmem, size = 0x12000, scoped, tag = 'internal scratch']
  %s0 = inlined_call_operand.vmem [shape: f32[3,16,32], index: 0, kind: input, shape index: {}]
  %s1 = inlined_call_operand.vmem [shape: f32[2,32,32], index: 1, kind: input, shape index: {}]
  %s2 = inlined_call_operand.vmem [shape: bf16[4,4,32,32], index: 2, kind: input, shape index: {}]
  %s3 = inlined_call_operand.vmem [shape: bf16[2,32,128], index: 3, kind: input, shape index: {}]
  %s4 = inlined_call_operand.vmem [shape: bf16[2,128,32], index: 4, kind: input, shape index: {}]
  %s5 = inlined_call_operand.vmem [shape: f32[2,16,32], index: 5, kind: input, shape index: {}]
  %s6 = inlined_call_operand.vmem [shape: f32[2,2,128], index: 6, kind: input, shape index: {}]
  %s7 = inlined_call_operand.vmem [shape: bf16[2,128,32], index: 7, kind: input, shape index: {}]
  %s8 = inlined_call_operand.vmem [shape: f32[2,16,128], index: 8, kind: input, shape index: {}]
  %s9 = inlined_call_operand.vmem [shape: f32[8,128], index: 9, kind: output, shape index: {}]
  %s10 = sld [smem:[#allocation0]]
  $region46: #{transformer_decoder_forward.1} parent=0
    _
  %s12 = ssub.s32 1, %s10
  %s13 = scalar_select 0, %s12, %s10
  // Predicated region
  $region2: #{transformer_decoder_forward.1} parent=0 // pred_check
    _
  $region3: #{transformer_decoder_forward.1} parent=0 // pred_check_branch
    %15 = sbr.rel (0) target = $region5
  $region4: #{transformer_decoder_forward.1} parent=0 // pred_region
    _
  $region5: #{transformer_decoder_forward.1} parent=0 // pred_fallthru
    _
  // Predicated region
  $region6: #{transformer_decoder_forward.1} parent=0 // pred_check
    _
  $region7: #{transformer_decoder_forward.1} parent=0 // pred_check_branch
    %17 = sbr.rel (0) target = $region9
  $region8: #{transformer_decoder_forward.1} parent=0 // pred_region
    _
  $region9: #{transformer_decoder_forward.1} parent=0 // pred_fallthru
    _
  // Predicated region
  $region10: #{transformer_decoder_forward.1} parent=0 // pred_check
    _
  $region11: #{transformer_decoder_forward.1} parent=0 // pred_check_branch
    %19 = sbr.rel (0) target = $region13
  $region12: #{transformer_decoder_forward.1} parent=0 // pred_region
    _
  $region13: #{transformer_decoder_forward.1} parent=0 // pred_fallthru
    _
  // Predicated region
  $region14: #{transformer_decoder_forward.1} parent=0 // pred_check
    _
  $region15: #{transformer_decoder_forward.1} parent=0 // pred_check_branch
    %21 = sbr.rel (0) target = $region17
  $region16: #{transformer_decoder_forward.1} parent=0 // pred_region
    _
  $region17: #{transformer_decoder_forward.1} parent=0 // pred_fallthru
    _
  // Predicated region
  $region18: #{transformer_decoder_forward.1} parent=0 // pred_check
    _
  $region19: #{transformer_decoder_forward.1} parent=0 // pred_check_branch
    %23 = sbr.rel (0) target = $region21
  $region20: #{transformer_decoder_forward.1} parent=0 // pred_region
    _
  $region21: #{transformer_decoder_forward.1} parent=0 // pred_fallthru
    _
  // Predicated region
  $region22: #{transformer_decoder_forward.1} parent=0 // pred_check
    _
  $region23: #{transformer_decoder_forward.1} parent=0 // pred_check_branch
    %25 = sbr.rel (0) target = $region25
  $region24: #{transformer_decoder_forward.1} parent=0 // pred_region
    _
  $region25: #{transformer_decoder_forward.1} parent=0 // pred_fallthru
    _
  // Predicated region
  $region26: #{transformer_decoder_forward.1} parent=0 // pred_check
    _
  $region27: #{transformer_decoder_forward.1} parent=0 // pred_check_branch
    %27 = sbr.rel (0) target = $region29
  $region28: #{transformer_decoder_forward.1} parent=0 // pred_region
    _
  $region29: #{transformer_decoder_forward.1} parent=0 // pred_fallthru
    _
  // Predicated region
  $region30: #{transformer_decoder_forward.1} parent=0 // pred_check
    _
  $region31: #{transformer_decoder_forward.1} parent=0 // pred_check_branch
    %29 = sbr.rel (0) target = $region33
  $region32: #{transformer_decoder_forward.1} parent=0 // pred_region
    _
  $region33: #{transformer_decoder_forward.1} parent=0 // pred_fallthru
    _
  // Predicated region
  $region34: #{transformer_decoder_forward.1} parent=0 // pred_check
    _
  $region35: #{transformer_decoder_forward.1} parent=0 // pred_check_branch
    %31 = sbr.rel (0) target = $region37
  $region36: #{transformer_decoder_forward.1} parent=0 // pred_region
    _
  $region37: #{transformer_decoder_forward.1} parent=0 // pred_fallthru
    _
  %v33 = vld [vmem:[%s0] sm:$0xff]
  %v34 = vld [vmem:[%s0 + $0x8] sm:$0xff]
  %s35 = scalar_lea.vmem %s0, 16
  %v36 = vld [vmem:[%s35] sm:$0xff]
  %v37 = vld [vmem:[%s35 + $0x8] sm:$0xff]
  %s38 = scalar_lea.vmem %s0, 32
  %v39 = vld [vmem:[%s38] sm:$0xff]
  %v40 = vld [vmem:[%s38 + $0x8] sm:$0xff]
  %v41 = vld [vmem:[%s1] sm:$0xff]
  %v42 = vld [vmem:[%s1 + $0x8] sm:$0xff]
  %v43 = vld [vmem:[%s1 + $0x10] sm:$0xff]
  %v44 = vld [vmem:[%s1 + $0x18] sm:$0xff]
  %s45 = scalar_lea.vmem %s1, 32
  %v46 = vld [vmem:[%s45] sm:$0xff]
  %v47 = vld [vmem:[%s45 + $0x8] sm:$0xff]
  %v48 = vld [vmem:[%s45 + $0x10] sm:$0xff]
  %v49 = vld [vmem:[%s45 + $0x18] sm:$0xff]
  %v50 = vadd.f32 %v36, %v39
  %v51 = vadd.f32 %v37, %v40
  %v52 = vld [vmem:[%s7] sm:$0xf]
  %v53 = vld [vmem:[%s7 + $0x4] sm:$0xf]
  %v54 = vld [vmem:[%s7 + $0x8] sm:$0xf]
  %v55 = vld [vmem:[%s7 + $0xc] sm:$0xf]
  %v56 = vld [vmem:[%s7 + $0x10] sm:$0xf]
  %v57 = vld [vmem:[%s7 + $0x14] sm:$0xf]
  %v58 = vld [vmem:[%s7 + $0x18] sm:$0xf]
  %v59 = vld [vmem:[%s7 + $0x1c] sm:$0xf]
  %s60 = scalar_lea.vmem %s7, 64
  %v61 = vld [vmem:[%s60] sm:$0xf]
  %v62 = vld [vmem:[%s60 + $0x4] sm:$0xf]
  %v63 = vld [vmem:[%s60 + $0x8] sm:$0xf]
  %v64 = vld [vmem:[%s60 + $0xc] sm:$0xf]
  %v65 = vld [vmem:[%s60 + $0x10] sm:$0xf]
  %v66 = vld [vmem:[%s60 + $0x14] sm:$0xf]
  %v67 = vld [vmem:[%s60 + $0x18] sm:$0xf]
  %v68 = vld [vmem:[%s60 + $0x1c] sm:$0xf]
  %v69 = vld [vmem:[%s60 + $0x20] sm:$0xf]
  %v70 = vld [vmem:[%s60 + $0x24] sm:$0xf]
  %v71 = vld [vmem:[%s60 + $0x28] sm:$0xf]
  %v72 = vld [vmem:[%s60 + $0x2c] sm:$0xf]
  %v73 = vld [vmem:[%s60 + $0x30] sm:$0xf]
  %v74 = vld [vmem:[%s60 + $0x34] sm:$0xf]
  %v75 = vld [vmem:[%s60 + $0x38] sm:$0xf]
  %v76 = vld [vmem:[%s60 + $0x3c] sm:$0xf]
  %v77 = vld [vmem:[%s8] sm:$0xff]
  %v78 = vld [vmem:[%s8 + $0x8] sm:$0xff]
  %s79 = scalar_lea.vmem %s8, 16
  %v80 = vld [vmem:[%s79] sm:$0xff]
  %v81 = vld [vmem:[%s79 + $0x8] sm:$0xff]
  %v82 = vld [vmem:[%s5] sm:$0xff]
  %v83 = vld [vmem:[%s5 + $0x8] sm:$0xff]
  %v84 = vld [vmem:[%s6] sm:$0x3]
  %vm85 = vcmask 261120
  %v86 = vsel %vm85, %v33, 0.0
  %87 = vadd.xlane.f32.xlu0 %v86
  %v88 = vpop.xlane.xlu0 %87
  %v89 = vsel %vm85, %v34, 0.0
  %90 = vadd.xlane.f32.xlu0 %v89
  %v91 = vpop.xlane.xlu0 %90
  %v92 = vmul.f32 %v33, %v33
  %v93 = vmul.f32 %v34, %v34
  %v94 = vsel %vm85, %v92, 0.0
  %95 = vadd.xlane.f32.xlu0 %v94
  %v96 = vpop.xlane.xlu0 %95
  %v97 = vsel %vm85, %v93, 0.0
  %98 = vadd.xlane.f32.xlu0 %v97
  %v99 = vpop.xlane.xlu0 %98
  %v100 = vmul.f32 %v88, 0.03125
  %v101 = vmul.f32 %v91, 0.03125
  %v102 = vmul.f32 %v96, 0.03125
  %v103 = vmul.f32 %v99, 0.03125
  %v104 = vmul.f32 %v100, %v100
  %v105 = vmul.f32 %v101, %v101
  %v106 = vsub.f32 %v102, %v104
  %v107 = vsub.f32 %v103, %v105
  %v108 = vsub.f32 %v33, %v100
  %v109 = vsub.f32 %v34, %v101
  %v110 = vadd.f32 %v106, 1e-05
  %v111 = vadd.f32 %v107, 1e-05
  %v112 = vrsqrt.pop %v110
  %v113 = vrsqrt.pop %v111
  %v114 = vmul.f32 %v108, %v112
  %v115 = vmul.f32 %v109, %v113
  %v116 = vlaneseq
  %v117 = vshrl.u32 %v116, 7
  %v118 = vsub.s32 0, %v117
  %v119 = vrot.slane %v83, %v118
  %v120 = vmul.f32 %v114, %v119
  %v121 = vmul.f32 %v115, %v119
  %v122 = vlaneseq
  %v123 = vshrl.u32 %v122, 7
  %v124 = vsub.s32 1, %v123
  %v125 = vrot.slane %v83, %v124
  %v126 = vadd.f32 %v120, %v125
  %v127 = vadd.f32 %v121, %v125
  %v128 = vadd.f32 %v126, %v39
  %v129 = vadd.f32 %v127, %v40
  %v130 = vld [vmem:[%s2] sm:$0xf]
  %v131 = vld [vmem:[%s2 + $0x4] sm:$0xf]
  %v132 = vld [vmem:[%s2 + $0x8] sm:$0xf]
  %v133 = vld [vmem:[%s2 + $0xc] sm:$0xf]
  %v134 = vld [vmem:[%s2 + $0x10] sm:$0xf]
  %v135 = vld [vmem:[%s2 + $0x14] sm:$0xf]
  %v136 = vld [vmem:[%s2 + $0x18] sm:$0xf]
  %v137 = vld [vmem:[%s2 + $0x1c] sm:$0xf]
  %v138 = vld [vmem:[%s2 + $0x20] sm:$0xf]
  %v139 = vld [vmem:[%s2 + $0x24] sm:$0xf]
  %v140 = vld [vmem:[%s2 + $0x28] sm:$0xf]
  %v141 = vld [vmem:[%s2 + $0x2c] sm:$0xf]
  %v142 = vld [vmem:[%s2 + $0x30] sm:$0xf]
  %v143 = vld [vmem:[%s2 + $0x34] sm:$0xf]
  %v144 = vld [vmem:[%s2 + $0x38] sm:$0xf]
  %v145 = vld [vmem:[%s2 + $0x3c] sm:$0xf]
  %v146 = vpack.c.bf16 %v129, %v128
  %v147 = vlaneseq
  %v148 = vshrl.u32 %v147, 7
  %v149 = vsub.s32 0, %v148
  %v150 = vrot.slane %v82, %v149
  %v155 = vunpack.c.l.b16 %v130
  %v156 = vunpack.c.l.b16 %v131
  %v157 = vunpack.c.l.b16 %v132
  %v158 = vunpack.c.l.b16 %v133
  %v159 = vpack.c.b16 %v156, %v155
  %v160 = vpack.c.b16 %v158, %v157
  %v164 = vsel %vm85, %v146, 0
  %166 = vmatprep.subr.bf16.mxu0 0
  %167 = vmatpush1.bf16.msra.mxu0 0
  %168 = vmatprep.subr.bf16.mxu0 0
  %169 = vmatpush1.bf16.msra.mxu0 0
  %170 = vmatprep.subr.bf16.mxu0 0
  %171 = vmatpush1.bf16.msra.mxu0 0
  %172 = vmatprep.subr.bf16.mxu0 0
  %173 = vmatpush1.bf16.msra.mxu0 0
  %174 = vmatprep.subr.bf16.mxu0 0
  %175 = vmatpush1.bf16.msra.mxu0 0
  %176 = vmatprep.subr.bf16.mxu0 0
  %177 = vmatpush1.bf16.msra.mxu0 0
  %178 = vmatprep.subr.bf16.mxu0 0
  %179 = vmatpush1.bf16.msra.mxu0 %v160
  %180 = vmatprep.subr.bf16.mxu0 0
  %181 = vmatpush1.bf16.msra.mxu0 %v159
  %182 = vmatprep.subr.bf16.mxu0 0
  %183 = vmatpush2.bf16.msra.mxu0 0
  %184 = vmatprep.subr.bf16.mxu0 0
  %185 = vmatpush2.bf16.msra.mxu0 0
  %186 = vmatprep.subr.bf16.mxu0 0
  %187 = vmatpush2.bf16.msra.mxu0 0
  %188 = vmatprep.subr.bf16.mxu0 0
  %189 = vmatpush2.bf16.msra.mxu0 0
  %190 = vmatprep.subr.bf16.mxu0 0
  %191 = vmatpush2.bf16.msra.mxu0 0
  %192 = vmatprep.subr.bf16.mxu0 0
  %193 = vmatpush2.bf16.msra.mxu0 0
  %194 = vmatprep.subr.bf16.mxu0 0
  %195 = vmatpush2.bf16.msra.mxu0 0
  %196 = vmatprep.subr.bf16.mxu0 0
  %197 = vmatpush2.bf16.msra.mxu0 0
  %198 = vmatprep.mubr.bf16.mxu0 0
  %199 = vmatmul.mubr.bf16.gmra.mxu0 %v164
  %v200 = vpop.f32.mrf.mxu0
  %v201 = vadd.f32 %v150, %v200
  %v202 = vpop.f32.mrf.mxu0
  %v203 = vpop.f32.mrf.mxu0
  %v204 = vadd.f32 %v150, %v203
  %v205 = vpop.f32.mrf.mxu0
  %206 = vdwg.mxu0
  %v207 = vpack.c.bf16 %v51, %v50
  %v208 = vlaneseq
  %v209 = vshrl.u32 %v208, 7
  %v210 = vsub.s32 1, %v209
  %v211 = vrot.slane %v82, %v210
  %v216 = vunpack.c.l.b16 %v134
  %v217 = vunpack.c.l.b16 %v135
  %v218 = vunpack.c.l.b16 %v136
  %v219 = vunpack.c.l.b16 %v137
  %v220 = vpack.c.b16 %v217, %v216
  %v221 = vpack.c.b16 %v219, %v218
  %v225 = vsel %vm85, %v207, 0
  %227 = vmatprep.subr.bf16.mxu0 0
  %228 = vmatpush1.bf16.msra.mxu0 0
  %229 = vmatprep.subr.bf16.mxu0 0
  %230 = vmatpush1.bf16.msra.mxu0 0
  %231 = vmatprep.subr.bf16.mxu0 0
  %232 = vmatpush1.bf16.msra.mxu0 0
  %233 = vmatprep.subr.bf16.mxu0 0
  %234 = vmatpush1.bf16.msra.mxu0 0
  %235 = vmatprep.subr.bf16.mxu0 0
  %236 = vmatpush1.bf16.msra.mxu0 0
  %237 = vmatprep.subr.bf16.mxu0 0
  %238 = vmatpush1.bf16.msra.mxu0 0
  %239 = vmatprep.subr.bf16.mxu0 0
  %240 = vmatpush1.bf16.msra.mxu0 %v221
  %241 = vmatprep.subr.bf16.mxu0 0
  %242 = vmatpush1.bf16.msra.mxu0 %v220
  %243 = vmatprep.subr.bf16.mxu0 0
  %244 = vmatpush2.bf16.msra.mxu0 0
  %245 = vmatprep.subr.bf16.mxu0 0
  %246 = vmatpush2.bf16.msra.mxu0 0
  %247 = vmatprep.subr.bf16.mxu0 0
  %248 = vmatpush2.bf16.msra.mxu0 0
  %249 = vmatprep.subr.bf16.mxu0 0
  %250 = vmatpush2.bf16.msra.mxu0 0
  %251 = vmatprep.subr.bf16.mxu0 0
  %252 = vmatpush2.bf16.msra.mxu0 0
  %253 = vmatprep.subr.bf16.mxu0 0
  %254 = vmatpush2.bf16.msra.mxu0 0
  %255 = vmatprep.subr.bf16.mxu0 0
  %256 = vmatpush2.bf16.msra.mxu0 0
  %257 = vmatprep.subr.bf16.mxu0 0
  %258 = vmatpush2.bf16.msra.mxu0 0
  %259 = vmatprep.mubr.bf16.mxu0 0
  %260 = vmatmul.mubr.bf16.gmra.mxu0 %v225
  %v261 = vpop.f32.mrf.mxu0
  %v262 = vadd.f32 %v211, %v261
  %v263 = vpop.f32.mrf.mxu0
  %v264 = vpop.f32.mrf.mxu0
  %v265 = vadd.f32 %v211, %v264
  %v266 = vpop.f32.mrf.mxu0
  %267 = vdwg.mxu0
  %v268 = vpack.c.bf16 %v37, %v36
  %v269 = vlaneseq
  %v270 = vshrl.u32 %v269, 7
  %v271 = vsub.s32 2, %v270
  %v272 = vrot.slane %v82, %v271
  %v277 = vunpack.c.l.b16 %v138
  %v278 = vunpack.c.l.b16 %v139
  %v279 = vunpack.c.l.b16 %v140
  %v280 = vunpack.c.l.b16 %v141
  %v281 = vpack.c.b16 %v278, %v277
  %v282 = vpack.c.b16 %v280, %v279
  %v286 = vsel %vm85, %v268, 0
  %288 = vmatprep.subr.bf16.mxu0 0
  %289 = vmatpush1.bf16.msra.mxu0 0
  %290 = vmatprep.subr.bf16.mxu0 0
  %291 = vmatpush1.bf16.msra.mxu0 0
  %292 = vmatprep.subr.bf16.mxu0 0
  %293 = vmatpush1.bf16.msra.mxu0 0
  %294 = vmatprep.subr.bf16.mxu0 0
  %295 = vmatpush1.bf16.msra.mxu0 0
  %296 = vmatprep.subr.bf16.mxu0 0
  %297 = vmatpush1.bf16.msra.mxu0 0
  %298 = vmatprep.subr.bf16.mxu0 0
  %299 = vmatpush1.bf16.msra.mxu0 0
  %300 = vmatprep.subr.bf16.mxu0 0
  %301 = vmatpush1.bf16.msra.mxu0 %v282
  %302 = vmatprep.subr.bf16.mxu0 0
  %303 = vmatpush1.bf16.msra.mxu0 %v281
  %304 = vmatprep.subr.bf16.mxu0 0
  %305 = vmatpush2.bf16.msra.mxu0 0
  %306 = vmatprep.subr.bf16.mxu0 0
  %307 = vmatpush2.bf16.msra.mxu0 0
  %308 = vmatprep.subr.bf16.mxu0 0
  %309 = vmatpush2.bf16.msra.mxu0 0
  %310 = vmatprep.subr.bf16.mxu0 0
  %311 = vmatpush2.bf16.msra.mxu0 0
  %312 = vmatprep.subr.bf16.mxu0 0
  %313 = vmatpush2.bf16.msra.mxu0 0
  %314 = vmatprep.subr.bf16.mxu0 0
  %315 = vmatpush2.bf16.msra.mxu0 0
  %316 = vmatprep.subr.bf16.mxu0 0
  %317 = vmatpush2.bf16.msra.mxu0 0
  %318 = vmatprep.subr.bf16.mxu0 0
  %319 = vmatpush2.bf16.msra.mxu0 0
  %320 = vmatprep.mubr.bf16.mxu0 0
  %321 = vmatmul.mubr.bf16.gmra.mxu0 %v286
  %v322 = vpop.f32.mrf.mxu0
  %v323 = vadd.f32 %v272, %v322
  %v324 = vpop.f32.mrf.mxu0
  %v325 = vpop.f32.mrf.mxu0
  %v326 = vadd.f32 %v272, %v325
  %v327 = vpop.f32.mrf.mxu0
  %328 = vdwg.mxu0
  %v329 = vpack.c.bf16 %v265, %v262
  %v338 = vunpack.c.l.b16 %v52
  %v339 = vunpack.c.l.b16 %v53
  %v340 = vunpack.c.l.b16 %v54
  %v341 = vunpack.c.l.b16 %v55
  %v342 = vunpack.c.l.b16 %v56
  %v343 = vunpack.c.l.b16 %v57
  %v344 = vunpack.c.l.b16 %v58
  %v345 = vunpack.c.l.b16 %v59
  %v346 = vpack.c.b16 %v339, %v338
  %v347 = vpack.c.b16 %v341, %v340
  %v348 = vpack.c.b16 %v343, %v342
  %v349 = vpack.c.b16 %v345, %v344
  %v354 = vmul.bf16 %v329, %v346
  %v355 = vmul.bf16 %v329, %v347
  %v356 = vmul.bf16 %v329, %v348
  %v357 = vmul.bf16 %v329, %v349
  %v358 = vpack.c.bf16 %v326, %v323
  %v359 = vmul.bf16 %v358, %v346
  %v360 = vmul.bf16 %v358, %v347
  %v361 = vmul.bf16 %v358, %v348
  %v362 = vmul.bf16 %v358, %v349
  %v363 = vpack.c.bf16 %v204, %v201
  %v365 = vsel %vm85, %v363, 0
  %v368 = vsel %vm85, %v354, 0
  %v371 = vsel %vm85, %v355, 0
  %v374 = vsel %vm85, %v356, 0
  %v377 = vsel %vm85, %v357, 0
  %379 = vmatprep.subr.bf16.mxu0 0
  %380 = vmatpush1.bf16.xpose.msra.mxu0 0
  %381 = vmatprep.subr.bf16.mxu0 0
  %382 = vmatpush1.bf16.xpose.msra.mxu0 0
  %383 = vmatprep.subr.bf16.mxu0 0
  %384 = vmatpush1.bf16.xpose.msra.mxu0 0
  %385 = vmatprep.subr.bf16.mxu0 0
  %386 = vmatpush1.bf16.xpose.msra.mxu0 0
  %387 = vmatprep.subr.bf16.mxu0 0
  %388 = vmatpush1.bf16.xpose.msra.mxu0 %v377
  %389 = vmatprep.subr.bf16.mxu0 0
  %390 = vmatpush1.bf16.xpose.msra.mxu0 %v374
  %391 = vmatprep.subr.bf16.mxu0 0
  %392 = vmatpush1.bf16.xpose.msra.mxu0 %v371
  %393 = vmatprep.subr.bf16.mxu0 0
  %394 = vmatpush1.bf16.xpose.msra.mxu0 %v368
  %395 = vmatprep.subr.bf16.mxu0 0
  %396 = vmatpush2.bf16.xpose.msra.mxu0 0
  %397 = vmatprep.subr.bf16.mxu0 0
  %398 = vmatpush2.bf16.xpose.msra.mxu0 0
  %399 = vmatprep.subr.bf16.mxu0 0
  %400 = vmatpush2.bf16.xpose.msra.mxu0 0
  %401 = vmatprep.subr.bf16.mxu0 0
  %402 = vmatpush2.bf16.xpose.msra.mxu0 0
  %403 = vmatprep.subr.bf16.mxu0 0
  %404 = vmatpush2.bf16.xpose.msra.mxu0 0
  %405 = vmatprep.subr.bf16.mxu0 0
  %406 = vmatpush2.bf16.xpose.msra.mxu0 0
  %407 = vmatprep.subr.bf16.mxu0 0
  %408 = vmatpush2.bf16.xpose.msra.mxu0 0
  %409 = vmatprep.subr.bf16.mxu0 0
  %410 = vmatpush2.bf16.xpose.msra.mxu0 0
  %411 = vmatprep.mubr.bf16.mxu0 0
  %412 = vmatmul.mubr.bf16.gmra.mxu0 %v365
  %v413 = vpop.f32.mrf.mxu0
  %v414 = vadd.f32 %v77, %v413
  %v415 = vpop.f32.mrf.mxu0
  %v416 = vpop.f32.mrf.mxu0
  %v417 = vadd.f32 %v78, %v416
  %v418 = vpop.f32.mrf.mxu0
  %419 = vdwg.mxu0
  %vm420 = vcmask 523264
  %v421 = vsel %vm420, %v414, -inf
  %422 = vmax.xlane.f32.xlu0 %v421
  %v423 = vpop.xlane.xlu0 %422
  %v424 = vsel %vm420, %v417, -inf
  %425 = vmax.xlane.f32.xlu0 %v424
  %v426 = vpop.xlane.xlu0 %425
  %v427 = vsub.f32 %v414, %v423
  %v428 = vsub.f32 %v417, %v426
  %v429 = vmul.f32 %v427, 1.442695
  %v430 = vpow.pop %v429
  %v431 = vmul.f32 %v428, 1.442695
  %v432 = vpow.pop %v431
  %v433 = vpack.c.bf16 %v432, %v430
  %v435 = vsel %vm420, %v433, 0
  %437 = vmatprep.subr.bf16.mxu0 0
  %438 = vmatpush1.bf16.msra.mxu0 0
  %439 = vmatprep.subr.bf16.mxu0 0
  %440 = vmatpush1.bf16.msra.mxu0 0
  %441 = vmatprep.subr.bf16.mxu0 0
  %442 = vmatpush1.bf16.msra.mxu0 0
  %443 = vmatprep.subr.bf16.mxu0 0
  %444 = vmatpush1.bf16.msra.mxu0 0
  %445 = vmatprep.subr.bf16.mxu0 0
  %446 = vmatpush1.bf16.msra.mxu0 %v362
  %447 = vmatprep.subr.bf16.mxu0 0
  %448 = vmatpush1.bf16.msra.mxu0 %v361
  %449 = vmatprep.subr.bf16.mxu0 0
  %450 = vmatpush1.bf16.msra.mxu0 %v360
  %451 = vmatprep.subr.bf16.mxu0 0
  %452 = vmatpush1.bf16.msra.mxu0 %v359
  %453 = vmatprep.subr.bf16.mxu0 0
  %454 = vmatpush2.bf16.msra.mxu0 0
  %455 = vmatprep.subr.bf16.mxu0 0
  %456 = vmatpush2.bf16.msra.mxu0 0
  %457 = vmatprep.subr.bf16.mxu0 0
  %458 = vmatpush2.bf16.msra.mxu0 0
  %459 = vmatprep.subr.bf16.mxu0 0
  %460 = vmatpush2.bf16.msra.mxu0 0
  %461 = vmatprep.subr.bf16.mxu0 0
  %462 = vmatpush2.bf16.msra.mxu0 0
  %463 = vmatprep.subr.bf16.mxu0 0
  %464 = vmatpush2.bf16.msra.mxu0 0
  %465 = vmatprep.subr.bf16.mxu0 0
  %466 = vmatpush2.bf16.msra.mxu0 0
  %467 = vmatprep.subr.bf16.mxu0 0
  %468 = vmatpush2.bf16.msra.mxu0 0
  %469 = vmatprep.mubr.bf16.mxu0 0
  %470 = vmatmul.mubr.bf16.gmra.mxu0 %v435
  %v471 = vpop.f32.mrf.mxu0
  %v472 = vadd.f32 0.0, %v471
  %v473 = vpop.f32.mrf.mxu0
  %v474 = vpop.f32.mrf.mxu0
  %v475 = vadd.f32 0.0, %v474
  %v476 = vpop.f32.mrf.mxu0
  %477 = vdwg.mxu0
  %478 = vmatprep.subr.bf16.mxu0 0
  %479 = vmatpush1.bf16.msra.mxu0 0
  %480 = vmatprep.subr.bf16.mxu0 0
  %481 = vmatpush1.bf16.msra.mxu0 0
  %482 = vmatprep.subr.bf16.mxu0 0
  %483 = vmatpush1.bf16.msra.mxu0 0
  %484 = vmatprep.subr.bf16.mxu0 0
  %485 = vmatpush1.bf16.msra.mxu0 0
  %486 = vmatprep.subr.bf16.mxu0 0
  %487 = vmatpush1.bf16.msra.mxu0 %v349
  %488 = vmatprep.subr.bf16.mxu0 0
  %489 = vmatpush1.bf16.msra.mxu0 %v348
  %490 = vmatprep.subr.bf16.mxu0 0
  %491 = vmatpush1.bf16.msra.mxu0 %v347
  %492 = vmatprep.subr.bf16.mxu0 0
  %493 = vmatpush1.bf16.msra.mxu0 %v346
  %494 = vmatprep.subr.bf16.mxu0 0
  %495 = vmatpush2.bf16.msra.mxu0 0
  %496 = vmatprep.subr.bf16.mxu0 0
  %497 = vmatpush2.bf16.msra.mxu0 0
  %498 = vmatprep.subr.bf16.mxu0 0
  %499 = vmatpush2.bf16.msra.mxu0 0
  %500 = vmatprep.subr.bf16.mxu0 0
  %501 = vmatpush2.bf16.msra.mxu0 0
  %502 = vmatprep.subr.bf16.mxu0 0
  %503 = vmatpush2.bf16.msra.mxu0 0
  %504 = vmatprep.subr.bf16.mxu0 0
  %505 = vmatpush2.bf16.msra.mxu0 0
  %506 = vmatprep.subr.bf16.mxu0 0
  %507 = vmatpush2.bf16.msra.mxu0 0
  %508 = vmatprep.subr.bf16.mxu0 0
  %509 = vmatpush2.bf16.msra.mxu0 0
  %510 = vmatprep.mubr.bf16.mxu0 0
  %511 = vmatmul.mubr.bf16.gmra.mxu0 %v435
  %v512 = vpop.f32.mrf.mxu0
  %v513 = vadd.f32 0.0, %v512
  %v514 = vpop.f32.mrf.mxu0
  %v515 = vpop.f32.mrf.mxu0
  %v516 = vadd.f32 0.0, %v515
  %v517 = vpop.f32.mrf.mxu0
  %518 = vdwg.mxu0
  %v519 = vrcp.pop %v513
  %v520 = vrcp.pop %v516
  %v521 = vmul.f32 %v472, %v519
  %v522 = vmul.f32 %v475, %v520
  %v523 = vpack.c.bf16 %v522, %v521
  %v524 = vlaneseq
  %v525 = vshrl.u32 %v524, 7
  %v526 = vsub.s32 3, %v525
  %v527 = vrot.slane %v82, %v526
  %v532 = vunpack.c.l.b16 %v142
  %v533 = vunpack.c.l.b16 %v143
  %v534 = vunpack.c.l.b16 %v144
  %v535 = vunpack.c.l.b16 %v145
  %v536 = vpack.c.b16 %v533, %v532
  %v537 = vpack.c.b16 %v535, %v534
  %v541 = vsel %vm85, %v523, 0
  %543 = vmatprep.subr.bf16.mxu0 0
  %544 = vmatpush1.bf16.msra.mxu0 0
  %545 = vmatprep.subr.bf16.mxu0 0
  %546 = vmatpush1.bf16.msra.mxu0 0
  %547 = vmatprep.subr.bf16.mxu0 0
  %548 = vmatpush1.bf16.msra.mxu0 0
  %549 = vmatprep.subr.bf16.mxu0 0
  %550 = vmatpush1.bf16.msra.mxu0 0
  %551 = vmatprep.subr.bf16.mxu0 0
  %552 = vmatpush1.bf16.msra.mxu0 0
  %553 = vmatprep.subr.bf16.mxu0 0
  %554 = vmatpush1.bf16.msra.mxu0 0
  %555 = vmatprep.subr.bf16.mxu0 0
  %556 = vmatpush1.bf16.msra.mxu0 %v537
  %557 = vmatprep.subr.bf16.mxu0 0
  %558 = vmatpush1.bf16.msra.mxu0 %v536
  %559 = vmatprep.subr.bf16.mxu0 0
  %560 = vmatpush2.bf16.msra.mxu0 0
  %561 = vmatprep.subr.bf16.mxu0 0
  %562 = vmatpush2.bf16.msra.mxu0 0
  %563 = vmatprep.subr.bf16.mxu0 0
  %564 = vmatpush2.bf16.msra.mxu0 0
  %565 = vmatprep.subr.bf16.mxu0 0
  %566 = vmatpush2.bf16.msra.mxu0 0
  %567 = vmatprep.subr.bf16.mxu0 0
  %568 = vmatpush2.bf16.msra.mxu0 0
  %569 = vmatprep.subr.bf16.mxu0 0
  %570 = vmatpush2.bf16.msra.mxu0 0
  %571 = vmatprep.subr.bf16.mxu0 0
  %572 = vmatpush2.bf16.msra.mxu0 0
  %573 = vmatprep.subr.bf16.mxu0 0
  %574 = vmatpush2.bf16.msra.mxu0 0
  %575 = vmatprep.mubr.bf16.mxu0 0
  %576 = vmatmul.mubr.bf16.gmra.mxu0 %v541
  %v577 = vpop.f32.mrf.mxu0
  %v578 = vadd.f32 %v527, %v577
  %v579 = vpop.f32.mrf.mxu0
  %v580 = vpop.f32.mrf.mxu0
  %v581 = vadd.f32 %v527, %v580
  %v582 = vpop.f32.mrf.mxu0
  %583 = vdwg.mxu0
  %v584 = vadd.f32 %v33, %v578
  %v585 = vadd.f32 %v34, %v581
  %v586 = vsel %vm85, %v584, 0.0
  %587 = vadd.xlane.f32.xlu0 %v586
  %v588 = vpop.xlane.xlu0 %587
  %v589 = vsel %vm85, %v585, 0.0
  %590 = vadd.xlane.f32.xlu0 %v589
  %v591 = vpop.xlane.xlu0 %590
  %v592 = vmul.f32 %v584, %v584
  %v593 = vmul.f32 %v585, %v585
  %v594 = vsel %vm85, %v592, 0.0
  %595 = vadd.xlane.f32.xlu0 %v594
  %v596 = vpop.xlane.xlu0 %595
  %v597 = vsel %vm85, %v593, 0.0
  %598 = vadd.xlane.f32.xlu0 %v597
  %v599 = vpop.xlane.xlu0 %598
  %v600 = vmul.f32 %v588, 0.03125
  %v601 = vmul.f32 %v591, 0.03125
  %v602 = vmul.f32 %v596, 0.03125
  %v603 = vmul.f32 %v599, 0.03125
  %v604 = vmul.f32 %v600, %v600
  %v605 = vmul.f32 %v601, %v601
  %v606 = vsub.f32 %v602, %v604
  %v607 = vsub.f32 %v603, %v605
  %v608 = vsub.f32 %v584, %v600
  %v609 = vsub.f32 %v585, %v601
  %v610 = vadd.f32 %v606, 1e-05
  %v611 = vadd.f32 %v607, 1e-05
  %v612 = vrsqrt.pop %v610
  %v613 = vrsqrt.pop %v611
  %v614 = vmul.f32 %v608, %v612
  %v615 = vmul.f32 %v609, %v613
  %v616 = vlaneseq
  %v617 = vshrl.u32 %v616, 7
  %v618 = vsub.s32 2, %v617
  %v619 = vrot.slane %v83, %v618
  %v620 = vmul.f32 %v614, %v619
  %v621 = vmul.f32 %v615, %v619
  %v622 = vlaneseq
  %v623 = vshrl.u32 %v622, 7
  %v624 = vsub.s32 3, %v623
  %v625 = vrot.slane %v83, %v624
  %v626 = vadd.f32 %v620, %v625
  %v627 = vadd.f32 %v621, %v625
  %v628 = vadd.f32 %v626, %v39
  %v629 = vadd.f32 %v627, %v40
  %s630 = scalar_lea.vmem %s2, 64
  %v631 = vld [vmem:[%s630] sm:$0xf]
  %v632 = vld [vmem:[%s630 + $0x4] sm:$0xf]
  %v633 = vld [vmem:[%s630 + $0x8] sm:$0xf]
  %v634 = vld [vmem:[%s630 + $0xc] sm:$0xf]
  %v635 = vld [vmem:[%s630 + $0x10] sm:$0xf]
  %v636 = vld [vmem:[%s630 + $0x14] sm:$0xf]
  %v637 = vld [vmem:[%s630 + $0x18] sm:$0xf]
  %v638 = vld [vmem:[%s630 + $0x1c] sm:$0xf]
  %v639 = vld [vmem:[%s630 + $0x20] sm:$0xf]
  %v640 = vld [vmem:[%s630 + $0x24] sm:$0xf]
  %v641 = vld [vmem:[%s630 + $0x28] sm:$0xf]
  %v642 = vld [vmem:[%s630 + $0x2c] sm:$0xf]
  %v643 = vld [vmem:[%s630 + $0x30] sm:$0xf]
  %v644 = vld [vmem:[%s630 + $0x34] sm:$0xf]
  %v645 = vld [vmem:[%s630 + $0x38] sm:$0xf]
  %v646 = vld [vmem:[%s630 + $0x3c] sm:$0xf]
  %v647 = vpack.c.bf16 %v629, %v628
  %v648 = vlaneseq
  %v649 = vshrl.u32 %v648, 7
  %v650 = vsub.s32 4, %v649
  %v651 = vrot.slane %v82, %v650
  %v656 = vunpack.c.l.b16 %v631
  %v657 = vunpack.c.l.b16 %v632
  %v658 = vunpack.c.l.b16 %v633
  %v659 = vunpack.c.l.b16 %v634
  %v660 = vpack.c.b16 %v657, %v656
  %v661 = vpack.c.b16 %v659, %v658
  %v665 = vsel %vm85, %v647, 0
  %667 = vmatprep.subr.bf16.mxu0 0
  %668 = vmatpush1.bf16.msra.mxu0 0
  %669 = vmatprep.subr.bf16.mxu0 0
  %670 = vmatpush1.bf16.msra.mxu0 0
  %671 = vmatprep.subr.bf16.mxu0 0
  %672 = vmatpush1.bf16.msra.mxu0 0
  %673 = vmatprep.subr.bf16.mxu0 0
  %674 = vmatpush1.bf16.msra.mxu0 0
  %675 = vmatprep.subr.bf16.mxu0 0
  %676 = vmatpush1.bf16.msra.mxu0 0
  %677 = vmatprep.subr.bf16.mxu0 0
  %678 = vmatpush1.bf16.msra.mxu0 0
  %679 = vmatprep.subr.bf16.mxu0 0
  %680 = vmatpush1.bf16.msra.mxu0 %v661
  %681 = vmatprep.subr.bf16.mxu0 0
  %682 = vmatpush1.bf16.msra.mxu0 %v660
  %683 = vmatprep.subr.bf16.mxu0 0
  %684 = vmatpush2.bf16.msra.mxu0 0
  %685 = vmatprep.subr.bf16.mxu0 0
  %686 = vmatpush2.bf16.msra.mxu0 0
  %687 = vmatprep.subr.bf16.mxu0 0
  %688 = vmatpush2.bf16.msra.mxu0 0
  %689 = vmatprep.subr.bf16.mxu0 0
  %690 = vmatpush2.bf16.msra.mxu0 0
  %691 = vmatprep.subr.bf16.mxu0 0
  %692 = vmatpush2.bf16.msra.mxu0 0
  %693 = vmatprep.subr.bf16.mxu0 0
  %694 = vmatpush2.bf16.msra.mxu0 0
  %695 = vmatprep.subr.bf16.mxu0 0
  %696 = vmatpush2.bf16.msra.mxu0 0
  %697 = vmatprep.subr.bf16.mxu0 0
  %698 = vmatpush2.bf16.msra.mxu0 0
  %699 = vmatprep.mubr.bf16.mxu0 0
  %700 = vmatmul.mubr.bf16.gmra.mxu0 %v665
  %v701 = vpop.f32.mrf.mxu0
  %v702 = vadd.f32 %v651, %v701
  %v703 = vpop.f32.mrf.mxu0
  %v704 = vpop.f32.mrf.mxu0
  %v705 = vadd.f32 %v651, %v704
  %v706 = vpop.f32.mrf.mxu0
  %707 = vdwg.mxu0
  %v708 = vpack.c.bf16 %v47, %v46
  %v709 = vpack.c.bf16 %v49, %v48
  %v710 = vlaneseq
  %v711 = vshrl.u32 %v710, 7
  %v712 = vsub.s32 5, %v711
  %v713 = vrot.slane %v82, %v712
  %v718 = vunpack.c.l.b16 %v635
  %v719 = vunpack.c.l.b16 %v636
  %v720 = vunpack.c.l.b16 %v637
  %v721 = vunpack.c.l.b16 %v638
  %v722 = vpack.c.b16 %v719, %v718
  %v723 = vpack.c.b16 %v721, %v720
  %v727 = vsel %vm85, %v708, 0
  %v730 = vsel %vm85, %v709, 0
  %732 = vmatprep.subr.bf16.mxu0 0
  %733 = vmatpush1.bf16.msra.mxu0 0
  %734 = vmatprep.subr.bf16.mxu0 0
  %735 = vmatpush1.bf16.msra.mxu0 0
  %736 = vmatprep.subr.bf16.mxu0 0
  %737 = vmatpush1.bf16.msra.mxu0 0
  %738 = vmatprep.subr.bf16.mxu0 0
  %739 = vmatpush1.bf16.msra.mxu0 0
  %740 = vmatprep.subr.bf16.mxu0 0
  %741 = vmatpush1.bf16.msra.mxu0 0
  %742 = vmatprep.subr.bf16.mxu0 0
  %743 = vmatpush1.bf16.msra.mxu0 0
  %744 = vmatprep.subr.bf16.mxu0 0
  %745 = vmatpush1.bf16.msra.mxu0 %v723
  %746 = vmatprep.subr.bf16.mxu0 0
  %747 = vmatpush1.bf16.msra.mxu0 %v722
  %748 = vmatprep.subr.bf16.mxu0 0
  %749 = vmatpush2.bf16.msra.mxu0 0
  %750 = vmatprep.subr.bf16.mxu0 0
  %751 = vmatpush2.bf16.msra.mxu0 0
  %752 = vmatprep.subr.bf16.mxu0 0
  %753 = vmatpush2.bf16.msra.mxu0 0
  %754 = vmatprep.subr.bf16.mxu0 0
  %755 = vmatpush2.bf16.msra.mxu0 0
  %756 = vmatprep.subr.bf16.mxu0 0
  %757 = vmatpush2.bf16.msra.mxu0 0
  %758 = vmatprep.subr.bf16.mxu0 0
  %759 = vmatpush2.bf16.msra.mxu0 0
  %760 = vmatprep.subr.bf16.mxu0 0
  %761 = vmatpush2.bf16.msra.mxu0 0
  %762 = vmatprep.subr.bf16.mxu0 0
  %763 = vmatpush2.bf16.msra.mxu0 0
  %764 = vmatprep.mubr.bf16.mxu0 0
  %765 = vmatmul.mubr.bf16.gmra.mxu0 %v727
  %v766 = vpop.f32.mrf.mxu0
  %v767 = vadd.f32 %v713, %v766
  %v768 = vpop.f32.mrf.mxu0
  %v769 = vpop.f32.mrf.mxu0
  %v770 = vadd.f32 %v713, %v769
  %v771 = vpop.f32.mrf.mxu0
  %772 = vmatprep.mubr.bf16.mxu0 0
  %773 = vmatmul.mubr.bf16.gmra.mxu0 %v730
  %v774 = vpop.f32.mrf.mxu0
  %v775 = vadd.f32 %v713, %v774
  %v776 = vpop.f32.mrf.mxu0
  %v777 = vpop.f32.mrf.mxu0
  %v778 = vadd.f32 %v713, %v777
  %v779 = vpop.f32.mrf.mxu0
  %780 = vdwg.mxu0
  %v781 = vpack.c.bf16 %v42, %v41
  %v782 = vpack.c.bf16 %v44, %v43
  %v783 = vlaneseq
  %v784 = vshrl.u32 %v783, 7
  %v785 = vsub.s32 6, %v784
  %v786 = vrot.slane %v82, %v785
  %v791 = vunpack.c.l.b16 %v639
  %v792 = vunpack.c.l.b16 %v640
  %v793 = vunpack.c.l.b16 %v641
  %v794 = vunpack.c.l.b16 %v642
  %v795 = vpack.c.b16 %v792, %v791
  %v796 = vpack.c.b16 %v794, %v793
  %v800 = vsel %vm85, %v781, 0
  %v803 = vsel %vm85, %v782, 0
  %805 = vmatprep.subr.bf16.mxu0 0
  %806 = vmatpush1.bf16.msra.mxu0 0
  %807 = vmatprep.subr.bf16.mxu0 0
  %808 = vmatpush1.bf16.msra.mxu0 0
  %809 = vmatprep.subr.bf16.mxu0 0
  %810 = vmatpush1.bf16.msra.mxu0 0
  %811 = vmatprep.subr.bf16.mxu0 0
  %812 = vmatpush1.bf16.msra.mxu0 0
  %813 = vmatprep.subr.bf16.mxu0 0
  %814 = vmatpush1.bf16.msra.mxu0 0
  %815 = vmatprep.subr.bf16.mxu0 0
  %816 = vmatpush1.bf16.msra.mxu0 0
  %817 = vmatprep.subr.bf16.mxu0 0
  %818 = vmatpush1.bf16.msra.mxu0 %v796
  %819 = vmatprep.subr.bf16.mxu0 0
  %820 = vmatpush1.bf16.msra.mxu0 %v795
  %821 = vmatprep.subr.bf16.mxu0 0
  %822 = vmatpush2.bf16.msra.mxu0 0
  %823 = vmatprep.subr.bf16.mxu0 0
  %824 = vmatpush2.bf16.msra.mxu0 0
  %825 = vmatprep.subr.bf16.mxu0 0
  %826 = vmatpush2.bf16.msra.mxu0 0
  %827 = vmatprep.subr.bf16.mxu0 0
  %828 = vmatpush2.bf16.msra.mxu0 0
  %829 = vmatprep.subr.bf16.mxu0 0
  %830 = vmatpush2.bf16.msra.mxu0 0
  %831 = vmatprep.subr.bf16.mxu0 0
  %832 = vmatpush2.bf16.msra.mxu0 0
  %833 = vmatprep.subr.bf16.mxu0 0
  %834 = vmatpush2.bf16.msra.mxu0 0
  %835 = vmatprep.subr.bf16.mxu0 0
  %836 = vmatpush2.bf16.msra.mxu0 0
  %837 = vmatprep.mubr.bf16.mxu0 0
  %838 = vmatmul.mubr.bf16.gmra.mxu0 %v800
  %v839 = vpop.f32.mrf.mxu0
  %v840 = vadd.f32 %v786, %v839
  %v841 = vpop.f32.mrf.mxu0
  %v842 = vpop.f32.mrf.mxu0
  %v843 = vadd.f32 %v786, %v842
  %v844 = vpop.f32.mrf.mxu0
  %845 = vmatprep.mubr.bf16.mxu0 0
  %846 = vmatmul.mubr.bf16.gmra.mxu0 %v803
  %v847 = vpop.f32.mrf.mxu0
  %v848 = vadd.f32 %v786, %v847
  %v849 = vpop.f32.mrf.mxu0
  %v850 = vpop.f32.mrf.mxu0
  %v851 = vadd.f32 %v786, %v850
  %v852 = vpop.f32.mrf.mxu0
  %853 = vdwg.mxu0
  %v854 = vpack.c.bf16 %v770, %v767
  %v855 = vpack.c.bf16 %v778, %v775
  %v872 = vunpack.c.l.b16 %v61
  %v873 = vunpack.c.l.b16 %v62
  %v874 = vunpack.c.l.b16 %v63
  %v875 = vunpack.c.l.b16 %v64
  %v876 = vunpack.c.l.b16 %v65
  %v877 = vunpack.c.l.b16 %v66
  %v878 = vunpack.c.l.b16 %v67
  %v879 = vunpack.c.l.b16 %v68
  %v880 = vunpack.c.l.b16 %v69
  %v881 = vunpack.c.l.b16 %v70
  %v882 = vunpack.c.l.b16 %v71
  %v883 = vunpack.c.l.b16 %v72
  %v884 = vunpack.c.l.b16 %v73
  %v885 = vunpack.c.l.b16 %v74
  %v886 = vunpack.c.l.b16 %v75
  %v887 = vunpack.c.l.b16 %v76
  %v888 = vpack.c.b16 %v873, %v872
  %v889 = vpack.c.b16 %v875, %v874
  %v890 = vpack.c.b16 %v877, %v876
  %v891 = vpack.c.b16 %v879, %v878
  %v892 = vpack.c.b16 %v881, %v880
  %v893 = vpack.c.b16 %v883, %v882
  %v894 = vpack.c.b16 %v885, %v884
  %v895 = vpack.c.b16 %v887, %v886
  %v904 = vmul.bf16 %v854, %v888
  %v905 = vmul.bf16 %v855, %v889
  %v906 = vmul.bf16 %v854, %v890
  %v907 = vmul.bf16 %v855, %v891
  %v908 = vmul.bf16 %v854, %v892
  %v909 = vmul.bf16 %v855, %v893
  %v910 = vmul.bf16 %v854, %v894
  %v911 = vmul.bf16 %v855, %v895
  %v912 = vpack.c.bf16 %v843, %v840
  %v913 = vpack.c.bf16 %v851, %v848
  %v914 = vmul.bf16 %v912, %v888
  %v915 = vmul.bf16 %v913, %v889
  %v916 = vmul.bf16 %v912, %v890
  %v917 = vmul.bf16 %v913, %v891
  %v918 = vmul.bf16 %v912, %v892
  %v919 = vmul.bf16 %v913, %v893
  %v920 = vmul.bf16 %v912, %v894
  %v921 = vmul.bf16 %v913, %v895
  %v922 = vpack.c.bf16 %v705, %v702
  %v924 = vsel %vm85, %v922, 0
  %v927 = vsel %vm85, %v904, 0
  %v930 = vsel %vm85, %v905, 0
  %v933 = vsel %vm85, %v906, 0
  %v936 = vsel %vm85, %v907, 0
  %v939 = vsel %vm85, %v908, 0
  %v942 = vsel %vm85, %v909, 0
  %v945 = vsel %vm85, %v910, 0
  %v948 = vsel %vm85, %v911, 0
  %950 = vmatprep.subr.bf16.mxu0 0
  %951 = vmatpush1.bf16.xpose.msra.mxu0 %v948
  %952 = vmatprep.subr.bf16.mxu0 0
  %953 = vmatpush1.bf16.xpose.msra.mxu0 %v945
  %954 = vmatprep.subr.bf16.mxu0 0
  %955 = vmatpush1.bf16.xpose.msra.mxu0 %v942
  %956 = vmatprep.subr.bf16.mxu0 0
  %957 = vmatpush1.bf16.xpose.msra.mxu0 %v939
  %958 = vmatprep.subr.bf16.mxu0 0
  %959 = vmatpush1.bf16.xpose.msra.mxu0 %v936
  %960 = vmatprep.subr.bf16.mxu0 0
  %961 = vmatpush1.bf16.xpose.msra.mxu0 %v933
  %962 = vmatprep.subr.bf16.mxu0 0
  %963 = vmatpush1.bf16.xpose.msra.mxu0 %v930
  %964 = vmatprep.subr.bf16.mxu0 0
  %965 = vmatpush1.bf16.xpose.msra.mxu0 %v927
  %966 = vmatprep.subr.bf16.mxu0 0
  %967 = vmatpush2.bf16.xpose.msra.mxu0 0
  %968 = vmatprep.subr.bf16.mxu0 0
  %969 = vmatpush2.bf16.xpose.msra.mxu0 0
  %970 = vmatprep.subr.bf16.mxu0 0
  %971 = vmatpush2.bf16.xpose.msra.mxu0 0
  %972 = vmatprep.subr.bf16.mxu0 0
  %973 = vmatpush2.bf16.xpose.msra.mxu0 0
  %974 = vmatprep.subr.bf16.mxu0 0
  %975 = vmatpush2.bf16.xpose.msra.mxu0 0
  %976 = vmatprep.subr.bf16.mxu0 0
  %977 = vmatpush2.bf16.xpose.msra.mxu0 0
  %978 = vmatprep.subr.bf16.mxu0 0
  %979 = vmatpush2.bf16.xpose.msra.mxu0 0
  %980 = vmatprep.subr.bf16.mxu0 0
  %981 = vmatpush2.bf16.xpose.msra.mxu0 0
  %982 = vmatprep.mubr.bf16.mxu0 0
  %983 = vmatmul.mubr.bf16.gmra.mxu0 %v924
  %v984 = vpop.f32.mrf.mxu0
  %v985 = vadd.f32 %v80, %v984
  %v986 = vpop.f32.mrf.mxu0
  %v987 = vpop.f32.mrf.mxu0
  %v988 = vadd.f32 %v81, %v987
  %v989 = vpop.f32.mrf.mxu0
  %990 = vdwg.mxu0
  %991 = vmax.xlane.f32.xlu0 %v985
  %v992 = vpop.xlane.xlu0 %991
  %993 = vmax.xlane.f32.xlu0 %v988
  %v994 = vpop.xlane.xlu0 %993
  %v995 = vsub.f32 %v985, %v992
  %v996 = vsub.f32 %v988, %v994
  %v997 = vmul.f32 %v995, 1.442695
  %v998 = vpow.pop %v997
  %v999 = vmul.f32 %v996, 1.442695
  %v1000 = vpow.pop %v999
  %v1001 = vpack.c.bf16 %v1000, %v998
  %1002 = vmatprep.subr.bf16.mxu0 0
  %1003 = vmatpush1.bf16.msra.mxu0 %v921
  %1004 = vmatprep.subr.bf16.mxu0 0
  %1005 = vmatpush1.bf16.msra.mxu0 %v920
  %1006 = vmatprep.subr.bf16.mxu0 0
  %1007 = vmatpush1.bf16.msra.mxu0 %v919
  %1008 = vmatprep.subr.bf16.mxu0 0
  %1009 = vmatpush1.bf16.msra.mxu0 %v918
  %1010 = vmatprep.subr.bf16.mxu0 0
  %1011 = vmatpush1.bf16.msra.mxu0 %v917
  %1012 = vmatprep.subr.bf16.mxu0 0
  %1013 = vmatpush1.bf16.msra.mxu0 %v916
  %1014 = vmatprep.subr.bf16.mxu0 0
  %1015 = vmatpush1.bf16.msra.mxu0 %v915
  %1016 = vmatprep.subr.bf16.mxu0 0
  %1017 = vmatpush1.bf16.msra.mxu0 %v914
  %1018 = vmatprep.subr.bf16.mxu0 0
  %1019 = vmatpush2.bf16.msra.mxu0 0
  %1020 = vmatprep.subr.bf16.mxu0 0
  %1021 = vmatpush2.bf16.msra.mxu0 0
  %1022 = vmatprep.subr.bf16.mxu0 0
  %1023 = vmatpush2.bf16.msra.mxu0 0
  %1024 = vmatprep.subr.bf16.mxu0 0
  %1025 = vmatpush2.bf16.msra.mxu0 0
  %1026 = vmatprep.subr.bf16.mxu0 0
  %1027 = vmatpush2.bf16.msra.mxu0 0
  %1028 = vmatprep.subr.bf16.mxu0 0
  %1029 = vmatpush2.bf16.msra.mxu0 0
  %1030 = vmatprep.subr.bf16.mxu0 0
  %1031 = vmatpush2.bf16.msra.mxu0 0
  %1032 = vmatprep.subr.bf16.mxu0 0
  %1033 = vmatpush2.bf16.msra.mxu0 0
  %1034 = vmatprep.mubr.bf16.mxu0 0
  %1035 = vmatmul.mubr.bf16.gmra.mxu0 %v1001
  %v1036 = vpop.f32.mrf.mxu0
  %v1037 = vadd.f32 0.0, %v1036
  %v1038 = vpop.f32.mrf.mxu0
  %v1039 = vpop.f32.mrf.mxu0
  %v1040 = vadd.f32 0.0, %v1039
  %v1041 = vpop.f32.mrf.mxu0
  %1042 = vdwg.mxu0
  %1043 = vmatprep.subr.bf16.mxu0 0
  %1044 = vmatpush1.bf16.msra.mxu0 %v895
  %1045 = vmatprep.subr.bf16.mxu0 0
  %1046 = vmatpush1.bf16.msra.mxu0 %v894
  %1047 = vmatprep.subr.bf16.mxu0 0
  %1048 = vmatpush1.bf16.msra.mxu0 %v893
  %1049 = vmatprep.subr.bf16.mxu0 0
  %1050 = vmatpush1.bf16.msra.mxu0 %v892
  %1051 = vmatprep.subr.bf16.mxu0 0
  %1052 = vmatpush1.bf16.msra.mxu0 %v891
  %1053 = vmatprep.subr.bf16.mxu0 0
  %1054 = vmatpush1.bf16.msra.mxu0 %v890
  %1055 = vmatprep.subr.bf16.mxu0 0
  %1056 = vmatpush1.bf16.msra.mxu0 %v889
  %1057 = vmatprep.subr.bf16.mxu0 0
  %1058 = vmatpush1.bf16.msra.mxu0 %v888
  %1059 = vmatprep.subr.bf16.mxu0 0
  %1060 = vmatpush2.bf16.msra.mxu0 0
  %1061 = vmatprep.subr.bf16.mxu0 0
  %1062 = vmatpush2.bf16.msra.mxu0 0
  %1063 = vmatprep.subr.bf16.mxu0 0
  %1064 = vmatpush2.bf16.msra.mxu0 0
  %1065 = vmatprep.subr.bf16.mxu0 0
  %1066 = vmatpush2.bf16.msra.mxu0 0
  %1067 = vmatprep.subr.bf16.mxu0 0
  %1068 = vmatpush2.bf16.msra.mxu0 0
  %1069 = vmatprep.subr.bf16.mxu0 0
  %1070 = vmatpush2.bf16.msra.mxu0 0
  %1071 = vmatprep.subr.bf16.mxu0 0
  %1072 = vmatpush2.bf16.msra.mxu0 0
  %1073 = vmatprep.subr.bf16.mxu0 0
  %1074 = vmatpush2.bf16.msra.mxu0 0
  %1075 = vmatprep.mubr.bf16.mxu0 0
  %1076 = vmatmul.mubr.bf16.gmra.mxu0 %v1001
  %v1077 = vpop.f32.mrf.mxu0
  %v1078 = vadd.f32 0.0, %v1077
  %v1079 = vpop.f32.mrf.mxu0
  %v1080 = vpop.f32.mrf.mxu0
  %v1081 = vadd.f32 0.0, %v1080
  %v1082 = vpop.f32.mrf.mxu0
  %1083 = vdwg.mxu0
  %v1084 = vrcp.pop %v1078
  %v1085 = vrcp.pop %v1081
  %v1086 = vmul.f32 %v1037, %v1084
  %v1087 = vmul.f32 %v1040, %v1085
  %v1088 = vpack.c.bf16 %v1087, %v1086
  %v1089 = vlaneseq
  %v1090 = vshrl.u32 %v1089, 7
  %v1091 = vsub.s32 7, %v1090
  %v1092 = vrot.slane %v82, %v1091
  %v1097 = vunpack.c.l.b16 %v643
  %v1098 = vunpack.c.l.b16 %v644
  %v1099 = vunpack.c.l.b16 %v645
  %v1100 = vunpack.c.l.b16 %v646
  %v1101 = vpack.c.b16 %v1098, %v1097
  %v1102 = vpack.c.b16 %v1100, %v1099
  %v1106 = vsel %vm85, %v1088, 0
  %1108 = vmatprep.subr.bf16.mxu0 0
  %1109 = vmatpush1.bf16.msra.mxu0 0
  %1110 = vmatprep.subr.bf16.mxu0 0
  %1111 = vmatpush1.bf16.msra.mxu0 0
  %1112 = vmatprep.subr.bf16.mxu0 0
  %1113 = vmatpush1.bf16.msra.mxu0 0
  %1114 = vmatprep.subr.bf16.mxu0 0
  %1115 = vmatpush1.bf16.msra.mxu0 0
  %1116 = vmatprep.subr.bf16.mxu0 0
  %1117 = vmatpush1.bf16.msra.mxu0 0
  %1118 = vmatprep.subr.bf16.mxu0 0
  %1119 = vmatpush1.bf16.msra.mxu0 0
  %1120 = vmatprep.subr.bf16.mxu0 0
  %1121 = vmatpush1.bf16.msra.mxu0 %v1102
  %1122 = vmatprep.subr.bf16.mxu0 0
  %1123 = vmatpush1.bf16.msra.mxu0 %v1101
  %1124 = vmatprep.subr.bf16.mxu0 0
  %1125 = vmatpush2.bf16.msra.mxu0 0
  %1126 = vmatprep.subr.bf16.mxu0 0
  %1127 = vmatpush2.bf16.msra.mxu0 0
  %1128 = vmatprep.subr.bf16.mxu0 0
  %1129 = vmatpush2.bf16.msra.mxu0 0
  %1130 = vmatprep.subr.bf16.mxu0 0
  %1131 = vmatpush2.bf16.msra.mxu0 0
  %1132 = vmatprep.subr.bf16.mxu0 0
  %1133 = vmatpush2.bf16.msra.mxu0 0
  %1134 = vmatprep.subr.bf16.mxu0 0
  %1135 = vmatpush2.bf16.msra.mxu0 0
  %1136 = vmatprep.subr.bf16.mxu0 0
  %1137 = vmatpush2.bf16.msra.mxu0 0
  %1138 = vmatprep.subr.bf16.mxu0 0
  %1139 = vmatpush2.bf16.msra.mxu0 0
  %1140 = vmatprep.mubr.bf16.mxu0 0
  %1141 = vmatmul.mubr.bf16.gmra.mxu0 %v1106
  %v1142 = vpop.f32.mrf.mxu0
  %v1143 = vadd.f32 %v1092, %v1142
  %v1144 = vpop.f32.mrf.mxu0
  %v1145 = vpop.f32.mrf.mxu0
  %v1146 = vadd.f32 %v1092, %v1145
  %v1147 = vpop.f32.mrf.mxu0
  %1148 = vdwg.mxu0
  %v1149 = vadd.f32 %v584, %v1143
  %v1150 = vadd.f32 %v585, %v1146
  %v1151 = vsel %vm85, %v1149, 0.0
  %1152 = vadd.xlane.f32.xlu0 %v1151
  %v1153 = vpop.xlane.xlu0 %1152
  %v1154 = vsel %vm85, %v1150, 0.0
  %1155 = vadd.xlane.f32.xlu0 %v1154
  %v1156 = vpop.xlane.xlu0 %1155
  %v1157 = vmul.f32 %v1149, %v1149
  %v1158 = vmul.f32 %v1150, %v1150
  %v1159 = vsel %vm85, %v1157, 0.0
  %1160 = vadd.xlane.f32.xlu0 %v1159
  %v1161 = vpop.xlane.xlu0 %1160
  %v1162 = vsel %vm85, %v1158, 0.0
  %1163 = vadd.xlane.f32.xlu0 %v1162
  %v1164 = vpop.xlane.xlu0 %1163
  %v1165 = vmul.f32 %v1153, 0.03125
  %v1166 = vmul.f32 %v1156, 0.03125
  %v1167 = vmul.f32 %v1161, 0.03125
  %v1168 = vmul.f32 %v1164, 0.03125
  %v1169 = vmul.f32 %v1165, %v1165
  %v1170 = vmul.f32 %v1166, %v1166
  %v1171 = vsub.f32 %v1167, %v1169
  %v1172 = vsub.f32 %v1168, %v1170
  %v1173 = vsub.f32 %v1149, %v1165
  %v1174 = vsub.f32 %v1150, %v1166
  %v1175 = vadd.f32 %v1171, 1e-05
  %v1176 = vadd.f32 %v1172, 1e-05
  %v1177 = vrsqrt.pop %v1175
  %v1178 = vrsqrt.pop %v1176
  %v1179 = vmul.f32 %v1173, %v1177
  %v1180 = vmul.f32 %v1174, %v1178
  %v1181 = vlaneseq
  %v1182 = vshrl.u32 %v1181, 7
  %v1183 = vsub.s32 4, %v1182
  %v1184 = vrot.slane %v83, %v1183
  %v1185 = vmul.f32 %v1179, %v1184
  %v1186 = vmul.f32 %v1180, %v1184
  %v1187 = vlaneseq
  %v1188 = vshrl.u32 %v1187, 7
  %v1189 = vsub.s32 5, %v1188
  %v1190 = vrot.slane %v83, %v1189
  %v1191 = vadd.f32 %v1185, %v1190
  %v1192 = vadd.f32 %v1186, %v1190
  %v1193 = vpack.c.bf16 %v1192, %v1191
  %v1194 = vld [vmem:[%s3] sm:$0xf]
  %v1195 = vld [vmem:[%s3 + $0x4] sm:$0xf]
  %v1196 = vld [vmem:[%s3 + $0x8] sm:$0xf]
  %v1197 = vld [vmem:[%s3 + $0xc] sm:$0xf]
  %v1198 = vlaneseq
  %v1199 = vshrl.u32 %v1198, 7
  %v1200 = vsub.s32 0, %v1199
  %v1201 = vrot.slane %v84, %v1200
  %v1206 = vunpack.c.l.b16 %v1194
  %v1207 = vunpack.c.l.b16 %v1195
  %v1208 = vunpack.c.l.b16 %v1196
  %v1209 = vunpack.c.l.b16 %v1197
  %v1210 = vpack.c.b16 %v1207, %v1206
  %v1211 = vpack.c.b16 %v1209, %v1208
  %v1215 = vsel %vm85, %v1193, 0
  %1217 = vmatprep.subr.bf16.mxu0 0
  %1218 = vmatpush1.bf16.msra.mxu0 0
  %1219 = vmatprep.subr.bf16.mxu0 0
  %1220 = vmatpush1.bf16.msra.mxu0 0
  %1221 = vmatprep.subr.bf16.mxu0 0
  %1222 = vmatpush1.bf16.msra.mxu0 0
  %1223 = vmatprep.subr.bf16.mxu0 0
  %1224 = vmatpush1.bf16.msra.mxu0 0
  %1225 = vmatprep.subr.bf16.mxu0 0
  %1226 = vmatpush1.bf16.msra.mxu0 0
  %1227 = vmatprep.subr.bf16.mxu0 0
  %1228 = vmatpush1.bf16.msra.mxu0 0
  %1229 = vmatprep.subr.bf16.mxu0 0
  %1230 = vmatpush1.bf16.msra.mxu0 %v1211
  %1231 = vmatprep.subr.bf16.mxu0 0
  %1232 = vmatpush1.bf16.msra.mxu0 %v1210
  %1233 = vmatprep.subr.bf16.mxu0 0
  %1234 = vmatpush2.bf16.msra.mxu0 0
  %1235 = vmatprep.subr.bf16.mxu0 0
  %1236 = vmatpush2.bf16.msra.mxu0 0
  %1237 = vmatprep.subr.bf16.mxu0 0
  %1238 = vmatpush2.bf16.msra.mxu0 0
  %1239 = vmatprep.subr.bf16.mxu0 0
  %1240 = vmatpush2.bf16.msra.mxu0 0
  %1241 = vmatprep.subr.bf16.mxu0 0
  %1242 = vmatpush2.bf16.msra.mxu0 0
  %1243 = vmatprep.subr.bf16.mxu0 0
  %1244 = vmatpush2.bf16.msra.mxu0 0
  %1245 = vmatprep.subr.bf16.mxu0 0
  %1246 = vmatpush2.bf16.msra.mxu0 0
  %1247 = vmatprep.subr.bf16.mxu0 0
  %1248 = vmatpush2.bf16.msra.mxu0 0
  %1249 = vmatprep.mubr.bf16.mxu0 0
  %1250 = vmatmul.mubr.bf16.gmra.mxu0 %v1215
  %v1251 = vpop.f32.mrf.mxu0
  %v1252 = vadd.f32 %v1201, %v1251
  %v1253 = vpop.f32.mrf.mxu0
  %v1254 = vpop.f32.mrf.mxu0
  %v1255 = vadd.f32 %v1201, %v1254
  %v1256 = vpop.f32.mrf.mxu0
  %1257 = vdwg.mxu0
  %v1258 = vmax.f32 %v1252, 0.0
  %v1259 = vmax.f32 %v1255, 0.0
  %v1260 = vpack.c.bf16 %v1259, %v1258
  %v1261 = vld [vmem:[%s4] sm:$0xf]
  %v1262 = vld [vmem:[%s4 + $0x4] sm:$0xf]
  %v1263 = vld [vmem:[%s4 + $0x8] sm:$0xf]
  %v1264 = vld [vmem:[%s4 + $0xc] sm:$0xf]
  %v1265 = vld [vmem:[%s4 + $0x10] sm:$0xf]
  %v1266 = vld [vmem:[%s4 + $0x14] sm:$0xf]
  %v1267 = vld [vmem:[%s4 + $0x18] sm:$0xf]
  %v1268 = vld [vmem:[%s4 + $0x1c] sm:$0xf]
  %v1269 = vld [vmem:[%s4 + $0x20] sm:$0xf]
  %v1270 = vld [vmem:[%s4 + $0x24] sm:$0xf]
  %v1271 = vld [vmem:[%s4 + $0x28] sm:$0xf]
  %v1272 = vld [vmem:[%s4 + $0x2c] sm:$0xf]
  %v1273 = vld [vmem:[%s4 + $0x30] sm:$0xf]
  %v1274 = vld [vmem:[%s4 + $0x34] sm:$0xf]
  %v1275 = vld [vmem:[%s4 + $0x38] sm:$0xf]
  %v1276 = vld [vmem:[%s4 + $0x3c] sm:$0xf]
  %v1293 = vunpack.c.l.b16 %v1261
  %v1294 = vunpack.c.l.b16 %v1262
  %v1295 = vunpack.c.l.b16 %v1263
  %v1296 = vunpack.c.l.b16 %v1264
  %v1297 = vunpack.c.l.b16 %v1265
  %v1298 = vunpack.c.l.b16 %v1266
  %v1299 = vunpack.c.l.b16 %v1267
  %v1300 = vunpack.c.l.b16 %v1268
  %v1301 = vunpack.c.l.b16 %v1269
  %v1302 = vunpack.c.l.b16 %v1270
  %v1303 = vunpack.c.l.b16 %v1271
  %v1304 = vunpack.c.l.b16 %v1272
  %v1305 = vunpack.c.l.b16 %v1273
  %v1306 = vunpack.c.l.b16 %v1274
  %v1307 = vunpack.c.l.b16 %v1275
  %v1308 = vunpack.c.l.b16 %v1276
  %v1309 = vpack.c.b16 %v1294, %v1293
  %v1310 = vpack.c.b16 %v1296, %v1295
  %v1311 = vpack.c.b16 %v1298, %v1297
  %v1312 = vpack.c.b16 %v1300, %v1299
  %v1313 = vpack.c.b16 %v1302, %v1301
  %v1314 = vpack.c.b16 %v1304, %v1303
  %v1315 = vpack.c.b16 %v1306, %v1305
  %v1316 = vpack.c.b16 %v1308, %v1307
  %1325 = vmatprep.subr.bf16.mxu0 0
  %1326 = vmatpush1.bf16.msra.mxu0 %v1316
  %1327 = vmatprep.subr.bf16.mxu0 0
  %1328 = vmatpush1.bf16.msra.mxu0 %v1315
  %1329 = vmatprep.subr.bf16.mxu0 0
  %1330 = vmatpush1.bf16.msra.mxu0 %v1314
  %1331 = vmatprep.subr.bf16.mxu0 0
  %1332 = vmatpush1.bf16.msra.mxu0 %v1313
  %1333 = vmatprep.subr.bf16.mxu0 0
  %1334 = vmatpush1.bf16.msra.mxu0 %v1312
  %1335 = vmatprep.subr.bf16.mxu0 0
  %1336 = vmatpush1.bf16.msra.mxu0 %v1311
  %1337 = vmatprep.subr.bf16.mxu0 0
  %1338 = vmatpush1.bf16.msra.mxu0 %v1310
  %1339 = vmatprep.subr.bf16.mxu0 0
  %1340 = vmatpush1.bf16.msra.mxu0 %v1309
  %1341 = vmatprep.subr.bf16.mxu0 0
  %1342 = vmatpush2.bf16.msra.mxu0 0
  %1343 = vmatprep.subr.bf16.mxu0 0
  %1344 = vmatpush2.bf16.msra.mxu0 0
  %1345 = vmatprep.subr.bf16.mxu0 0
  %1346 = vmatpush2.bf16.msra.mxu0 0
  %1347 = vmatprep.subr.bf16.mxu0 0
  %1348 = vmatpush2.bf16.msra.mxu0 0
  %1349 = vmatprep.subr.bf16.mxu0 0
  %1350 = vmatpush2.bf16.msra.mxu0 0
  %1351 = vmatprep.subr.bf16.mxu0 0
  %1352 = vmatpush2.bf16.msra.mxu0 0
  %1353 = vmatprep.subr.bf16.mxu0 0
  %1354 = vmatpush2.bf16.msra.mxu0 0
  %1355 = vmatprep.subr.bf16.mxu0 0
  %1356 = vmatpush2.bf16.msra.mxu0 0
  %1357 = vmatprep.mubr.bf16.mxu0 0
  %1358 = vmatmul.mubr.bf16.gmra.mxu0 %v1260
  %v1359 = vpop.f32.mrf.mxu0
  %v1360 = vadd.f32 0.0, %v1359
  %v1361 = vpop.f32.mrf.mxu0
  %v1362 = vpop.f32.mrf.mxu0
  %v1363 = vadd.f32 0.0, %v1362
  %v1364 = vpop.f32.mrf.mxu0
  %1365 = vdwg.mxu0
  %v1366 = vadd.f32 %v1149, %v1360
  %v1367 = vadd.f32 %v1150, %v1363
  %v1368 = vlaneseq
  %v1369 = vshrl.u32 %v1368, 7
  %v1370 = vsub.s32 1, %v1369
  %v1371 = vrot.slane %v84, %v1370
  %v1372 = vadd.f32 %v1366, %v1371
  %v1373 = vadd.f32 %v1367, %v1371
  %v1374 = vsel %vm85, %v1372, 0.0
  %1375 = vadd.xlane.f32.xlu0 %v1374
  %v1376 = vpop.xlane.xlu0 %1375
  %v1377 = vsel %vm85, %v1373, 0.0
  %1378 = vadd.xlane.f32.xlu0 %v1377
  %v1379 = vpop.xlane.xlu0 %1378
  %v1380 = vmul.f32 %v1372, %v1372
  %v1381 = vmul.f32 %v1373, %v1373
  %v1382 = vsel %vm85, %v1380, 0.0
  %1383 = vadd.xlane.f32.xlu0 %v1382
  %v1384 = vpop.xlane.xlu0 %1383
  %v1385 = vsel %vm85, %v1381, 0.0
  %1386 = vadd.xlane.f32.xlu0 %v1385
  %v1387 = vpop.xlane.xlu0 %1386
  %v1388 = vmul.f32 %v1376, 0.03125
  %v1389 = vmul.f32 %v1379, 0.03125
  %v1390 = vmul.f32 %v1384, 0.03125
  %v1391 = vmul.f32 %v1387, 0.03125
  %v1392 = vmul.f32 %v1388, %v1388
  %v1393 = vmul.f32 %v1389, %v1389
  %v1394 = vsub.f32 %v1390, %v1392
  %v1395 = vsub.f32 %v1391, %v1393
  %v1396 = vsub.f32 %v1372, %v1388
  %v1397 = vsub.f32 %v1373, %v1389
  %v1398 = vadd.f32 %v1394, 1e-05
  %v1399 = vadd.f32 %v1395, 1e-05
  %v1400 = vrsqrt.pop %v1398
  %v1401 = vrsqrt.pop %v1399
  %v1402 = vmul.f32 %v1396, %v1400
  %v1403 = vmul.f32 %v1397, %v1401
  %v1404 = vlaneseq
  %v1405 = vshrl.u32 %v1404, 7
  %v1406 = vsub.s32 6, %v1405
  %v1407 = vrot.slane %v83, %v1406
  %v1408 = vmul.f32 %v1402, %v1407
  %v1409 = vmul.f32 %v1403, %v1407
  %v1410 = vlaneseq
  %v1411 = vshrl.u32 %v1410, 7
  %v1412 = vsub.s32 7, %v1411
  %v1413 = vrot.slane %v83, %v1412
  %v1414 = vadd.f32 %v1408, %v1413
  %v1415 = vadd.f32 %v1409, %v1413
  %s1416 = scalar_lea.vmem %s5, 16
  %v1417 = vld [vmem:[%s1416] sm:$0xff]
  %v1418 = vld [vmem:[%s1416 + $0x8] sm:$0xff]
  %s1419 = scalar_lea.vmem %s6, 2
  %v1420 = vld [vmem:[%s1419] sm:$0x3]
  %v1421 = vlaneseq
  %v1422 = vshrl.u32 %v1421, 7
  %v1423 = vsub.s32 0, %v1422
  %v1424 = vrot.slane %v1418, %v1423
  %v1425 = vmul.f32 %v1402, %v1424
  %v1426 = vmul.f32 %v1403, %v1424
  %v1427 = vlaneseq
  %v1428 = vshrl.u32 %v1427, 7
  %v1429 = vsub.s32 1, %v1428
  %v1430 = vrot.slane %v1418, %v1429
  %v1431 = vadd.f32 %v1425, %v1430
  %v1432 = vadd.f32 %v1426, %v1430
  %v1433 = vadd.f32 %v1431, %v39
  %v1434 = vadd.f32 %v1432, %v40
  %s1435 = scalar_lea.vmem %s2, 128
  %v1436 = vld [vmem:[%s1435] sm:$0xf]
  %v1437 = vld [vmem:[%s1435 + $0x4] sm:$0xf]
  %v1438 = vld [vmem:[%s1435 + $0x8] sm:$0xf]
  %v1439 = vld [vmem:[%s1435 + $0xc] sm:$0xf]
  %v1440 = vld [vmem:[%s1435 + $0x10] sm:$0xf]
  %v1441 = vld [vmem:[%s1435 + $0x14] sm:$0xf]
  %v1442 = vld [vmem:[%s1435 + $0x18] sm:$0xf]
  %v1443 = vld [vmem:[%s1435 + $0x1c] sm:$0xf]
  %v1444 = vld [vmem:[%s1435 + $0x20] sm:$0xf]
  %v1445 = vld [vmem:[%s1435 + $0x24] sm:$0xf]
  %v1446 = vld [vmem:[%s1435 + $0x28] sm:$0xf]
  %v1447 = vld [vmem:[%s1435 + $0x2c] sm:$0xf]
  %v1448 = vld [vmem:[%s1435 + $0x30] sm:$0xf]
  %v1449 = vld [vmem:[%s1435 + $0x34] sm:$0xf]
  %v1450 = vld [vmem:[%s1435 + $0x38] sm:$0xf]
  %v1451 = vld [vmem:[%s1435 + $0x3c] sm:$0xf]
  %v1452 = vpack.c.bf16 %v1434, %v1433
  %v1453 = vlaneseq
  %v1454 = vshrl.u32 %v1453, 7
  %v1455 = vsub.s32 0, %v1454
  %v1456 = vrot.slane %v1417, %v1455
  %v1461 = vunpack.c.l.b16 %v1436
  %v1462 = vunpack.c.l.b16 %v1437
  %v1463 = vunpack.c.l.b16 %v1438
  %v1464 = vunpack.c.l.b16 %v1439
  %v1465 = vpack.c.b16 %v1462, %v1461
  %v1466 = vpack.c.b16 %v1464, %v1463
  %v1470 = vsel %vm85, %v1452, 0
  %1472 = vmatprep.subr.bf16.mxu0 0
  %1473 = vmatpush1.bf16.msra.mxu0 0
  %1474 = vmatprep.subr.bf16.mxu0 0
  %1475 = vmatpush1.bf16.msra.mxu0 0
  %1476 = vmatprep.subr.bf16.mxu0 0
  %1477 = vmatpush1.bf16.msra.mxu0 0
  %1478 = vmatprep.subr.bf16.mxu0 0
  %1479 = vmatpush1.bf16.msra.mxu0 0
  %1480 = vmatprep.subr.bf16.mxu0 0
  %1481 = vmatpush1.bf16.msra.mxu0 0
  %1482 = vmatprep.subr.bf16.mxu0 0
  %1483 = vmatpush1.bf16.msra.mxu0 0
  %1484 = vmatprep.subr.bf16.mxu0 0
  %1485 = vmatpush1.bf16.msra.mxu0 %v1466
  %1486 = vmatprep.subr.bf16.mxu0 0
  %1487 = vmatpush1.bf16.msra.mxu0 %v1465
  %1488 = vmatprep.subr.bf16.mxu0 0
  %1489 = vmatpush2.bf16.msra.mxu0 0
  %1490 = vmatprep.subr.bf16.mxu0 0
  %1491 = vmatpush2.bf16.msra.mxu0 0
  %1492 = vmatprep.subr.bf16.mxu0 0
  %1493 = vmatpush2.bf16.msra.mxu0 0
  %1494 = vmatprep.subr.bf16.mxu0 0
  %1495 = vmatpush2.bf16.msra.mxu0 0
  %1496 = vmatprep.subr.bf16.mxu0 0
  %1497 = vmatpush2.bf16.msra.mxu0 0
  %1498 = vmatprep.subr.bf16.mxu0 0
  %1499 = vmatpush2.bf16.msra.mxu0 0
  %1500 = vmatprep.subr.bf16.mxu0 0
  %1501 = vmatpush2.bf16.msra.mxu0 0
  %1502 = vmatprep.subr.bf16.mxu0 0
  %1503 = vmatpush2.bf16.msra.mxu0 0
  %1504 = vmatprep.mubr.bf16.mxu0 0
  %1505 = vmatmul.mubr.bf16.gmra.mxu0 %v1470
  %v1506 = vpop.f32.mrf.mxu0
  %v1507 = vadd.f32 %v1456, %v1506
  %v1508 = vpop.f32.mrf.mxu0
  %v1509 = vpop.f32.mrf.mxu0
  %v1510 = vadd.f32 %v1456, %v1509
  %v1511 = vpop.f32.mrf.mxu0
  %1512 = vdwg.mxu0
  %v1513 = vlaneseq
  %v1514 = vshrl.u32 %v1513, 7
  %v1515 = vsub.s32 1, %v1514
  %v1516 = vrot.slane %v1417, %v1515
  %v1521 = vunpack.c.l.b16 %v1440
  %v1522 = vunpack.c.l.b16 %v1441
  %v1523 = vunpack.c.l.b16 %v1442
  %v1524 = vunpack.c.l.b16 %v1443
  %v1525 = vpack.c.b16 %v1522, %v1521
  %v1526 = vpack.c.b16 %v1524, %v1523
  %1529 = vmatprep.subr.bf16.mxu0 0
  %1530 = vmatpush1.bf16.msra.mxu0 0
  %1531 = vmatprep.subr.bf16.mxu0 0
  %1532 = vmatpush1.bf16.msra.mxu0 0
  %1533 = vmatprep.subr.bf16.mxu0 0
  %1534 = vmatpush1.bf16.msra.mxu0 0
  %1535 = vmatprep.subr.bf16.mxu0 0
  %1536 = vmatpush1.bf16.msra.mxu0 0
  %1537 = vmatprep.subr.bf16.mxu0 0
  %1538 = vmatpush1.bf16.msra.mxu0 0
  %1539 = vmatprep.subr.bf16.mxu0 0
  %1540 = vmatpush1.bf16.msra.mxu0 0
  %1541 = vmatprep.subr.bf16.mxu0 0
  %1542 = vmatpush1.bf16.msra.mxu0 %v1526
  %1543 = vmatprep.subr.bf16.mxu0 0
  %1544 = vmatpush1.bf16.msra.mxu0 %v1525
  %1545 = vmatprep.subr.bf16.mxu0 0
  %1546 = vmatpush2.bf16.msra.mxu0 0
  %1547 = vmatprep.subr.bf16.mxu0 0
  %1548 = vmatpush2.bf16.msra.mxu0 0
  %1549 = vmatprep.subr.bf16.mxu0 0
  %1550 = vmatpush2.bf16.msra.mxu0 0
  %1551 = vmatprep.subr.bf16.mxu0 0
  %1552 = vmatpush2.bf16.msra.mxu0 0
  %1553 = vmatprep.subr.bf16.mxu0 0
  %1554 = vmatpush2.bf16.msra.mxu0 0
  %1555 = vmatprep.subr.bf16.mxu0 0
  %1556 = vmatpush2.bf16.msra.mxu0 0
  %1557 = vmatprep.subr.bf16.mxu0 0
  %1558 = vmatpush2.bf16.msra.mxu0 0
  %1559 = vmatprep.subr.bf16.mxu0 0
  %1560 = vmatpush2.bf16.msra.mxu0 0
  %1561 = vmatprep.mubr.bf16.mxu0 0
  %1562 = vmatmul.mubr.bf16.gmra.mxu0 %v225
  %v1563 = vpop.f32.mrf.mxu0
  %v1564 = vadd.f32 %v1516, %v1563
  %v1565 = vpop.f32.mrf.mxu0
  %v1566 = vpop.f32.mrf.mxu0
  %v1567 = vadd.f32 %v1516, %v1566
  %v1568 = vpop.f32.mrf.mxu0
  %1569 = vdwg.mxu0
  %v1570 = vlaneseq
  %v1571 = vshrl.u32 %v1570, 7
  %v1572 = vsub.s32 2, %v1571
  %v1573 = vrot.slane %v1417, %v1572
  %v1578 = vunpack.c.l.b16 %v1444
  %v1579 = vunpack.c.l.b16 %v1445
  %v1580 = vunpack.c.l.b16 %v1446
  %v1581 = vunpack.c.l.b16 %v1447
  %v1582 = vpack.c.b16 %v1579, %v1578
  %v1583 = vpack.c.b16 %v1581, %v1580
  %1586 = vmatprep.subr.bf16.mxu0 0
  %1587 = vmatpush1.bf16.msra.mxu0 0
  %1588 = vmatprep.subr.bf16.mxu0 0
  %1589 = vmatpush1.bf16.msra.mxu0 0
  %1590 = vmatprep.subr.bf16.mxu0 0
  %1591 = vmatpush1.bf16.msra.mxu0 0
  %1592 = vmatprep.subr.bf16.mxu0 0
  %1593 = vmatpush1.bf16.msra.mxu0 0
  %1594 = vmatprep.subr.bf16.mxu0 0
  %1595 = vmatpush1.bf16.msra.mxu0 0
  %1596 = vmatprep.subr.bf16.mxu0 0
  %1597 = vmatpush1.bf16.msra.mxu0 0
  %1598 = vmatprep.subr.bf16.mxu0 0
  %1599 = vmatpush1.bf16.msra.mxu0 %v1583
  %1600 = vmatprep.subr.bf16.mxu0 0
  %1601 = vmatpush1.bf16.msra.mxu0 %v1582
  %1602 = vmatprep.subr.bf16.mxu0 0
  %1603 = vmatpush2.bf16.msra.mxu0 0
  %1604 = vmatprep.subr.bf16.mxu0 0
  %1605 = vmatpush2.bf16.msra.mxu0 0
  %1606 = vmatprep.subr.bf16.mxu0 0
  %1607 = vmatpush2.bf16.msra.mxu0 0
  %1608 = vmatprep.subr.bf16.mxu0 0
  %1609 = vmatpush2.bf16.msra.mxu0 0
  %1610 = vmatprep.subr.bf16.mxu0 0
  %1611 = vmatpush2.bf16.msra.mxu0 0
  %1612 = vmatprep.subr.bf16.mxu0 0
  %1613 = vmatpush2.bf16.msra.mxu0 0
  %1614 = vmatprep.subr.bf16.mxu0 0
  %1615 = vmatpush2.bf16.msra.mxu0 0
  %1616 = vmatprep.subr.bf16.mxu0 0
  %1617 = vmatpush2.bf16.msra.mxu0 0
  %1618 = vmatprep.mubr.bf16.mxu0 0
  %1619 = vmatmul.mubr.bf16.gmra.mxu0 %v286
  %v1620 = vpop.f32.mrf.mxu0
  %v1621 = vadd.f32 %v1573, %v1620
  %v1622 = vpop.f32.mrf.mxu0
  %v1623 = vpop.f32.mrf.mxu0
  %v1624 = vadd.f32 %v1573, %v1623
  %v1625 = vpop.f32.mrf.mxu0
  %1626 = vdwg.mxu0
  %v1627 = vpack.c.bf16 %v1567, %v1564
  %v1628 = vmul.bf16 %v1627, %v346
  %v1629 = vmul.bf16 %v1627, %v347
  %v1630 = vmul.bf16 %v1627, %v348
  %v1631 = vmul.bf16 %v1627, %v349
  %v1632 = vpack.c.bf16 %v1624, %v1621
  %v1633 = vmul.bf16 %v1632, %v346
  %v1634 = vmul.bf16 %v1632, %v347
  %v1635 = vmul.bf16 %v1632, %v348
  %v1636 = vmul.bf16 %v1632, %v349
  %v1637 = vpack.c.bf16 %v1510, %v1507
  %v1639 = vsel %vm85, %v1637, 0
  %v1642 = vsel %vm85, %v1628, 0
  %v1645 = vsel %vm85, %v1629, 0
  %v1648 = vsel %vm85, %v1630, 0
  %v1651 = vsel %vm85, %v1631, 0
  %1653 = vmatprep.subr.bf16.mxu0 0
  %1654 = vmatpush1.bf16.xpose.msra.mxu0 0
  %1655 = vmatprep.subr.bf16.mxu0 0
  %1656 = vmatpush1.bf16.xpose.msra.mxu0 0
  %1657 = vmatprep.subr.bf16.mxu0 0
  %1658 = vmatpush1.bf16.xpose.msra.mxu0 0
  %1659 = vmatprep.subr.bf16.mxu0 0
  %1660 = vmatpush1.bf16.xpose.msra.mxu0 0
  %1661 = vmatprep.subr.bf16.mxu0 0
  %1662 = vmatpush1.bf16.xpose.msra.mxu0 %v1651
  %1663 = vmatprep.subr.bf16.mxu0 0
  %1664 = vmatpush1.bf16.xpose.msra.mxu0 %v1648
  %1665 = vmatprep.subr.bf16.mxu0 0
  %1666 = vmatpush1.bf16.xpose.msra.mxu0 %v1645
  %1667 = vmatprep.subr.bf16.mxu0 0
  %1668 = vmatpush1.bf16.xpose.msra.mxu0 %v1642
  %1669 = vmatprep.subr.bf16.mxu0 0
  %1670 = vmatpush2.bf16.xpose.msra.mxu0 0
  %1671 = vmatprep.subr.bf16.mxu0 0
  %1672 = vmatpush2.bf16.xpose.msra.mxu0 0
  %1673 = vmatprep.subr.bf16.mxu0 0
  %1674 = vmatpush2.bf16.xpose.msra.mxu0 0
  %1675 = vmatprep.subr.bf16.mxu0 0
  %1676 = vmatpush2.bf16.xpose.msra.mxu0 0
  %1677 = vmatprep.subr.bf16.mxu0 0
  %1678 = vmatpush2.bf16.xpose.msra.mxu0 0
  %1679 = vmatprep.subr.bf16.mxu0 0
  %1680 = vmatpush2.bf16.xpose.msra.mxu0 0
  %1681 = vmatprep.subr.bf16.mxu0 0
  %1682 = vmatpush2.bf16.xpose.msra.mxu0 0
  %1683 = vmatprep.subr.bf16.mxu0 0
  %1684 = vmatpush2.bf16.xpose.msra.mxu0 0
  %1685 = vmatprep.mubr.bf16.mxu0 0
  %1686 = vmatmul.mubr.bf16.gmra.mxu0 %v1639
  %v1687 = vpop.f32.mrf.mxu0
  %v1688 = vadd.f32 %v77, %v1687
  %v1689 = vpop.f32.mrf.mxu0
  %v1690 = vpop.f32.mrf.mxu0
  %v1691 = vadd.f32 %v78, %v1690
  %v1692 = vpop.f32.mrf.mxu0
  %1693 = vdwg.mxu0
  %v1694 = vsel %vm420, %v1688, -inf
  %1695 = vmax.xlane.f32.xlu0 %v1694
  %v1696 = vpop.xlane.xlu0 %1695
  %v1697 = vsel %vm420, %v1691, -inf
  %1698 = vmax.xlane.f32.xlu0 %v1697
  %v1699 = vpop.xlane.xlu0 %1698
  %v1700 = vsub.f32 %v1688, %v1696
  %v1701 = vsub.f32 %v1691, %v1699
  %v1702 = vmul.f32 %v1700, 1.442695
  %v1703 = vpow.pop %v1702
  %v1704 = vmul.f32 %v1701, 1.442695
  %v1705 = vpow.pop %v1704
  %v1706 = vpack.c.bf16 %v1705, %v1703
  %v1708 = vsel %vm420, %v1706, 0
  %1710 = vmatprep.subr.bf16.mxu0 0
  %1711 = vmatpush1.bf16.msra.mxu0 0
  %1712 = vmatprep.subr.bf16.mxu0 0
  %1713 = vmatpush1.bf16.msra.mxu0 0
  %1714 = vmatprep.subr.bf16.mxu0 0
  %1715 = vmatpush1.bf16.msra.mxu0 0
  %1716 = vmatprep.subr.bf16.mxu0 0
  %1717 = vmatpush1.bf16.msra.mxu0 0
  %1718 = vmatprep.subr.bf16.mxu0 0
  %1719 = vmatpush1.bf16.msra.mxu0 %v1636
  %1720 = vmatprep.subr.bf16.mxu0 0
  %1721 = vmatpush1.bf16.msra.mxu0 %v1635
  %1722 = vmatprep.subr.bf16.mxu0 0
  %1723 = vmatpush1.bf16.msra.mxu0 %v1634
  %1724 = vmatprep.subr.bf16.mxu0 0
  %1725 = vmatpush1.bf16.msra.mxu0 %v1633
  %1726 = vmatprep.subr.bf16.mxu0 0
  %1727 = vmatpush2.bf16.msra.mxu0 0
  %1728 = vmatprep.subr.bf16.mxu0 0
  %1729 = vmatpush2.bf16.msra.mxu0 0
  %1730 = vmatprep.subr.bf16.mxu0 0
  %1731 = vmatpush2.bf16.msra.mxu0 0
  %1732 = vmatprep.subr.bf16.mxu0 0
  %1733 = vmatpush2.bf16.msra.mxu0 0
  %1734 = vmatprep.subr.bf16.mxu0 0
  %1735 = vmatpush2.bf16.msra.mxu0 0
  %1736 = vmatprep.subr.bf16.mxu0 0
  %1737 = vmatpush2.bf16.msra.mxu0 0
  %1738 = vmatprep.subr.bf16.mxu0 0
  %1739 = vmatpush2.bf16.msra.mxu0 0
  %1740 = vmatprep.subr.bf16.mxu0 0
  %1741 = vmatpush2.bf16.msra.mxu0 0
  %1742 = vmatprep.mubr.bf16.mxu0 0
  %1743 = vmatmul.mubr.bf16.gmra.mxu0 %v1708
  %v1744 = vpop.f32.mrf.mxu0
  %v1745 = vadd.f32 0.0, %v1744
  %v1746 = vpop.f32.mrf.mxu0
  %v1747 = vpop.f32.mrf.mxu0
  %v1748 = vadd.f32 0.0, %v1747
  %v1749 = vpop.f32.mrf.mxu0
  %1750 = vdwg.mxu0
  %1751 = vmatprep.subr.bf16.mxu0 0
  %1752 = vmatpush1.bf16.msra.mxu0 0
  %1753 = vmatprep.subr.bf16.mxu0 0
  %1754 = vmatpush1.bf16.msra.mxu0 0
  %1755 = vmatprep.subr.bf16.mxu0 0
  %1756 = vmatpush1.bf16.msra.mxu0 0
  %1757 = vmatprep.subr.bf16.mxu0 0
  %1758 = vmatpush1.bf16.msra.mxu0 0
  %1759 = vmatprep.subr.bf16.mxu0 0
  %1760 = vmatpush1.bf16.msra.mxu0 %v349
  %1761 = vmatprep.subr.bf16.mxu0 0
  %1762 = vmatpush1.bf16.msra.mxu0 %v348
  %1763 = vmatprep.subr.bf16.mxu0 0
  %1764 = vmatpush1.bf16.msra.mxu0 %v347
  %1765 = vmatprep.subr.bf16.mxu0 0
  %1766 = vmatpush1.bf16.msra.mxu0 %v346
  %1767 = vmatprep.subr.bf16.mxu0 0
  %1768 = vmatpush2.bf16.msra.mxu0 0
  %1769 = vmatprep.subr.bf16.mxu0 0
  %1770 = vmatpush2.bf16.msra.mxu0 0
  %1771 = vmatprep.subr.bf16.mxu0 0
  %1772 = vmatpush2.bf16.msra.mxu0 0
  %1773 = vmatprep.subr.bf16.mxu0 0
  %1774 = vmatpush2.bf16.msra.mxu0 0
  %1775 = vmatprep.subr.bf16.mxu0 0
  %1776 = vmatpush2.bf16.msra.mxu0 0
  %1777 = vmatprep.subr.bf16.mxu0 0
  %1778 = vmatpush2.bf16.msra.mxu0 0
  %1779 = vmatprep.subr.bf16.mxu0 0
  %1780 = vmatpush2.bf16.msra.mxu0 0
  %1781 = vmatprep.subr.bf16.mxu0 0
  %1782 = vmatpush2.bf16.msra.mxu0 0
  %1783 = vmatprep.mubr.bf16.mxu0 0
  %1784 = vmatmul.mubr.bf16.gmra.mxu0 %v1708
  %v1785 = vpop.f32.mrf.mxu0
  %v1786 = vadd.f32 0.0, %v1785
  %v1787 = vpop.f32.mrf.mxu0
  %v1788 = vpop.f32.mrf.mxu0
  %v1789 = vadd.f32 0.0, %v1788
  %v1790 = vpop.f32.mrf.mxu0
  %1791 = vdwg.mxu0
  %v1792 = vrcp.pop %v1786
  %v1793 = vrcp.pop %v1789
  %v1794 = vmul.f32 %v1745, %v1792
  %v1795 = vmul.f32 %v1748, %v1793
  %v1796 = vpack.c.bf16 %v1795, %v1794
  %v1797 = vlaneseq
  %v1798 = vshrl.u32 %v1797, 7
  %v1799 = vsub.s32 3, %v1798
  %v1800 = vrot.slane %v1417, %v1799
  %v1805 = vunpack.c.l.b16 %v1448
  %v1806 = vunpack.c.l.b16 %v1449
  %v1807 = vunpack.c.l.b16 %v1450
  %v1808 = vunpack.c.l.b16 %v1451
  %v1809 = vpack.c.b16 %v1806, %v1805
  %v1810 = vpack.c.b16 %v1808, %v1807
  %v1814 = vsel %vm85, %v1796, 0
  %1816 = vmatprep.subr.bf16.mxu0 0
  %1817 = vmatpush1.bf16.msra.mxu0 0
  %1818 = vmatprep.subr.bf16.mxu0 0
  %1819 = vmatpush1.bf16.msra.mxu0 0
  %1820 = vmatprep.subr.bf16.mxu0 0
  %1821 = vmatpush1.bf16.msra.mxu0 0
  %1822 = vmatprep.subr.bf16.mxu0 0
  %1823 = vmatpush1.bf16.msra.mxu0 0
  %1824 = vmatprep.subr.bf16.mxu0 0
  %1825 = vmatpush1.bf16.msra.mxu0 0
  %1826 = vmatprep.subr.bf16.mxu0 0
  %1827 = vmatpush1.bf16.msra.mxu0 0
  %1828 = vmatprep.subr.bf16.mxu0 0
  %1829 = vmatpush1.bf16.msra.mxu0 %v1810
  %1830 = vmatprep.subr.bf16.mxu0 0
  %1831 = vmatpush1.bf16.msra.mxu0 %v1809
  %1832 = vmatprep.subr.bf16.mxu0 0
  %1833 = vmatpush2.bf16.msra.mxu0 0
  %1834 = vmatprep.subr.bf16.mxu0 0
  %1835 = vmatpush2.bf16.msra.mxu0 0
  %1836 = vmatprep.subr.bf16.mxu0 0
  %1837 = vmatpush2.bf16.msra.mxu0 0
  %1838 = vmatprep.subr.bf16.mxu0 0
  %1839 = vmatpush2.bf16.msra.mxu0 0
  %1840 = vmatprep.subr.bf16.mxu0 0
  %1841 = vmatpush2.bf16.msra.mxu0 0
  %1842 = vmatprep.subr.bf16.mxu0 0
  %1843 = vmatpush2.bf16.msra.mxu0 0
  %1844 = vmatprep.subr.bf16.mxu0 0
  %1845 = vmatpush2.bf16.msra.mxu0 0
  %1846 = vmatprep.subr.bf16.mxu0 0
  %1847 = vmatpush2.bf16.msra.mxu0 0
  %1848 = vmatprep.mubr.bf16.mxu0 0
  %1849 = vmatmul.mubr.bf16.gmra.mxu0 %v1814
  %v1850 = vpop.f32.mrf.mxu0
  %v1851 = vadd.f32 %v1800, %v1850
  %v1852 = vpop.f32.mrf.mxu0
  %v1853 = vpop.f32.mrf.mxu0
  %v1854 = vadd.f32 %v1800, %v1853
  %v1855 = vpop.f32.mrf.mxu0
  %1856 = vdwg.mxu0
  %v1857 = vadd.f32 %v1372, %v1851
  %v1858 = vadd.f32 %v1373, %v1854
  %v1859 = vsel %vm85, %v1857, 0.0
  %1860 = vadd.xlane.f32.xlu0 %v1859
  %v1861 = vpop.xlane.xlu0 %1860
  %v1862 = vsel %vm85, %v1858, 0.0
  %1863 = vadd.xlane.f32.xlu0 %v1862
  %v1864 = vpop.xlane.xlu0 %1863
  %v1865 = vmul.f32 %v1857, %v1857
  %v1866 = vmul.f32 %v1858, %v1858
  %v1867 = vsel %vm85, %v1865, 0.0
  %1868 = vadd.xlane.f32.xlu0 %v1867
  %v1869 = vpop.xlane.xlu0 %1868
  %v1870 = vsel %vm85, %v1866, 0.0
  %1871 = vadd.xlane.f32.xlu0 %v1870
  %v1872 = vpop.xlane.xlu0 %1871
  %v1873 = vmul.f32 %v1861, 0.03125
  %v1874 = vmul.f32 %v1864, 0.03125
  %v1875 = vmul.f32 %v1869, 0.03125
  %v1876 = vmul.f32 %v1872, 0.03125
  %v1877 = vmul.f32 %v1873, %v1873
  %v1878 = vmul.f32 %v1874, %v1874
  %v1879 = vsub.f32 %v1875, %v1877
  %v1880 = vsub.f32 %v1876, %v1878
  %v1881 = vsub.f32 %v1857, %v1873
  %v1882 = vsub.f32 %v1858, %v1874
  %v1883 = vadd.f32 %v1879, 1e-05
  %v1884 = vadd.f32 %v1880, 1e-05
  %v1885 = vrsqrt.pop %v1883
  %v1886 = vrsqrt.pop %v1884
  %v1887 = vmul.f32 %v1881, %v1885
  %v1888 = vmul.f32 %v1882, %v1886
  %v1889 = vlaneseq
  %v1890 = vshrl.u32 %v1889, 7
  %v1891 = vsub.s32 2, %v1890
  %v1892 = vrot.slane %v1418, %v1891
  %v1893 = vmul.f32 %v1887, %v1892
  %v1894 = vmul.f32 %v1888, %v1892
  %v1895 = vlaneseq
  %v1896 = vshrl.u32 %v1895, 7
  %v1897 = vsub.s32 3, %v1896
  %v1898 = vrot.slane %v1418, %v1897
  %v1899 = vadd.f32 %v1893, %v1898
  %v1900 = vadd.f32 %v1894, %v1898
  %v1901 = vadd.f32 %v1899, %v39
  %v1902 = vadd.f32 %v1900, %v40
  %s1903 = scalar_lea.vmem %s2, 192
  %v1904 = vld [vmem:[%s1903] sm:$0xf]
  %v1905 = vld [vmem:[%s1903 + $0x4] sm:$0xf]
  %v1906 = vld [vmem:[%s1903 + $0x8] sm:$0xf]
  %v1907 = vld [vmem:[%s1903 + $0xc] sm:$0xf]
  %v1908 = vld [vmem:[%s1903 + $0x10] sm:$0xf]
  %v1909 = vld [vmem:[%s1903 + $0x14] sm:$0xf]
  %v1910 = vld [vmem:[%s1903 + $0x18] sm:$0xf]
  %v1911 = vld [vmem:[%s1903 + $0x1c] sm:$0xf]
  %v1912 = vld [vmem:[%s1903 + $0x20] sm:$0xf]
  %v1913 = vld [vmem:[%s1903 + $0x24] sm:$0xf]
  %v1914 = vld [vmem:[%s1903 + $0x28] sm:$0xf]
  %v1915 = vld [vmem:[%s1903 + $0x2c] sm:$0xf]
  %v1916 = vld [vmem:[%s1903 + $0x30] sm:$0xf]
  %v1917 = vld [vmem:[%s1903 + $0x34] sm:$0xf]
  %v1918 = vld [vmem:[%s1903 + $0x38] sm:$0xf]
  %v1919 = vld [vmem:[%s1903 + $0x3c] sm:$0xf]
  %v1920 = vpack.c.bf16 %v1902, %v1901
  %v1921 = vlaneseq
  %v1922 = vshrl.u32 %v1921, 7
  %v1923 = vsub.s32 4, %v1922
  %v1924 = vrot.slane %v1417, %v1923
  %v1929 = vunpack.c.l.b16 %v1904
  %v1930 = vunpack.c.l.b16 %v1905
  %v1931 = vunpack.c.l.b16 %v1906
  %v1932 = vunpack.c.l.b16 %v1907
  %v1933 = vpack.c.b16 %v1930, %v1929
  %v1934 = vpack.c.b16 %v1932, %v1931
  %v1938 = vsel %vm85, %v1920, 0
  %1940 = vmatprep.subr.bf16.mxu0 0
  %1941 = vmatpush1.bf16.msra.mxu0 0
  %1942 = vmatprep.subr.bf16.mxu0 0
  %1943 = vmatpush1.bf16.msra.mxu0 0
  %1944 = vmatprep.subr.bf16.mxu0 0
  %1945 = vmatpush1.bf16.msra.mxu0 0
  %1946 = vmatprep.subr.bf16.mxu0 0
  %1947 = vmatpush1.bf16.msra.mxu0 0
  %1948 = vmatprep.subr.bf16.mxu0 0
  %1949 = vmatpush1.bf16.msra.mxu0 0
  %1950 = vmatprep.subr.bf16.mxu0 0
  %1951 = vmatpush1.bf16.msra.mxu0 0
  %1952 = vmatprep.subr.bf16.mxu0 0
  %1953 = vmatpush1.bf16.msra.mxu0 %v1934
  %1954 = vmatprep.subr.bf16.mxu0 0
  %1955 = vmatpush1.bf16.msra.mxu0 %v1933
  %1956 = vmatprep.subr.bf16.mxu0 0
  %1957 = vmatpush2.bf16.msra.mxu0 0
  %1958 = vmatprep.subr.bf16.mxu0 0
  %1959 = vmatpush2.bf16.msra.mxu0 0
  %1960 = vmatprep.subr.bf16.mxu0 0
  %1961 = vmatpush2.bf16.msra.mxu0 0
  %1962 = vmatprep.subr.bf16.mxu0 0
  %1963 = vmatpush2.bf16.msra.mxu0 0
  %1964 = vmatprep.subr.bf16.mxu0 0
  %1965 = vmatpush2.bf16.msra.mxu0 0
  %1966 = vmatprep.subr.bf16.mxu0 0
  %1967 = vmatpush2.bf16.msra.mxu0 0
  %1968 = vmatprep.subr.bf16.mxu0 0
  %1969 = vmatpush2.bf16.msra.mxu0 0
  %1970 = vmatprep.subr.bf16.mxu0 0
  %1971 = vmatpush2.bf16.msra.mxu0 0
  %1972 = vmatprep.mubr.bf16.mxu0 0
  %1973 = vmatmul.mubr.bf16.gmra.mxu0 %v1938
  %v1974 = vpop.f32.mrf.mxu0
  %v1975 = vadd.f32 %v1924, %v1974
  %v1976 = vpop.f32.mrf.mxu0
  %v1977 = vpop.f32.mrf.mxu0
  %v1978 = vadd.f32 %v1924, %v1977
  %v1979 = vpop.f32.mrf.mxu0
  %1980 = vdwg.mxu0
  %v1981 = vlaneseq
  %v1982 = vshrl.u32 %v1981, 7
  %v1983 = vsub.s32 5, %v1982
  %v1984 = vrot.slane %v1417, %v1983
  %v1989 = vunpack.c.l.b16 %v1908
  %v1990 = vunpack.c.l.b16 %v1909
  %v1991 = vunpack.c.l.b16 %v1910
  %v1992 = vunpack.c.l.b16 %v1911
  %v1993 = vpack.c.b16 %v1990, %v1989
  %v1994 = vpack.c.b16 %v1992, %v1991
  %1997 = vmatprep.subr.bf16.mxu0 0
  %1998 = vmatpush1.bf16.msra.mxu0 0
  %1999 = vmatprep.subr.bf16.mxu0 0
  %2000 = vmatpush1.bf16.msra.mxu0 0
  %2001 = vmatprep.subr.bf16.mxu0 0
  %2002 = vmatpush1.bf16.msra.mxu0 0
  %2003 = vmatprep.subr.bf16.mxu0 0
  %2004 = vmatpush1.bf16.msra.mxu0 0
  %2005 = vmatprep.subr.bf16.mxu0 0
  %2006 = vmatpush1.bf16.msra.mxu0 0
  %2007 = vmatprep.subr.bf16.mxu0 0
  %2008 = vmatpush1.bf16.msra.mxu0 0
  %2009 = vmatprep.subr.bf16.mxu0 0
  %2010 = vmatpush1.bf16.msra.mxu0 %v1994
  %2011 = vmatprep.subr.bf16.mxu0 0
  %2012 = vmatpush1.bf16.msra.mxu0 %v1993
  %2013 = vmatprep.subr.bf16.mxu0 0
  %2014 = vmatpush2.bf16.msra.mxu0 0
  %2015 = vmatprep.subr.bf16.mxu0 0
  %2016 = vmatpush2.bf16.msra.mxu0 0
  %2017 = vmatprep.subr.bf16.mxu0 0
  %2018 = vmatpush2.bf16.msra.mxu0 0
  %2019 = vmatprep.subr.bf16.mxu0 0
  %2020 = vmatpush2.bf16.msra.mxu0 0
  %2021 = vmatprep.subr.bf16.mxu0 0
  %2022 = vmatpush2.bf16.msra.mxu0 0
  %2023 = vmatprep.subr.bf16.mxu0 0
  %2024 = vmatpush2.bf16.msra.mxu0 0
  %2025 = vmatprep.subr.bf16.mxu0 0
  %2026 = vmatpush2.bf16.msra.mxu0 0
  %2027 = vmatprep.subr.bf16.mxu0 0
  %2028 = vmatpush2.bf16.msra.mxu0 0
  %2029 = vmatprep.mubr.bf16.mxu0 0
  %2030 = vmatmul.mubr.bf16.gmra.mxu0 %v727
  %v2031 = vpop.f32.mrf.mxu0
  %v2032 = vadd.f32 %v1984, %v2031
  %v2033 = vpop.f32.mrf.mxu0
  %v2034 = vpop.f32.mrf.mxu0
  %v2035 = vadd.f32 %v1984, %v2034
  %v2036 = vpop.f32.mrf.mxu0
  %2037 = vmatprep.mubr.bf16.mxu0 0
  %2038 = vmatmul.mubr.bf16.gmra.mxu0 %v730
  %v2039 = vpop.f32.mrf.mxu0
  %v2040 = vadd.f32 %v1984, %v2039
  %v2041 = vpop.f32.mrf.mxu0
  %v2042 = vpop.f32.mrf.mxu0
  %v2043 = vadd.f32 %v1984, %v2042
  %v2044 = vpop.f32.mrf.mxu0
  %2045 = vdwg.mxu0
  %v2046 = vlaneseq
  %v2047 = vshrl.u32 %v2046, 7
  %v2048 = vsub.s32 6, %v2047
  %v2049 = vrot.slane %v1417, %v2048
  %v2054 = vunpack.c.l.b16 %v1912
  %v2055 = vunpack.c.l.b16 %v1913
  %v2056 = vunpack.c.l.b16 %v1914
  %v2057 = vunpack.c.l.b16 %v1915
  %v2058 = vpack.c.b16 %v2055, %v2054
  %v2059 = vpack.c.b16 %v2057, %v2056
  %2062 = vmatprep.subr.bf16.mxu0 0
  %2063 = vmatpush1.bf16.msra.mxu0 0
  %2064 = vmatprep.subr.bf16.mxu0 0
  %2065 = vmatpush1.bf16.msra.mxu0 0
  %2066 = vmatprep.subr.bf16.mxu0 0
  %2067 = vmatpush1.bf16.msra.mxu0 0
  %2068 = vmatprep.subr.bf16.mxu0 0
  %2069 = vmatpush1.bf16.msra.mxu0 0
  %2070 = vmatprep.subr.bf16.mxu0 0
  %2071 = vmatpush1.bf16.msra.mxu0 0
  %2072 = vmatprep.subr.bf16.mxu0 0
  %2073 = vmatpush1.bf16.msra.mxu0 0
  %2074 = vmatprep.subr.bf16.mxu0 0
  %2075 = vmatpush1.bf16.msra.mxu0 %v2059
  %2076 = vmatprep.subr.bf16.mxu0 0
  %2077 = vmatpush1.bf16.msra.mxu0 %v2058
  %2078 = vmatprep.subr.bf16.mxu0 0
  %2079 = vmatpush2.bf16.msra.mxu0 0
  %2080 = vmatprep.subr.bf16.mxu0 0
  %2081 = vmatpush2.bf16.msra.mxu0 0
  %2082 = vmatprep.subr.bf16.mxu0 0
  %2083 = vmatpush2.bf16.msra.mxu0 0
  %2084 = vmatprep.subr.bf16.mxu0 0
  %2085 = vmatpush2.bf16.msra.mxu0 0
  %2086 = vmatprep.subr.bf16.mxu0 0
  %2087 = vmatpush2.bf16.msra.mxu0 0
  %2088 = vmatprep.subr.bf16.mxu0 0
  %2089 = vmatpush2.bf16.msra.mxu0 0
  %2090 = vmatprep.subr.bf16.mxu0 0
  %2091 = vmatpush2.bf16.msra.mxu0 0
  %2092 = vmatprep.subr.bf16.mxu0 0
  %2093 = vmatpush2.bf16.msra.mxu0 0
  %2094 = vmatprep.mubr.bf16.mxu0 0
  %2095 = vmatmul.mubr.bf16.gmra.mxu0 %v800
  %v2096 = vpop.f32.mrf.mxu0
  %v2097 = vadd.f32 %v2049, %v2096
  %v2098 = vpop.f32.mrf.mxu0
  %v2099 = vpop.f32.mrf.mxu0
  %v2100 = vadd.f32 %v2049, %v2099
  %v2101 = vpop.f32.mrf.mxu0
  %2102 = vmatprep.mubr.bf16.mxu0 0
  %2103 = vmatmul.mubr.bf16.gmra.mxu0 %v803
  %v2104 = vpop.f32.mrf.mxu0
  %v2105 = vadd.f32 %v2049, %v2104
  %v2106 = vpop.f32.mrf.mxu0
  %v2107 = vpop.f32.mrf.mxu0
  %v2108 = vadd.f32 %v2049, %v2107
  %v2109 = vpop.f32.mrf.mxu0
  %2110 = vdwg.mxu0
  %v2111 = vpack.c.bf16 %v2035, %v2032
  %v2112 = vpack.c.bf16 %v2043, %v2040
  %v2113 = vmul.bf16 %v2111, %v888
  %v2114 = vmul.bf16 %v2112, %v889
  %v2115 = vmul.bf16 %v2111, %v890
  %v2116 = vmul.bf16 %v2112, %v891
  %v2117 = vmul.bf16 %v2111, %v892
  %v2118 = vmul.bf16 %v2112, %v893
  %v2119 = vmul.bf16 %v2111, %v894
  %v2120 = vmul.bf16 %v2112, %v895
  %v2121 = vpack.c.bf16 %v2100, %v2097
  %v2122 = vpack.c.bf16 %v2108, %v2105
  %v2123 = vmul.bf16 %v2121, %v888
  %v2124 = vmul.bf16 %v2122, %v889
  %v2125 = vmul.bf16 %v2121, %v890
  %v2126 = vmul.bf16 %v2122, %v891
  %v2127 = vmul.bf16 %v2121, %v892
  %v2128 = vmul.bf16 %v2122, %v893
  %v2129 = vmul.bf16 %v2121, %v894
  %v2130 = vmul.bf16 %v2122, %v895
  %v2131 = vpack.c.bf16 %v1978, %v1975
  %v2133 = vsel %vm85, %v2131, 0
  %v2136 = vsel %vm85, %v2113, 0
  %v2139 = vsel %vm85, %v2114, 0
  %v2142 = vsel %vm85, %v2115, 0
  %v2145 = vsel %vm85, %v2116, 0
  %v2148 = vsel %vm85, %v2117, 0
  %v2151 = vsel %vm85, %v2118, 0
  %v2154 = vsel %vm85, %v2119, 0
  %v2157 = vsel %vm85, %v2120, 0
  %2159 = vmatprep.subr.bf16.mxu0 0
  %2160 = vmatpush1.bf16.xpose.msra.mxu0 %v2157
  %2161 = vmatprep.subr.bf16.mxu0 0
  %2162 = vmatpush1.bf16.xpose.msra.mxu0 %v2154
  %2163 = vmatprep.subr.bf16.mxu0 0
  %2164 = vmatpush1.bf16.xpose.msra.mxu0 %v2151
  %2165 = vmatprep.subr.bf16.mxu0 0
  %2166 = vmatpush1.bf16.xpose.msra.mxu0 %v2148
  %2167 = vmatprep.subr.bf16.mxu0 0
  %2168 = vmatpush1.bf16.xpose.msra.mxu0 %v2145
  %2169 = vmatprep.subr.bf16.mxu0 0
  %2170 = vmatpush1.bf16.xpose.msra.mxu0 %v2142
  %2171 = vmatprep.subr.bf16.mxu0 0
  %2172 = vmatpush1.bf16.xpose.msra.mxu0 %v2139
  %2173 = vmatprep.subr.bf16.mxu0 0
  %2174 = vmatpush1.bf16.xpose.msra.mxu0 %v2136
  %2175 = vmatprep.subr.bf16.mxu0 0
  %2176 = vmatpush2.bf16.xpose.msra.mxu0 0
  %2177 = vmatprep.subr.bf16.mxu0 0
  %2178 = vmatpush2.bf16.xpose.msra.mxu0 0
  %2179 = vmatprep.subr.bf16.mxu0 0
  %2180 = vmatpush2.bf16.xpose.msra.mxu0 0
  %2181 = vmatprep.subr.bf16.mxu0 0
  %2182 = vmatpush2.bf16.xpose.msra.mxu0 0
  %2183 = vmatprep.subr.bf16.mxu0 0
  %2184 = vmatpush2.bf16.xpose.msra.mxu0 0
  %2185 = vmatprep.subr.bf16.mxu0 0
  %2186 = vmatpush2.bf16.xpose.msra.mxu0 0
  %2187 = vmatprep.subr.bf16.mxu0 0
  %2188 = vmatpush2.bf16.xpose.msra.mxu0 0
  %2189 = vmatprep.subr.bf16.mxu0 0
  %2190 = vmatpush2.bf16.xpose.msra.mxu0 0
  %2191 = vmatprep.mubr.bf16.mxu0 0
  %2192 = vmatmul.mubr.bf16.gmra.mxu0 %v2133
  %v2193 = vpop.f32.mrf.mxu0
  %v2194 = vadd.f32 %v80, %v2193
  %v2195 = vpop.f32.mrf.mxu0
  %v2196 = vpop.f32.mrf.mxu0
  %v2197 = vadd.f32 %v81, %v2196
  %v2198 = vpop.f32.mrf.mxu0
  %2199 = vdwg.mxu0
  %2200 = vmax.xlane.f32.xlu0 %v2194
  %v2201 = vpop.xlane.xlu0 %2200
  %2202 = vmax.xlane.f32.xlu0 %v2197
  %v2203 = vpop.xlane.xlu0 %2202
  %v2204 = vsub.f32 %v2194, %v2201
  %v2205 = vsub.f32 %v2197, %v2203
  %v2206 = vmul.f32 %v2204, 1.442695
  %v2207 = vpow.pop %v2206
  %v2208 = vmul.f32 %v2205, 1.442695
  %v2209 = vpow.pop %v2208
  %v2210 = vpack.c.bf16 %v2209, %v2207
  %2211 = vmatprep.subr.bf16.mxu0 0
  %2212 = vmatpush1.bf16.msra.mxu0 %v2130
  %2213 = vmatprep.subr.bf16.mxu0 0
  %2214 = vmatpush1.bf16.msra.mxu0 %v2129
  %2215 = vmatprep.subr.bf16.mxu0 0
  %2216 = vmatpush1.bf16.msra.mxu0 %v2128
  %2217 = vmatprep.subr.bf16.mxu0 0
  %2218 = vmatpush1.bf16.msra.mxu0 %v2127
  %2219 = vmatprep.subr.bf16.mxu0 0
  %2220 = vmatpush1.bf16.msra.mxu0 %v2126
  %2221 = vmatprep.subr.bf16.mxu0 0
  %2222 = vmatpush1.bf16.msra.mxu0 %v2125
  %2223 = vmatprep.subr.bf16.mxu0 0
  %2224 = vmatpush1.bf16.msra.mxu0 %v2124
  %2225 = vmatprep.subr.bf16.mxu0 0
  %2226 = vmatpush1.bf16.msra.mxu0 %v2123
  %2227 = vmatprep.subr.bf16.mxu0 0
  %2228 = vmatpush2.bf16.msra.mxu0 0
  %2229 = vmatprep.subr.bf16.mxu0 0
  %2230 = vmatpush2.bf16.msra.mxu0 0
  %2231 = vmatprep.subr.bf16.mxu0 0
  %2232 = vmatpush2.bf16.msra.mxu0 0
  %2233 = vmatprep.subr.bf16.mxu0 0
  %2234 = vmatpush2.bf16.msra.mxu0 0
  %2235 = vmatprep.subr.bf16.mxu0 0
  %2236 = vmatpush2.bf16.msra.mxu0 0
  %2237 = vmatprep.subr.bf16.mxu0 0
  %2238 = vmatpush2.bf16.msra.mxu0 0
  %2239 = vmatprep.subr.bf16.mxu0 0
  %2240 = vmatpush2.bf16.msra.mxu0 0
  %2241 = vmatprep.subr.bf16.mxu0 0
  %2242 = vmatpush2.bf16.msra.mxu0 0
  %2243 = vmatprep.mubr.bf16.mxu0 0
  %2244 = vmatmul.mubr.bf16.gmra.mxu0 %v2210
  %v2245 = vpop.f32.mrf.mxu0
  %v2246 = vadd.f32 0.0, %v2245
  %v2247 = vpop.f32.mrf.mxu0
  %v2248 = vpop.f32.mrf.mxu0
  %v2249 = vadd.f32 0.0, %v2248
  %v2250 = vpop.f32.mrf.mxu0
  %2251 = vdwg.mxu0
  %2252 = vmatprep.subr.bf16.mxu0 0
  %2253 = vmatpush1.bf16.msra.mxu0 %v895
  %2254 = vmatprep.subr.bf16.mxu0 0
  %2255 = vmatpush1.bf16.msra.mxu0 %v894
  %2256 = vmatprep.subr.bf16.mxu0 0
  %2257 = vmatpush1.bf16.msra.mxu0 %v893
  %2258 = vmatprep.subr.bf16.mxu0 0
  %2259 = vmatpush1.bf16.msra.mxu0 %v892
  %2260 = vmatprep.subr.bf16.mxu0 0
  %2261 = vmatpush1.bf16.msra.mxu0 %v891
  %2262 = vmatprep.subr.bf16.mxu0 0
  %2263 = vmatpush1.bf16.msra.mxu0 %v890
  %2264 = vmatprep.subr.bf16.mxu0 0
  %2265 = vmatpush1.bf16.msra.mxu0 %v889
  %2266 = vmatprep.subr.bf16.mxu0 0
  %2267 = vmatpush1.bf16.msra.mxu0 %v888
  %2268 = vmatprep.subr.bf16.mxu0 0
  %2269 = vmatpush2.bf16.msra.mxu0 0
  %2270 = vmatprep.subr.bf16.mxu0 0
  %2271 = vmatpush2.bf16.msra.mxu0 0
  %2272 = vmatprep.subr.bf16.mxu0 0
  %2273 = vmatpush2.bf16.msra.mxu0 0
  %2274 = vmatprep.subr.bf16.mxu0 0
  %2275 = vmatpush2.bf16.msra.mxu0 0
  %2276 = vmatprep.subr.bf16.mxu0 0
  %2277 = vmatpush2.bf16.msra.mxu0 0
  %2278 = vmatprep.subr.bf16.mxu0 0
  %2279 = vmatpush2.bf16.msra.mxu0 0
  %2280 = vmatprep.subr.bf16.mxu0 0
  %2281 = vmatpush2.bf16.msra.mxu0 0
  %2282 = vmatprep.subr.bf16.mxu0 0
  %2283 = vmatpush2.bf16.msra.mxu0 0
  %2284 = vmatprep.mubr.bf16.mxu0 0
  %2285 = vmatmul.mubr.bf16.gmra.mxu0 %v2210
  %v2286 = vpop.f32.mrf.mxu0
  %v2287 = vadd.f32 0.0, %v2286
  %v2288 = vpop.f32.mrf.mxu0
  %v2289 = vpop.f32.mrf.mxu0
  %v2290 = vadd.f32 0.0, %v2289
  %v2291 = vpop.f32.mrf.mxu0
  %2292 = vdwg.mxu0
  %v2293 = vrcp.pop %v2287
  %v2294 = vrcp.pop %v2290
  %v2295 = vmul.f32 %v2246, %v2293
  %v2296 = vmul.f32 %v2249, %v2294
  %v2297 = vpack.c.bf16 %v2296, %v2295
  %v2298 = vlaneseq
  %v2299 = vshrl.u32 %v2298, 7
  %v2300 = vsub.s32 7, %v2299
  %v2301 = vrot.slane %v1417, %v2300
  %v2306 = vunpack.c.l.b16 %v1916
  %v2307 = vunpack.c.l.b16 %v1917
  %v2308 = vunpack.c.l.b16 %v1918
  %v2309 = vunpack.c.l.b16 %v1919
  %v2310 = vpack.c.b16 %v2307, %v2306
  %v2311 = vpack.c.b16 %v2309, %v2308
  %v2315 = vsel %vm85, %v2297, 0
  %2317 = vmatprep.subr.bf16.mxu0 0
  %2318 = vmatpush1.bf16.msra.mxu0 0
  %2319 = vmatprep.subr.bf16.mxu0 0
  %2320 = vmatpush1.bf16.msra.mxu0 0
  %2321 = vmatprep.subr.bf16.mxu0 0
  %2322 = vmatpush1.bf16.msra.mxu0 0
  %2323 = vmatprep.subr.bf16.mxu0 0
  %2324 = vmatpush1.bf16.msra.mxu0 0
  %2325 = vmatprep.subr.bf16.mxu0 0
  %2326 = vmatpush1.bf16.msra.mxu0 0
  %2327 = vmatprep.subr.bf16.mxu0 0
  %2328 = vmatpush1.bf16.msra.mxu0 0
  %2329 = vmatprep.subr.bf16.mxu0 0
  %2330 = vmatpush1.bf16.msra.mxu0 %v2311
  %2331 = vmatprep.subr.bf16.mxu0 0
  %2332 = vmatpush1.bf16.msra.mxu0 %v2310
  %2333 = vmatprep.subr.bf16.mxu0 0
  %2334 = vmatpush2.bf16.msra.mxu0 0
  %2335 = vmatprep.subr.bf16.mxu0 0
  %2336 = vmatpush2.bf16.msra.mxu0 0
  %2337 = vmatprep.subr.bf16.mxu0 0
  %2338 = vmatpush2.bf16.msra.mxu0 0
  %2339 = vmatprep.subr.bf16.mxu0 0
  %2340 = vmatpush2.bf16.msra.mxu0 0
  %2341 = vmatprep.subr.bf16.mxu0 0
  %2342 = vmatpush2.bf16.msra.mxu0 0
  %2343 = vmatprep.subr.bf16.mxu0 0
  %2344 = vmatpush2.bf16.msra.mxu0 0
  %2345 = vmatprep.subr.bf16.mxu0 0
  %2346 = vmatpush2.bf16.msra.mxu0 0
  %2347 = vmatprep.subr.bf16.mxu0 0
  %2348 = vmatpush2.bf16.msra.mxu0 0
  %2349 = vmatprep.mubr.bf16.mxu0 0
  %2350 = vmatmul.mubr.bf16.gmra.mxu0 %v2315
  %v2351 = vpop.f32.mrf.mxu0
  %v2352 = vadd.f32 %v2301, %v2351
  %v2353 = vpop.f32.mrf.mxu0
  %v2354 = vpop.f32.mrf.mxu0
  %v2355 = vadd.f32 %v2301, %v2354
  %v2356 = vpop.f32.mrf.mxu0
  %2357 = vdwg.mxu0
  %v2358 = vadd.f32 %v1857, %v2352
  %v2359 = vadd.f32 %v1858, %v2355
  %v2360 = vsel %vm85, %v2358, 0.0
  %2361 = vadd.xlane.f32.xlu0 %v2360
  %v2362 = vpop.xlane.xlu0 %2361
  %v2363 = vsel %vm85, %v2359, 0.0
  %2364 = vadd.xlane.f32.xlu0 %v2363
  %v2365 = vpop.xlane.xlu0 %2364
  %v2366 = vmul.f32 %v2358, %v2358
  %v2367 = vmul.f32 %v2359, %v2359
  %v2368 = vsel %vm85, %v2366, 0.0
  %2369 = vadd.xlane.f32.xlu0 %v2368
  %v2370 = vpop.xlane.xlu0 %2369
  %v2371 = vsel %vm85, %v2367, 0.0
  %2372 = vadd.xlane.f32.xlu0 %v2371
  %v2373 = vpop.xlane.xlu0 %2372
  %v2374 = vmul.f32 %v2362, 0.03125
  %v2375 = vmul.f32 %v2365, 0.03125
  %v2376 = vmul.f32 %v2370, 0.03125
  %v2377 = vmul.f32 %v2373, 0.03125
  %v2378 = vmul.f32 %v2374, %v2374
  %v2379 = vmul.f32 %v2375, %v2375
  %v2380 = vsub.f32 %v2376, %v2378
  %v2381 = vsub.f32 %v2377, %v2379
  %v2382 = vsub.f32 %v2358, %v2374
  %v2383 = vsub.f32 %v2359, %v2375
  %v2384 = vadd.f32 %v2380, 1e-05
  %v2385 = vadd.f32 %v2381, 1e-05
  %v2386 = vrsqrt.pop %v2384
  %v2387 = vrsqrt.pop %v2385
  %v2388 = vmul.f32 %v2382, %v2386
  %v2389 = vmul.f32 %v2383, %v2387
  %v2390 = vlaneseq
  %v2391 = vshrl.u32 %v2390, 7
  %v2392 = vsub.s32 4, %v2391
  %v2393 = vrot.slane %v1418, %v2392
  %v2394 = vmul.f32 %v2388, %v2393
  %v2395 = vmul.f32 %v2389, %v2393
  %v2396 = vlaneseq
  %v2397 = vshrl.u32 %v2396, 7
  %v2398 = vsub.s32 5, %v2397
  %v2399 = vrot.slane %v1418, %v2398
  %v2400 = vadd.f32 %v2394, %v2399
  %v2401 = vadd.f32 %v2395, %v2399
  %v2402 = vpack.c.bf16 %v2401, %v2400
  %s2403 = scalar_lea.vmem %s3, 16
  %v2404 = vld [vmem:[%s2403] sm:$0xf]
  %v2405 = vld [vmem:[%s2403 + $0x4] sm:$0xf]
  %v2406 = vld [vmem:[%s2403 + $0x8] sm:$0xf]
  %v2407 = vld [vmem:[%s2403 + $0xc] sm:$0xf]
  %v2408 = vlaneseq
  %v2409 = vshrl.u32 %v2408, 7
  %v2410 = vsub.s32 0, %v2409
  %v2411 = vrot.slane %v1420, %v2410
  %v2416 = vunpack.c.l.b16 %v2404
  %v2417 = vunpack.c.l.b16 %v2405
  %v2418 = vunpack.c.l.b16 %v2406
  %v2419 = vunpack.c.l.b16 %v2407
  %v2420 = vpack.c.b16 %v2417, %v2416
  %v2421 = vpack.c.b16 %v2419, %v2418
  %v2425 = vsel %vm85, %v2402, 0
  %2427 = vmatprep.subr.bf16.mxu0 0
  %2428 = vmatpush1.bf16.msra.mxu0 0
  %2429 = vmatprep.subr.bf16.mxu0 0
  %2430 = vmatpush1.bf16.msra.mxu0 0
  %2431 = vmatprep.subr.bf16.mxu0 0
  %2432 = vmatpush1.bf16.msra.mxu0 0
  %2433 = vmatprep.subr.bf16.mxu0 0
  %2434 = vmatpush1.bf16.msra.mxu0 0
  %2435 = vmatprep.subr.bf16.mxu0 0
  %2436 = vmatpush1.bf16.msra.mxu0 0
  %2437 = vmatprep.subr.bf16.mxu0 0
  %2438 = vmatpush1.bf16.msra.mxu0 0
  %2439 = vmatprep.subr.bf16.mxu0 0
  %2440 = vmatpush1.bf16.msra.mxu0 %v2421
  %2441 = vmatprep.subr.bf16.mxu0 0
  %2442 = vmatpush1.bf16.msra.mxu0 %v2420
  %2443 = vmatprep.subr.bf16.mxu0 0
  %2444 = vmatpush2.bf16.msra.mxu0 0
  %2445 = vmatprep.subr.bf16.mxu0 0
  %2446 = vmatpush2.bf16.msra.mxu0 0
  %2447 = vmatprep.subr.bf16.mxu0 0
  %2448 = vmatpush2.bf16.msra.mxu0 0
  %2449 = vmatprep.subr.bf16.mxu0 0
  %2450 = vmatpush2.bf16.msra.mxu0 0
  %2451 = vmatprep.subr.bf16.mxu0 0
  %2452 = vmatpush2.bf16.msra.mxu0 0
  %2453 = vmatprep.subr.bf16.mxu0 0
  %2454 = vmatpush2.bf16.msra.mxu0 0
  %2455 = vmatprep.subr.bf16.mxu0 0
  %2456 = vmatpush2.bf16.msra.mxu0 0
  %2457 = vmatprep.subr.bf16.mxu0 0
  %2458 = vmatpush2.bf16.msra.mxu0 0
  %2459 = vmatprep.mubr.bf16.mxu0 0
  %2460 = vmatmul.mubr.bf16.gmra.mxu0 %v2425
  %v2461 = vpop.f32.mrf.mxu0
  %v2462 = vadd.f32 %v2411, %v2461
  %v2463 = vpop.f32.mrf.mxu0
  %v2464 = vpop.f32.mrf.mxu0
  %v2465 = vadd.f32 %v2411, %v2464
  %v2466 = vpop.f32.mrf.mxu0
  %2467 = vdwg.mxu0
  %v2468 = vmax.f32 %v2462, 0.0
  %v2469 = vmax.f32 %v2465, 0.0
  %v2470 = vpack.c.bf16 %v2469, %v2468
  %s2471 = scalar_lea.vmem %s4, 64
  %v2472 = vld [vmem:[%s2471] sm:$0xf]
  %v2473 = vld [vmem:[%s2471 + $0x4] sm:$0xf]
  %v2474 = vld [vmem:[%s2471 + $0x8] sm:$0xf]
  %v2475 = vld [vmem:[%s2471 + $0xc] sm:$0xf]
  %v2476 = vld [vmem:[%s2471 + $0x10] sm:$0xf]
  %v2477 = vld [vmem:[%s2471 + $0x14] sm:$0xf]
  %v2478 = vld [vmem:[%s2471 + $0x18] sm:$0xf]
  %v2479 = vld [vmem:[%s2471 + $0x1c] sm:$0xf]
  %v2480 = vld [vmem:[%s2471 + $0x20] sm:$0xf]
  %v2481 = vld [vmem:[%s2471 + $0x24] sm:$0xf]
  %v2482 = vld [vmem:[%s2471 + $0x28] sm:$0xf]
  %v2483 = vld [vmem:[%s2471 + $0x2c] sm:$0xf]
  %v2484 = vld [vmem:[%s2471 + $0x30] sm:$0xf]
  %v2485 = vld [vmem:[%s2471 + $0x34] sm:$0xf]
  %v2486 = vld [vmem:[%s2471 + $0x38] sm:$0xf]
  %v2487 = vld [vmem:[%s2471 + $0x3c] sm:$0xf]
  %v2504 = vunpack.c.l.b16 %v2472
  %v2505 = vunpack.c.l.b16 %v2473
  %v2506 = vunpack.c.l.b16 %v2474
  %v2507 = vunpack.c.l.b16 %v2475
  %v2508 = vunpack.c.l.b16 %v2476
  %v2509 = vunpack.c.l.b16 %v2477
  %v2510 = vunpack.c.l.b16 %v2478
  %v2511 = vunpack.c.l.b16 %v2479
  %v2512 = vunpack.c.l.b16 %v2480
  %v2513 = vunpack.c.l.b16 %v2481
  %v2514 = vunpack.c.l.b16 %v2482
  %v2515 = vunpack.c.l.b16 %v2483
  %v2516 = vunpack.c.l.b16 %v2484
  %v2517 = vunpack.c.l.b16 %v2485
  %v2518 = vunpack.c.l.b16 %v2486
  %v2519 = vunpack.c.l.b16 %v2487
  %v2520 = vpack.c.b16 %v2505, %v2504
  %v2521 = vpack.c.b16 %v2507, %v2506
  %v2522 = vpack.c.b16 %v2509, %v2508
  %v2523 = vpack.c.b16 %v2511, %v2510
  %v2524 = vpack.c.b16 %v2513, %v2512
  %v2525 = vpack.c.b16 %v2515, %v2514
  %v2526 = vpack.c.b16 %v2517, %v2516
  %v2527 = vpack.c.b16 %v2519, %v2518
  %2536 = vmatprep.subr.bf16.mxu0 0
  %2537 = vmatpush1.bf16.msra.mxu0 %v2527
  %2538 = vmatprep.subr.bf16.mxu0 0
  %2539 = vmatpush1.bf16.msra.mxu0 %v2526
  %2540 = vmatprep.subr.bf16.mxu0 0
  %2541 = vmatpush1.bf16.msra.mxu0 %v2525
  %2542 = vmatprep.subr.bf16.mxu0 0
  %2543 = vmatpush1.bf16.msra.mxu0 %v2524
  %2544 = vmatprep.subr.bf16.mxu0 0
  %2545 = vmatpush1.bf16.msra.mxu0 %v2523
  %2546 = vmatprep.subr.bf16.mxu0 0
  %2547 = vmatpush1.bf16.msra.mxu0 %v2522
  %2548 = vmatprep.subr.bf16.mxu0 0
  %2549 = vmatpush1.bf16.msra.mxu0 %v2521
  %2550 = vmatprep.subr.bf16.mxu0 0
  %2551 = vmatpush1.bf16.msra.mxu0 %v2520
  %2552 = vmatprep.subr.bf16.mxu0 0
  %2553 = vmatpush2.bf16.msra.mxu0 0
  %2554 = vmatprep.subr.bf16.mxu0 0
  %2555 = vmatpush2.bf16.msra.mxu0 0
  %2556 = vmatprep.subr.bf16.mxu0 0
  %2557 = vmatpush2.bf16.msra.mxu0 0
  %2558 = vmatprep.subr.bf16.mxu0 0
  %2559 = vmatpush2.bf16.msra.mxu0 0
  %2560 = vmatprep.subr.bf16.mxu0 0
  %2561 = vmatpush2.bf16.msra.mxu0 0
  %2562 = vmatprep.subr.bf16.mxu0 0
  %2563 = vmatpush2.bf16.msra.mxu0 0
  %2564 = vmatprep.subr.bf16.mxu0 0
  %2565 = vmatpush2.bf16.msra.mxu0 0
  %2566 = vmatprep.subr.bf16.mxu0 0
  %2567 = vmatpush2.bf16.msra.mxu0 0
  %2568 = vmatprep.mubr.bf16.mxu0 0
  %2569 = vmatmul.mubr.bf16.gmra.mxu0 %v2470
  %v2570 = vpop.f32.mrf.mxu0
  %v2571 = vadd.f32 0.0, %v2570
  %v2572 = vpop.f32.mrf.mxu0
  %v2573 = vpop.f32.mrf.mxu0
  %v2574 = vadd.f32 0.0, %v2573
  %v2575 = vpop.f32.mrf.mxu0
  %2576 = vdwg.mxu0
  %v2577 = vadd.f32 %v2358, %v2571
  %v2578 = vadd.f32 %v2359, %v2574
  %v2579 = vlaneseq
  %v2580 = vshrl.u32 %v2579, 7
  %v2581 = vsub.s32 1, %v2580
  %v2582 = vrot.slane %v1420, %v2581
  %v2583 = vadd.f32 %v2577, %v2582
  %v2584 = vadd.f32 %v2578, %v2582
  %v2585 = vsel %vm85, %v2583, 0.0
  %2586 = vadd.xlane.f32.xlu0 %v2585
  %v2587 = vpop.xlane.xlu0 %2586
  %v2588 = vsel %vm85, %v2584, 0.0
  %2589 = vadd.xlane.f32.xlu0 %v2588
  %v2590 = vpop.xlane.xlu0 %2589
  %v2591 = vmul.f32 %v2583, %v2583
  %v2592 = vmul.f32 %v2584, %v2584
  %v2593 = vsel %vm85, %v2591, 0.0
  %2594 = vadd.xlane.f32.xlu0 %v2593
  %v2595 = vpop.xlane.xlu0 %2594
  %v2596 = vsel %vm85, %v2592, 0.0
  %2597 = vadd.xlane.f32.xlu0 %v2596
  %v2598 = vpop.xlane.xlu0 %2597
  %v2599 = vmul.f32 %v2587, 0.03125
  %v2600 = vmul.f32 %v2590, 0.03125
  %v2601 = vmul.f32 %v2595, 0.03125
  %v2602 = vmul.f32 %v2598, 0.03125
  %v2603 = vmul.f32 %v2599, %v2599
  %v2604 = vmul.f32 %v2600, %v2600
  %v2605 = vsub.f32 %v2601, %v2603
  %v2606 = vsub.f32 %v2602, %v2604
  %v2607 = vsub.f32 %v2583, %v2599
  %v2608 = vsub.f32 %v2584, %v2600
  %v2609 = vadd.f32 %v2605, 1e-05
  %v2610 = vadd.f32 %v2606, 1e-05
  %v2611 = vrsqrt.pop %v2609
  %v2612 = vrsqrt.pop %v2610
  %v2613 = vmul.f32 %v2607, %v2611
  %v2614 = vmul.f32 %v2608, %v2612
  %v2615 = vlaneseq
  %v2616 = vshrl.u32 %v2615, 7
  %v2617 = vsub.s32 6, %v2616
  %v2618 = vrot.slane %v1418, %v2617
  %v2619 = vmul.f32 %v2613, %v2618
  %v2620 = vmul.f32 %v2614, %v2618
  %v2621 = vlaneseq
  %v2622 = vshrl.u32 %v2621, 7
  %v2623 = vsub.s32 7, %v2622
  %v2624 = vrot.slane %v1418, %v2623
  %v2625 = vadd.f32 %v2619, %v2624
  %v2626 = vadd.f32 %v2620, %v2624
  %2628 = vrot.lane.b32.xlu0 %v1415, 32
  %v2629 = vpop.permute.xlu0 %2628
  %2632 = vrot.lane.b32.xlu0 %v2625, 64
  %v2633 = vpop.permute.xlu0 %2632
  %2636 = vrot.lane.b32.xlu0 %v2626, 96
  %v2637 = vpop.permute.xlu0 %2636
  %v2639 = vsel %vm85, %v1414, %v2629
  %v2640 = vsel %vm420, %v2639, %v2633
  %vm2641 = vcmask 785408
  %v2642 = vsel %vm2641, %v2640, %v2637
  %2643 = vst [vmem:[%s9] sm:$0xff] %v2642
  // Predicated region
  $region38: #{transformer_decoder_forward.1} parent=0 // pred_check
    _
  $region39: #{transformer_decoder_forward.1} parent=0 // pred_check_branch
    %2645 = sbr.rel (0) target = $region41
  $region40: #{transformer_decoder_forward.1} parent=0 // pred_region
    _
  $region41: #{transformer_decoder_forward.1} parent=0 // pred_fallthru
    _
  // Predicated region
  $region42: #{transformer_decoder_forward.1} parent=0 // pred_check
    _
  $region43: #{transformer_decoder_forward.1} parent=0 // pred_check_branch
    %2647 = sbr.rel (0) target = $region45
  $region44: #{transformer_decoder_forward.1} parent=0 // pred_region
    _
  $region45: #{transformer_decoder_forward.1} parent=0 // pred_fallthru
    _

</llo_original>
